<compile_context>
chip_gen: v7x
topology: tpu7x:2x2x1
jax: 0.10.0
libtpu: 0.0.40
codegen_flags: <defaults>
</compile_context>

<pallas_src>
import math
from functools import partial

import numpy as np
import jax
import jax.numpy as jnp
from jax.experimental import pallas as pl
from jax.experimental.pallas import tpu as pltpu


# ----------------------------------------------------------------------------
# geometry of the padded-flat layout
# ----------------------------------------------------------------------------
def _geometry(N):
    H2 = N // 2
    Wp1, Wp2 = N + 2, H2 + 2            # padded widths of the two stages
    A1, A2 = Wp1 + 1, Wp2 + 1           # flat index of interior pixel (1, 1)
    L1 = (N - 1) * Wp1 + N              # contiguous interior block, stage 1
    L2 = (H2 - 1) * Wp2 + H2            # contiguous interior block, stage 2
    La1 = (N - 2) * Wp1 + N - 1         # pool-1 anchor slab length
    La2 = (H2 - 2) * Wp2 + H2 - 1       # pool-2 anchor slab length
    return Wp1, A1, L1, La1, Wp2, A2, L2, La2


def _interior_mask(Wv, Wp, A, L):
    """(L, 1) 0/1 mask: 1 where flat row A+j is an interior column (xp in
    [1, Wv]); multiplying the conv-output block by it re-creates the zero
    padding columns of the next layer's input buffer."""
    m = np.zeros((L, 1), np.float32)
    for j in range(L):
        if 1 <= (A + j) % Wp <= Wv:
            m[j, 0] = 1.0
    return m


def _pool1_select(N):
    """(L2, La1) 0/1 matrix.  Row j corresponds to flat row A2+j of the stage-2
    padded buffer: it picks the matching 2x2-max anchor from the stage-1 anchor
    slab for interior positions, and is all-zero for border columns."""
    Wp1, A1, _, La1, Wp2, A2, L2, _ = _geometry(N)
    H2 = N // 2
    S = np.zeros((L2, La1), np.float32)
    for j in range(L2):
        oyp, oxp = divmod(A2 + j, Wp2)     # oyp is always interior in [1, H2]
        if 1 <= oxp <= H2:
            r = (2 * (oyp - 1) + 1) * Wp1 + (2 * (oxp - 1) + 1)
            S[j, r - A1] = 1.0
    return S


def _pool2_select(N, P_pad):
    """(P_pad, La2) 0/1 matrix: row p = oy*W4 + ox picks the anchor of pooled
    pixel (oy, ox); rows >= P are zero (sublane padding of the feature matrix)."""
    _, _, _, _, Wp2, A2, _, La2 = _geometry(N)
    H4 = N // 4
    S = np.zeros((P_pad, La2), np.float32)
    for p in range(H4 * H4):
        oy, ox = divmod(p, H4)
        r = (2 * oy + 1) * Wp2 + (2 * ox + 1)
        S[p, r - A2] = 1.0
    return S


# ----------------------------------------------------------------------------
# kernel building blocks
# ----------------------------------------------------------------------------
def _conv3x3_flat(src, w_ref, b_ref, Wp, A, L, mask=None, cin_is_one=False):
    """3x3 'same' conv + bias + tanh on a zero-padded, flattened feature map.

    src: ref ((H+2)*(W+2), cin).  Returns the (L, cout) block covering flat
    rows [A, A+L) of the output padded buffer.  Each tap is one contiguous
    full-slab read and one MXU matmul (VPU broadcast-mul when cin == 1);
    bias + tanh (+ optional border mask) are applied once on the whole slab.
    """
    cout = w_ref.shape[2]
    acc = jnp.zeros((L, cout), jnp.float32)
    for dy in range(3):
        for dx in range(3):
            off = A + (dy - 1) * Wp + (dx - 1)
            slab = src[off:off + L, :]                       # (L, cin)
            wt = w_ref[dy * 3 + dx]                          # (cin, cout)
            if cin_is_one:
                acc = acc + slab * wt                        # (L,1)*(1,cout), VPU
            else:
                acc = acc + jnp.dot(slab, wt,
                                    preferred_element_type=jnp.float32)
    out = jnp.tanh(acc + b_ref[...])
    if mask is not None:
        out = out * mask                                     # zero border cols
    return out


def _maxpool2x2_flat(src, sel_ref, Wp, A, La):
    """2x2/2 max-pool on a padded-flat map: 3 whole-slab maxes build the anchor
    slab; one constant 0/1 matmul does subsample + scatter + border zeroing."""
    a = src[A:A + La, :]
    b = src[A + 1:A + 1 + La, :]
    c = src[A + Wp:A + Wp + La, :]
    d = src[A + Wp + 1:A + Wp + 1 + La, :]
    anchors = jnp.maximum(jnp.maximum(a, b), jnp.maximum(c, d))   # (La, C)
    return jnp.dot(sel_ref[...], anchors, preferred_element_type=jnp.float32)


def _actor_kernel(geom,
                  x_ref, m1_ref, m2_ref, s1_ref, s2_ref,
                  w1_ref, b1_ref, w2_ref, b2_ref, w3_ref, b3_ref,
                  w4_ref, b4_ref, wl_ref, bl_ref,
                  out_ref,
                  a1f, c2f, a3f, a4f, c4f):
    Wp1, A1, L1, La1, Wp2, A2, L2, La2 = geom

    # Zero-init scratch once: their untouched rows/columns ARE the conv padding.
    for buf in (a1f, c2f, a3f, a4f, c4f):
        buf[...] = jnp.zeros(buf.shape, buf.dtype)

    # conv1: 1 -> 32, tanh (cin==1: 9 broadcast multiply-adds on the VPU)
    y1 = _conv3x3_flat(x_ref, w1_ref, b1_ref, Wp1, A1, L1,
                       mask=m1_ref[...], cin_is_one=True)
    a1f[A1:A1 + L1, :] = y1                       # one slab store per layer

    # conv2: 32 -> 32, tanh (9 full-slab MXU taps)
    y2 = _conv3x3_flat(a1f, w2_ref, b2_ref, Wp1, A1, L1)
    c2f[A1:A1 + L1, :] = y2

    # maxpool 2x2 stride 2 -> interior of the stage-2 padded buffer
    a3f[A2:A2 + L2, :] = _maxpool2x2_flat(c2f, s1_ref, Wp1, A1, La1)

    # conv3: 32 -> 64, tanh
    y3 = _conv3x3_flat(a3f, w3_ref, b3_ref, Wp2, A2, L2, mask=m2_ref[...])
    a4f[A2:A2 + L2, :] = y3

    # conv4: 64 -> 64, tanh
    y4 = _conv3x3_flat(a4f, w4_ref, b4_ref, Wp2, A2, L2)
    c4f[A2:A2 + L2, :] = y4

    # maxpool 2x2 + flatten/transpose -> feat (P_pad, 64); row p = h*W4 + w
    feat = _maxpool2x2_flat(c4f, s2_ref, Wp2, A2, La2)

    # Linear(64 -> A_pad) + softmax over the lane-dense padded action axis.
    # Padded action columns carry bias -1e30 -> exp underflows to exactly 0.
    logits = jnp.dot(feat, wl_ref[...],
                     preferred_element_type=jnp.float32) + bl_ref[...]
    z = logits - jnp.max(logits, axis=-1, keepdims=True)
    e = jnp.exp(z)
    inv = pl.reciprocal(jnp.sum(e, axis=-1, keepdims=True), approx=True)
    out_ref[...] = e * inv                         # one unmasked (8,128) store


# ----------------------------------------------------------------------------
# host wrapper
# ----------------------------------------------------------------------------
@jax.jit
def actor_forward(X, params):
    w1, b1, w2, b2, w3, b3, w4, b4, wl, bl = params
    N = X.shape[0]
    assert N % 4 == 0 and X.shape[1] == N
    A = wl.shape[1]
    H4 = N // 4
    P = H4 * H4
    P_pad = ((P + 7) // 8) * 8                     # sublane-pad feature rows
    A_pad = ((A + 127) // 128) * 128               # lane-dense action axis

    geom = _geometry(N)
    rows1 = (N + 2) * (N + 2)
    rows2 = (N // 2 + 2) * (N // 2 + 2)
    Wp1, A1, L1, La1, Wp2, A2, L2, La2 = geom

    # Host/trace-time prep (constant-folded under jit): padded-flat board,
    # interior masks, pool selection matrices, lane-dense padded linear head.
    x_flat = jnp.pad(X.astype(jnp.float32), 1).reshape(rows1, 1)
    m1 = jnp.asarray(_interior_mask(N, Wp1, A1, L1))
    m2 = jnp.asarray(_interior_mask(N // 2, Wp2, A2, L2))
    s1 = jnp.asarray(_pool1_select(N))
    s2 = jnp.asarray(_pool2_select(N, P_pad))
    wl_pad = jnp.pad(wl, ((0, 0), (0, A_pad - A)))
    bl_pad = jnp.pad(bl, ((0, 0), (0, A_pad - A)), constant_values=-1e30)

    vmem = pl.BlockSpec(memory_space=pltpu.MemorySpace.VMEM)
    out = pl.pallas_call(
        partial(_actor_kernel, geom),
        out_shape=jax.ShapeDtypeStruct((P_pad, A_pad), jnp.float32),
        in_specs=[vmem] * 15,
        out_specs=vmem,
        scratch_shapes=[
            pltpu.VMEM((rows1, 32), jnp.float32),   # a1f: conv1 out / conv2 in
            pltpu.VMEM((rows1, 32), jnp.float32),   # c2f: conv2 out / pool1 in
            pltpu.VMEM((rows2, 32), jnp.float32),   # a3f: pool1 out / conv3 in
            pltpu.VMEM((rows2, 64), jnp.float32),   # a4f: conv3 out / conv4 in
            pltpu.VMEM((rows2, 64), jnp.float32),   # c4f: conv4 out / pool2 in
        ],
    )(x_flat, m1, m2, s1, s2, w1, b1, w2, b2, w3, b3, w4, b4, wl_pad, bl_pad)

    return out[:P, :A].reshape(-1)                 # matches torch .flatten()


# ----------------------------------------------------------------------------
# params + pure-JAX reference
# ----------------------------------------------------------------------------
def init_params(key, n_actions):
    """Conv weights stored as (9, cin, cout) = (ky*3+kx, cin, cout); linear
    weight as (64, n_actions); biases as (1, cout)."""
    ks = jax.random.split(key, 10)

    def u(k, shape, fan_in):
        b = 1.0 / math.sqrt(fan_in)
        return jax.random.uniform(k, shape, jnp.float32, -b, b)

    w1 = u(ks[0], (9, 1, 32), 1 * 9)
    b1 = u(ks[1], (1, 32), 1 * 9)
    w2 = u(ks[2], (9, 32, 32), 32 * 9)
    b2 = u(ks[3], (1, 32), 32 * 9)
    w3 = u(ks[4], (9, 32, 64), 32 * 9)
    b3 = u(ks[5], (1, 64), 32 * 9)
    w4 = u(ks[6], (9, 64, 64), 64 * 9)
    b4 = u(ks[7], (1, 64), 64 * 9)
    wl = u(ks[8], (64, n_actions), 64)
    bl = u(ks[9], (1, n_actions), 64)
    return (w1, b1, w2, b2, w3, b3, w4, b4, wl, bl)


def ref_forward(X, params):
    """Pure-JAX reference mirroring the PyTorch forward semantics."""
    w1, b1, w2, b2, w3, b3, w4, b4, wl, bl = params
    x = X.astype(jnp.float32)[None, :, :, None]    # NHWC, batch 1

    def conv(x, w9, b):
        cin, cout = w9.shape[1], w9.shape[2]
        w = w9.reshape(3, 3, cin, cout)             # HWIO
        y = jax.lax.conv_general_dilated(
            x, w, (1, 1), 'SAME', dimension_numbers=('NHWC', 'HWIO', 'NHWC'))
        return jnp.tanh(y + b.reshape(1, 1, 1, cout))

    def pool(x):
        return jax.lax.reduce_window(x, -jnp.inf, jax.lax.max,
                                     (1, 2, 2, 1), (1, 2, 2, 1), 'VALID')

    x = conv(x, w1, b1)
    x = conv(x, w2, b2)
    x = pool(x)
    x = conv(x, w3, b3)
    x = conv(x, w4, b4)
    x = pool(x)
    feat = x.reshape(-1, x.shape[-1])               # (P, 64), p = h*W4 + w
    logits = feat @ wl + bl
    return jax.nn.softmax(logits, axis=-1).reshape(-1)


if __name__ == "__main__":
    key = jax.random.PRNGKey(0)
    k_x, k_p = jax.random.split(key)

    N = 8            # N x N hex board -> 2x2 spatial after the two pools
    n_actions = 64   # one action per cell
    X = jax.random.uniform(k_x, (N, N), jnp.float32)
    params = init_params(k_p, n_actions)

    out = actor_forward(X, params)
    out = jax.block_until_ready(out)

    ref = ref_forward(X, params)
    P = (N // 4) * (N // 4)
    assert out.shape == (P * n_actions,)
    assert bool(jnp.all(jnp.isfinite(out)))
    # softmax rows sum to 1 (tolerance covers the approx EUP reciprocal)
    assert abs(float(jnp.sum(out)) - P) < 1e-2
    assert float(jnp.max(jnp.abs(out - ref))) < 3e-3

    print("KERNEL_OK")
</pallas_src>

<mosaic_0001>
module attributes {stable_mosaic.version = 11 : i64} {
  func.func @_actor_kernel(%arg0: memref<100x1xf32, #tpu.memory_space<vmem>>, %arg1: memref<78x1xf32, #tpu.memory_space<vmem>>, %arg2: memref<22x1xf32, #tpu.memory_space<vmem>>, %arg3: memref<22x67xf32, #tpu.memory_space<vmem>>, %arg4: memref<8x15xf32, #tpu.memory_space<vmem>>, %arg5: memref<9x1x32xf32, #tpu.memory_space<vmem>>, %arg6: memref<1x32xf32, #tpu.memory_space<vmem>>, %arg7: memref<9x32x32xf32, #tpu.memory_space<vmem>>, %arg8: memref<1x32xf32, #tpu.memory_space<vmem>>, %arg9: memref<9x32x64xf32, #tpu.memory_space<vmem>>, %arg10: memref<1x64xf32, #tpu.memory_space<vmem>>, %arg11: memref<9x64x64xf32, #tpu.memory_space<vmem>>, %arg12: memref<1x64xf32, #tpu.memory_space<vmem>>, %arg13: memref<64x128xf32, #tpu.memory_space<vmem>>, %arg14: memref<1x128xf32, #tpu.memory_space<vmem>>, %arg15: memref<8x128xf32, #tpu.memory_space<vmem>>, %arg16: memref<100x32xf32, #tpu.memory_space<vmem>>, %arg17: memref<100x32xf32, #tpu.memory_space<vmem>>, %arg18: memref<36x32xf32, #tpu.memory_space<vmem>>, %arg19: memref<36x64xf32, #tpu.memory_space<vmem>>, %arg20: memref<36x64xf32, #tpu.memory_space<vmem>>) attributes {dimension_semantics = [], scalar_prefetch = 0 : i64, scratch_operands = 5 : i64, tpu.core_type = #tpu.core_type<tc>} {
    %cst = arith.constant 0.000000e+00 : f32
    %0 = vector.broadcast %cst : f32 to vector<100x32xf32>
    %c0 = arith.constant 0 : index
    %c0_0 = arith.constant 0 : index
    %1 = vector.load %arg16[%c0, %c0_0] : memref<100x32xf32, #tpu.memory_space<vmem>>, vector<100x32xf32>
    tpu.vector_store %arg16[%c0, %c0_0], %0 {strides = array<i32>} : memref<100x32xf32, #tpu.memory_space<vmem>>, vector<100x32xf32>,
    %cst_1 = arith.constant 0.000000e+00 : f32
    %2 = vector.broadcast %cst_1 : f32 to vector<100x32xf32>
    %c0_2 = arith.constant 0 : index
    %c0_3 = arith.constant 0 : index
    %3 = vector.load %arg17[%c0_2, %c0_3] : memref<100x32xf32, #tpu.memory_space<vmem>>, vector<100x32xf32>
    tpu.vector_store %arg17[%c0_2, %c0_3], %2 {strides = array<i32>} : memref<100x32xf32, #tpu.memory_space<vmem>>, vector<100x32xf32>,
    %cst_4 = arith.constant 0.000000e+00 : f32
    %4 = vector.broadcast %cst_4 : f32 to vector<36x32xf32>
    %c0_5 = arith.constant 0 : index
    %c0_6 = arith.constant 0 : index
    %5 = vector.load %arg18[%c0_5, %c0_6] : memref<36x32xf32, #tpu.memory_space<vmem>>, vector<36x32xf32>
    tpu.vector_store %arg18[%c0_5, %c0_6], %4 {strides = array<i32>} : memref<36x32xf32, #tpu.memory_space<vmem>>, vector<36x32xf32>,
    %cst_7 = arith.constant 0.000000e+00 : f32
    %6 = vector.broadcast %cst_7 : f32 to vector<36x64xf32>
    %c0_8 = arith.constant 0 : index
    %c0_9 = arith.constant 0 : index
    %7 = vector.load %arg19[%c0_8, %c0_9] : memref<36x64xf32, #tpu.memory_space<vmem>>, vector<36x64xf32>
    tpu.vector_store %arg19[%c0_8, %c0_9], %6 {strides = array<i32>} : memref<36x64xf32, #tpu.memory_space<vmem>>, vector<36x64xf32>,
    %cst_10 = arith.constant 0.000000e+00 : f32
    %8 = vector.broadcast %cst_10 : f32 to vector<36x64xf32>
    %c0_11 = arith.constant 0 : index
    %c0_12 = arith.constant 0 : index
    %9 = vector.load %arg20[%c0_11, %c0_12] : memref<36x64xf32, #tpu.memory_space<vmem>>, vector<36x64xf32>
    tpu.vector_store %arg20[%c0_11, %c0_12], %8 {strides = array<i32>} : memref<36x64xf32, #tpu.memory_space<vmem>>, vector<36x64xf32>,
    %c0_13 = arith.constant 0 : index
    %c0_14 = arith.constant 0 : index
    %10 = vector.load %arg1[%c0_13, %c0_14] : memref<78x1xf32, #tpu.memory_space<vmem>>, vector<78x1xf32>
    %cst_15 = arith.constant 0.000000e+00 : f32
    %11 = vector.broadcast %cst_15 : f32 to vector<78x32xf32>
    %c0_16 = arith.constant 0 : index
    %c0_17 = arith.constant 0 : index
    %12 = vector.load %arg0[%c0_16, %c0_17] : memref<100x1xf32, #tpu.memory_space<vmem>>, vector<78x1xf32>
    %c0_18 = arith.constant 0 : index
    %c0_19 = arith.constant 0 : index
    %c0_20 = arith.constant 0 : index
    %13 = vector.load %arg5[%c0_18, %c0_19, %c0_20] : memref<9x1x32xf32, #tpu.memory_space<vmem>>, vector<1x1x32xf32>
    %14 = vector.shape_cast %13 : vector<1x1x32xf32> to vector<1x32xf32>
    %15 = vector.broadcast %12 : vector<78x1xf32> to vector<78x32xf32>
    %16 = vector.broadcast %14 : vector<1x32xf32> to vector<78x32xf32>
    %17 = arith.mulf %15, %16 : vector<78x32xf32>
    %18 = arith.addf %11, %17 : vector<78x32xf32>
    %c1 = arith.constant 1 : index
    %c0_21 = arith.constant 0 : index
    %19 = vector.load %arg0[%c1, %c0_21] : memref<100x1xf32, #tpu.memory_space<vmem>>, vector<78x1xf32>
    %c1_22 = arith.constant 1 : index
    %c0_23 = arith.constant 0 : index
    %c0_24 = arith.constant 0 : index
    %20 = vector.load %arg5[%c1_22, %c0_23, %c0_24] : memref<9x1x32xf32, #tpu.memory_space<vmem>>, vector<1x1x32xf32>
    %21 = vector.shape_cast %20 : vector<1x1x32xf32> to vector<1x32xf32>
    %22 = vector.broadcast %19 : vector<78x1xf32> to vector<78x32xf32>
    %23 = vector.broadcast %21 : vector<1x32xf32> to vector<78x32xf32>
    %24 = arith.mulf %22, %23 : vector<78x32xf32>
    %25 = arith.addf %18, %24 : vector<78x32xf32>
    %c2 = arith.constant 2 : index
    %c0_25 = arith.constant 0 : index
    %26 = vector.load %arg0[%c2, %c0_25] : memref<100x1xf32, #tpu.memory_space<vmem>>, vector<78x1xf32>
    %c2_26 = arith.constant 2 : index
    %c0_27 = arith.constant 0 : index
    %c0_28 = arith.constant 0 : index
    %27 = vector.load %arg5[%c2_26, %c0_27, %c0_28] : memref<9x1x32xf32, #tpu.memory_space<vmem>>, vector<1x1x32xf32>
    %28 = vector.shape_cast %27 : vector<1x1x32xf32> to vector<1x32xf32>
    %29 = vector.broadcast %26 : vector<78x1xf32> to vector<78x32xf32>
    %30 = vector.broadcast %28 : vector<1x32xf32> to vector<78x32xf32>
    %31 = arith.mulf %29, %30 : vector<78x32xf32>
    %32 = arith.addf %25, %31 : vector<78x32xf32>
    %c10 = arith.constant 10 : index
    %c0_29 = arith.constant 0 : index
    %33 = vector.load %arg0[%c10, %c0_29] : memref<100x1xf32, #tpu.memory_space<vmem>>, vector<78x1xf32>
    %c3 = arith.constant 3 : index
    %c0_30 = arith.constant 0 : index
    %c0_31 = arith.constant 0 : index
    %34 = vector.load %arg5[%c3, %c0_30, %c0_31] : memref<9x1x32xf32, #tpu.memory_space<vmem>>, vector<1x1x32xf32>
    %35 = vector.shape_cast %34 : vector<1x1x32xf32> to vector<1x32xf32>
    %36 = vector.broadcast %33 : vector<78x1xf32> to vector<78x32xf32>
    %37 = vector.broadcast %35 : vector<1x32xf32> to vector<78x32xf32>
    %38 = arith.mulf %36, %37 : vector<78x32xf32>
    %39 = arith.addf %32, %38 : vector<78x32xf32>
    %c11 = arith.constant 11 : index
    %c0_32 = arith.constant 0 : index
    %40 = vector.load %arg0[%c11, %c0_32] : memref<100x1xf32, #tpu.memory_space<vmem>>, vector<78x1xf32>
    %c4 = arith.constant 4 : index
    %c0_33 = arith.constant 0 : index
    %c0_34 = arith.constant 0 : index
    %41 = vector.load %arg5[%c4, %c0_33, %c0_34] : memref<9x1x32xf32, #tpu.memory_space<vmem>>, vector<1x1x32xf32>
    %42 = vector.shape_cast %41 : vector<1x1x32xf32> to vector<1x32xf32>
    %43 = vector.broadcast %40 : vector<78x1xf32> to vector<78x32xf32>
    %44 = vector.broadcast %42 : vector<1x32xf32> to vector<78x32xf32>
    %45 = arith.mulf %43, %44 : vector<78x32xf32>
    %46 = arith.addf %39, %45 : vector<78x32xf32>
    %c12 = arith.constant 12 : index
    %c0_35 = arith.constant 0 : index
    %47 = vector.load %arg0[%c12, %c0_35] : memref<100x1xf32, #tpu.memory_space<vmem>>, vector<78x1xf32>
    %c5 = arith.constant 5 : index
    %c0_36 = arith.constant 0 : index
    %c0_37 = arith.constant 0 : index
    %48 = vector.load %arg5[%c5, %c0_36, %c0_37] : memref<9x1x32xf32, #tpu.memory_space<vmem>>, vector<1x1x32xf32>
    %49 = vector.shape_cast %48 : vector<1x1x32xf32> to vector<1x32xf32>
    %50 = vector.broadcast %47 : vector<78x1xf32> to vector<78x32xf32>
    %51 = vector.broadcast %49 : vector<1x32xf32> to vector<78x32xf32>
    %52 = arith.mulf %50, %51 : vector<78x32xf32>
    %53 = arith.addf %46, %52 : vector<78x32xf32>
    %c20 = arith.constant 20 : index
    %c0_38 = arith.constant 0 : index
    %54 = vector.load %arg0[%c20, %c0_38] : memref<100x1xf32, #tpu.memory_space<vmem>>, vector<78x1xf32>
    %c6 = arith.constant 6 : index
    %c0_39 = arith.constant 0 : index
    %c0_40 = arith.constant 0 : index
    %55 = vector.load %arg5[%c6, %c0_39, %c0_40] : memref<9x1x32xf32, #tpu.memory_space<vmem>>, vector<1x1x32xf32>
    %56 = vector.shape_cast %55 : vector<1x1x32xf32> to vector<1x32xf32>
    %57 = vector.broadcast %54 : vector<78x1xf32> to vector<78x32xf32>
    %58 = vector.broadcast %56 : vector<1x32xf32> to vector<78x32xf32>
    %59 = arith.mulf %57, %58 : vector<78x32xf32>
    %60 = arith.addf %53, %59 : vector<78x32xf32>
    %c21 = arith.constant 21 : index
    %c0_41 = arith.constant 0 : index
    %61 = vector.load %arg0[%c21, %c0_41] : memref<100x1xf32, #tpu.memory_space<vmem>>, vector<78x1xf32>
    %c7 = arith.constant 7 : index
    %c0_42 = arith.constant 0 : index
    %c0_43 = arith.constant 0 : index
    %62 = vector.load %arg5[%c7, %c0_42, %c0_43] : memref<9x1x32xf32, #tpu.memory_space<vmem>>, vector<1x1x32xf32>
    %63 = vector.shape_cast %62 : vector<1x1x32xf32> to vector<1x32xf32>
    %64 = vector.broadcast %61 : vector<78x1xf32> to vector<78x32xf32>
    %65 = vector.broadcast %63 : vector<1x32xf32> to vector<78x32xf32>
    %66 = arith.mulf %64, %65 : vector<78x32xf32>
    %67 = arith.addf %60, %66 : vector<78x32xf32>
    %c22 = arith.constant 22 : index
    %c0_44 = arith.constant 0 : index
    %68 = vector.load %arg0[%c22, %c0_44] : memref<100x1xf32, #tpu.memory_space<vmem>>, vector<78x1xf32>
    %c8 = arith.constant 8 : index
    %c0_45 = arith.constant 0 : index
    %c0_46 = arith.constant 0 : index
    %69 = vector.load %arg5[%c8, %c0_45, %c0_46] : memref<9x1x32xf32, #tpu.memory_space<vmem>>, vector<1x1x32xf32>
    %70 = vector.shape_cast %69 : vector<1x1x32xf32> to vector<1x32xf32>
    %71 = vector.broadcast %68 : vector<78x1xf32> to vector<78x32xf32>
    %72 = vector.broadcast %70 : vector<1x32xf32> to vector<78x32xf32>
    %73 = arith.mulf %71, %72 : vector<78x32xf32>
    %74 = arith.addf %67, %73 : vector<78x32xf32>
    %c0_47 = arith.constant 0 : index
    %c0_48 = arith.constant 0 : index
    %75 = vector.load %arg6[%c0_47, %c0_48] : memref<1x32xf32, #tpu.memory_space<vmem>>, vector<1x32xf32>
    %76 = vector.broadcast %75 : vector<1x32xf32> to vector<78x32xf32>
    %77 = arith.addf %74, %76 : vector<78x32xf32>
    %78 = math.tanh %77 : vector<78x32xf32>
    %79 = vector.broadcast %10 : vector<78x1xf32> to vector<78x32xf32>
    %80 = arith.mulf %78, %79 : vector<78x32xf32>
    %c11_49 = arith.constant 11 : index
    %c0_50 = arith.constant 0 : index
    %81 = vector.load %arg16[%c11_49, %c0_50] : memref<100x32xf32, #tpu.memory_space<vmem>>, vector<78x32xf32>
    tpu.vector_store %arg16[%c11_49, %c0_50], %80 {strides = array<i32>} : memref<100x32xf32, #tpu.memory_space<vmem>>, vector<78x32xf32>,
    %cst_51 = arith.constant 0.000000e+00 : f32
    %82 = vector.broadcast %cst_51 : f32 to vector<78x32xf32>
    %c0_52 = arith.constant 0 : index
    %c0_53 = arith.constant 0 : index
    %83 = vector.load %arg16[%c0_52, %c0_53] : memref<100x32xf32, #tpu.memory_space<vmem>>, vector<78x32xf32>
    %c0_54 = arith.constant 0 : index
    %c0_55 = arith.constant 0 : index
    %c0_56 = arith.constant 0 : index
    %84 = vector.load %arg7[%c0_54, %c0_55, %c0_56] : memref<9x32x32xf32, #tpu.memory_space<vmem>>, vector<1x32x32xf32>
    %85 = vector.shape_cast %84 : vector<1x32x32xf32> to vector<32x32xf32>
    %cst_57 = arith.constant dense<0.000000e+00> : vector<78x32xf32>
    %86 = tpu.matmul %83, %85, %cst_57 {dimension_numbers = #tpu.dot_dimension_numbers<[1], [0], [0], [1], [0, 0, 1, 1], [], []>} : vector<78x32xf32>, vector<32x32xf32>, vector<78x32xf32> -> vector<78x32xf32>
    %87 = arith.addf %82, %86 : vector<78x32xf32>
    %c1_58 = arith.constant 1 : index
    %c0_59 = arith.constant 0 : index
    %88 = vector.load %arg16[%c1_58, %c0_59] : memref<100x32xf32, #tpu.memory_space<vmem>>, vector<78x32xf32>
    %c1_60 = arith.constant 1 : index
    %c0_61 = arith.constant 0 : index
    %c0_62 = arith.constant 0 : index
    %89 = vector.load %arg7[%c1_60, %c0_61, %c0_62] : memref<9x32x32xf32, #tpu.memory_space<vmem>>, vector<1x32x32xf32>
    %90 = vector.shape_cast %89 : vector<1x32x32xf32> to vector<32x32xf32>
    %cst_63 = arith.constant dense<0.000000e+00> : vector<78x32xf32>
    %91 = tpu.matmul %88, %90, %cst_63 {dimension_numbers = #tpu.dot_dimension_numbers<[1], [0], [0], [1], [0, 0, 1, 1], [], []>} : vector<78x32xf32>, vector<32x32xf32>, vector<78x32xf32> -> vector<78x32xf32>
    %92 = arith.addf %87, %91 : vector<78x32xf32>
    %c2_64 = arith.constant 2 : index
    %c0_65 = arith.constant 0 : index
    %93 = vector.load %arg16[%c2_64, %c0_65] : memref<100x32xf32, #tpu.memory_space<vmem>>, vector<78x32xf32>
    %c2_66 = arith.constant 2 : index
    %c0_67 = arith.constant 0 : index
    %c0_68 = arith.constant 0 : index
    %94 = vector.load %arg7[%c2_66, %c0_67, %c0_68] : memref<9x32x32xf32, #tpu.memory_space<vmem>>, vector<1x32x32xf32>
    %95 = vector.shape_cast %94 : vector<1x32x32xf32> to vector<32x32xf32>
    %cst_69 = arith.constant dense<0.000000e+00> : vector<78x32xf32>
    %96 = tpu.matmul %93, %95, %cst_69 {dimension_numbers = #tpu.dot_dimension_numbers<[1], [0], [0], [1], [0, 0, 1, 1], [], []>} : vector<78x32xf32>, vector<32x32xf32>, vector<78x32xf32> -> vector<78x32xf32>
    %97 = arith.addf %92, %96 : vector<78x32xf32>
    %c10_70 = arith.constant 10 : index
    %c0_71 = arith.constant 0 : index
    %98 = vector.load %arg16[%c10_70, %c0_71] : memref<100x32xf32, #tpu.memory_space<vmem>>, vector<78x32xf32>
    %c3_72 = arith.constant 3 : index
    %c0_73 = arith.constant 0 : index
    %c0_74 = arith.constant 0 : index
    %99 = vector.load %arg7[%c3_72, %c0_73, %c0_74] : memref<9x32x32xf32, #tpu.memory_space<vmem>>, vector<1x32x32xf32>
    %100 = vector.shape_cast %99 : vector<1x32x32xf32> to vector<32x32xf32>
    %cst_75 = arith.constant dense<0.000000e+00> : vector<78x32xf32>
    %101 = tpu.matmul %98, %100, %cst_75 {dimension_numbers = #tpu.dot_dimension_numbers<[1], [0], [0], [1], [0, 0, 1, 1], [], []>} : vector<78x32xf32>, vector<32x32xf32>, vector<78x32xf32> -> vector<78x32xf32>
    %102 = arith.addf %97, %101 : vector<78x32xf32>
    %c11_76 = arith.constant 11 : index
    %c0_77 = arith.constant 0 : index
    %103 = vector.load %arg16[%c11_76, %c0_77] : memref<100x32xf32, #tpu.memory_space<vmem>>, vector<78x32xf32>
    %c4_78 = arith.constant 4 : index
    %c0_79 = arith.constant 0 : index
    %c0_80 = arith.constant 0 : index
    %104 = vector.load %arg7[%c4_78, %c0_79, %c0_80] : memref<9x32x32xf32, #tpu.memory_space<vmem>>, vector<1x32x32xf32>
    %105 = vector.shape_cast %104 : vector<1x32x32xf32> to vector<32x32xf32>
    %cst_81 = arith.constant dense<0.000000e+00> : vector<78x32xf32>
    %106 = tpu.matmul %103, %105, %cst_81 {dimension_numbers = #tpu.dot_dimension_numbers<[1], [0], [0], [1], [0, 0, 1, 1], [], []>} : vector<78x32xf32>, vector<32x32xf32>, vector<78x32xf32> -> vector<78x32xf32>
    %107 = arith.addf %102, %106 : vector<78x32xf32>
    %c12_82 = arith.constant 12 : index
    %c0_83 = arith.constant 0 : index
    %108 = vector.load %arg16[%c12_82, %c0_83] : memref<100x32xf32, #tpu.memory_space<vmem>>, vector<78x32xf32>
    %c5_84 = arith.constant 5 : index
    %c0_85 = arith.constant 0 : index
    %c0_86 = arith.constant 0 : index
    %109 = vector.load %arg7[%c5_84, %c0_85, %c0_86] : memref<9x32x32xf32, #tpu.memory_space<vmem>>, vector<1x32x32xf32>
    %110 = vector.shape_cast %109 : vector<1x32x32xf32> to vector<32x32xf32>
    %cst_87 = arith.constant dense<0.000000e+00> : vector<78x32xf32>
    %111 = tpu.matmul %108, %110, %cst_87 {dimension_numbers = #tpu.dot_dimension_numbers<[1], [0], [0], [1], [0, 0, 1, 1], [], []>} : vector<78x32xf32>, vector<32x32xf32>, vector<78x32xf32> -> vector<78x32xf32>
    %112 = arith.addf %107, %111 : vector<78x32xf32>
    %c20_88 = arith.constant 20 : index
    %c0_89 = arith.constant 0 : index
    %113 = vector.load %arg16[%c20_88, %c0_89] : memref<100x32xf32, #tpu.memory_space<vmem>>, vector<78x32xf32>
    %c6_90 = arith.constant 6 : index
    %c0_91 = arith.constant 0 : index
    %c0_92 = arith.constant 0 : index
    %114 = vector.load %arg7[%c6_90, %c0_91, %c0_92] : memref<9x32x32xf32, #tpu.memory_space<vmem>>, vector<1x32x32xf32>
    %115 = vector.shape_cast %114 : vector<1x32x32xf32> to vector<32x32xf32>
    %cst_93 = arith.constant dense<0.000000e+00> : vector<78x32xf32>
    %116 = tpu.matmul %113, %115, %cst_93 {dimension_numbers = #tpu.dot_dimension_numbers<[1], [0], [0], [1], [0, 0, 1, 1], [], []>} : vector<78x32xf32>, vector<32x32xf32>, vector<78x32xf32> -> vector<78x32xf32>
    %117 = arith.addf %112, %116 : vector<78x32xf32>
    %c21_94 = arith.constant 21 : index
    %c0_95 = arith.constant 0 : index
    %118 = vector.load %arg16[%c21_94, %c0_95] : memref<100x32xf32, #tpu.memory_space<vmem>>, vector<78x32xf32>
    %c7_96 = arith.constant 7 : index
    %c0_97 = arith.constant 0 : index
    %c0_98 = arith.constant 0 : index
    %119 = vector.load %arg7[%c7_96, %c0_97, %c0_98] : memref<9x32x32xf32, #tpu.memory_space<vmem>>, vector<1x32x32xf32>
    %120 = vector.shape_cast %119 : vector<1x32x32xf32> to vector<32x32xf32>
    %cst_99 = arith.constant dense<0.000000e+00> : vector<78x32xf32>
    %121 = tpu.matmul %118, %120, %cst_99 {dimension_numbers = #tpu.dot_dimension_numbers<[1], [0], [0], [1], [0, 0, 1, 1], [], []>} : vector<78x32xf32>, vector<32x32xf32>, vector<78x32xf32> -> vector<78x32xf32>
    %122 = arith.addf %117, %121 : vector<78x32xf32>
    %c22_100 = arith.constant 22 : index
    %c0_101 = arith.constant 0 : index
    %123 = vector.load %arg16[%c22_100, %c0_101] : memref<100x32xf32, #tpu.memory_space<vmem>>, vector<78x32xf32>
    %c8_102 = arith.constant 8 : index
    %c0_103 = arith.constant 0 : index
    %c0_104 = arith.constant 0 : index
    %124 = vector.load %arg7[%c8_102, %c0_103, %c0_104] : memref<9x32x32xf32, #tpu.memory_space<vmem>>, vector<1x32x32xf32>
    %125 = vector.shape_cast %124 : vector<1x32x32xf32> to vector<32x32xf32>
    %cst_105 = arith.constant dense<0.000000e+00> : vector<78x32xf32>
    %126 = tpu.matmul %123, %125, %cst_105 {dimension_numbers = #tpu.dot_dimension_numbers<[1], [0], [0], [1], [0, 0, 1, 1], [], []>} : vector<78x32xf32>, vector<32x32xf32>, vector<78x32xf32> -> vector<78x32xf32>
    %127 = arith.addf %122, %126 : vector<78x32xf32>
    %c0_106 = arith.constant 0 : index
    %c0_107 = arith.constant 0 : index
    %128 = vector.load %arg8[%c0_106, %c0_107] : memref<1x32xf32, #tpu.memory_space<vmem>>, vector<1x32xf32>
    %129 = vector.broadcast %128 : vector<1x32xf32> to vector<78x32xf32>
    %130 = arith.addf %127, %129 : vector<78x32xf32>
    %131 = math.tanh %130 : vector<78x32xf32>
    %c11_108 = arith.constant 11 : index
    %c0_109 = arith.constant 0 : index
    %132 = vector.load %arg17[%c11_108, %c0_109] : memref<100x32xf32, #tpu.memory_space<vmem>>, vector<78x32xf32>
    tpu.vector_store %arg17[%c11_108, %c0_109], %131 {strides = array<i32>} : memref<100x32xf32, #tpu.memory_space<vmem>>, vector<78x32xf32>,
    %c11_110 = arith.constant 11 : index
    %c0_111 = arith.constant 0 : index
    %133 = vector.load %arg17[%c11_110, %c0_111] : memref<100x32xf32, #tpu.memory_space<vmem>>, vector<67x32xf32>
    %c12_112 = arith.constant 12 : index
    %c0_113 = arith.constant 0 : index
    %134 = vector.load %arg17[%c12_112, %c0_113] : memref<100x32xf32, #tpu.memory_space<vmem>>, vector<67x32xf32>
    %c21_114 = arith.constant 21 : index
    %c0_115 = arith.constant 0 : index
    %135 = vector.load %arg17[%c21_114, %c0_115] : memref<100x32xf32, #tpu.memory_space<vmem>>, vector<67x32xf32>
    %c22_116 = arith.constant 22 : index
    %c0_117 = arith.constant 0 : index
    %136 = vector.load %arg17[%c22_116, %c0_117] : memref<100x32xf32, #tpu.memory_space<vmem>>, vector<67x32xf32>
    %137 = arith.maximumf %133, %134 : vector<67x32xf32>
    %138 = arith.maximumf %135, %136 : vector<67x32xf32>
    %139 = arith.maximumf %137, %138 : vector<67x32xf32>
    %c0_118 = arith.constant 0 : index
    %c0_119 = arith.constant 0 : index
    %140 = vector.load %arg3[%c0_118, %c0_119] : memref<22x67xf32, #tpu.memory_space<vmem>>, vector<22x67xf32>
    %cst_120 = arith.constant dense<0.000000e+00> : vector<22x32xf32>
    %141 = tpu.matmul %140, %139, %cst_120 {dimension_numbers = #tpu.dot_dimension_numbers<[1], [0], [0], [1], [0, 0, 1, 1], [], []>} : vector<22x67xf32>, vector<67x32xf32>, vector<22x32xf32> -> vector<22x32xf32>
    %c7_121 = arith.constant 7 : index
    %c0_122 = arith.constant 0 : index
    %142 = vector.load %arg18[%c7_121, %c0_122] : memref<36x32xf32, #tpu.memory_space<vmem>>, vector<22x32xf32>
    tpu.vector_store %arg18[%c7_121, %c0_122], %141 {strides = array<i32>} : memref<36x32xf32, #tpu.memory_space<vmem>>, vector<22x32xf32>,
    %c0_123 = arith.constant 0 : index
    %c0_124 = arith.constant 0 : index
    %143 = vector.load %arg2[%c0_123, %c0_124] : memref<22x1xf32, #tpu.memory_space<vmem>>, vector<22x1xf32>
    %cst_125 = arith.constant 0.000000e+00 : f32
    %144 = vector.broadcast %cst_125 : f32 to vector<22x64xf32>
    %c0_126 = arith.constant 0 : index
    %c0_127 = arith.constant 0 : index
    %145 = vector.load %arg18[%c0_126, %c0_127] : memref<36x32xf32, #tpu.memory_space<vmem>>, vector<22x32xf32>
    %c0_128 = arith.constant 0 : index
    %c0_129 = arith.constant 0 : index
    %c0_130 = arith.constant 0 : index
    %146 = vector.load %arg9[%c0_128, %c0_129, %c0_130] : memref<9x32x64xf32, #tpu.memory_space<vmem>>, vector<1x32x64xf32>
    %147 = vector.shape_cast %146 : vector<1x32x64xf32> to vector<32x64xf32>
    %cst_131 = arith.constant dense<0.000000e+00> : vector<22x64xf32>
    %148 = tpu.matmul %145, %147, %cst_131 {dimension_numbers = #tpu.dot_dimension_numbers<[1], [0], [0], [1], [0, 0, 1, 1], [], []>} : vector<22x32xf32>, vector<32x64xf32>, vector<22x64xf32> -> vector<22x64xf32>
    %149 = arith.addf %144, %148 : vector<22x64xf32>
    %c1_132 = arith.constant 1 : index
    %c0_133 = arith.constant 0 : index
    %150 = vector.load %arg18[%c1_132, %c0_133] : memref<36x32xf32, #tpu.memory_space<vmem>>, vector<22x32xf32>
    %c1_134 = arith.constant 1 : index
    %c0_135 = arith.constant 0 : index
    %c0_136 = arith.constant 0 : index
    %151 = vector.load %arg9[%c1_134, %c0_135, %c0_136] : memref<9x32x64xf32, #tpu.memory_space<vmem>>, vector<1x32x64xf32>
    %152 = vector.shape_cast %151 : vector<1x32x64xf32> to vector<32x64xf32>
    %cst_137 = arith.constant dense<0.000000e+00> : vector<22x64xf32>
    %153 = tpu.matmul %150, %152, %cst_137 {dimension_numbers = #tpu.dot_dimension_numbers<[1], [0], [0], [1], [0, 0, 1, 1], [], []>} : vector<22x32xf32>, vector<32x64xf32>, vector<22x64xf32> -> vector<22x64xf32>
    %154 = arith.addf %149, %153 : vector<22x64xf32>
    %c2_138 = arith.constant 2 : index
    %c0_139 = arith.constant 0 : index
    %155 = vector.load %arg18[%c2_138, %c0_139] : memref<36x32xf32, #tpu.memory_space<vmem>>, vector<22x32xf32>
    %c2_140 = arith.constant 2 : index
    %c0_141 = arith.constant 0 : index
    %c0_142 = arith.constant 0 : index
    %156 = vector.load %arg9[%c2_140, %c0_141, %c0_142] : memref<9x32x64xf32, #tpu.memory_space<vmem>>, vector<1x32x64xf32>
    %157 = vector.shape_cast %156 : vector<1x32x64xf32> to vector<32x64xf32>
    %cst_143 = arith.constant dense<0.000000e+00> : vector<22x64xf32>
    %158 = tpu.matmul %155, %157, %cst_143 {dimension_numbers = #tpu.dot_dimension_numbers<[1], [0], [0], [1], [0, 0, 1, 1], [], []>} : vector<22x32xf32>, vector<32x64xf32>, vector<22x64xf32> -> vector<22x64xf32>
    %159 = arith.addf %154, %158 : vector<22x64xf32>
    %c6_144 = arith.constant 6 : index
    %c0_145 = arith.constant 0 : index
    %160 = vector.load %arg18[%c6_144, %c0_145] : memref<36x32xf32, #tpu.memory_space<vmem>>, vector<22x32xf32>
    %c3_146 = arith.constant 3 : index
    %c0_147 = arith.constant 0 : index
    %c0_148 = arith.constant 0 : index
    %161 = vector.load %arg9[%c3_146, %c0_147, %c0_148] : memref<9x32x64xf32, #tpu.memory_space<vmem>>, vector<1x32x64xf32>
    %162 = vector.shape_cast %161 : vector<1x32x64xf32> to vector<32x64xf32>
    %cst_149 = arith.constant dense<0.000000e+00> : vector<22x64xf32>
    %163 = tpu.matmul %160, %162, %cst_149 {dimension_numbers = #tpu.dot_dimension_numbers<[1], [0], [0], [1], [0, 0, 1, 1], [], []>} : vector<22x32xf32>, vector<32x64xf32>, vector<22x64xf32> -> vector<22x64xf32>
    %164 = arith.addf %159, %163 : vector<22x64xf32>
    %c7_150 = arith.constant 7 : index
    %c0_151 = arith.constant 0 : index
    %165 = vector.load %arg18[%c7_150, %c0_151] : memref<36x32xf32, #tpu.memory_space<vmem>>, vector<22x32xf32>
    %c4_152 = arith.constant 4 : index
    %c0_153 = arith.constant 0 : index
    %c0_154 = arith.constant 0 : index
    %166 = vector.load %arg9[%c4_152, %c0_153, %c0_154] : memref<9x32x64xf32, #tpu.memory_space<vmem>>, vector<1x32x64xf32>
    %167 = vector.shape_cast %166 : vector<1x32x64xf32> to vector<32x64xf32>
    %cst_155 = arith.constant dense<0.000000e+00> : vector<22x64xf32>
    %168 = tpu.matmul %165, %167, %cst_155 {dimension_numbers = #tpu.dot_dimension_numbers<[1], [0], [0], [1], [0, 0, 1, 1], [], []>} : vector<22x32xf32>, vector<32x64xf32>, vector<22x64xf32> -> vector<22x64xf32>
    %169 = arith.addf %164, %168 : vector<22x64xf32>
    %c8_156 = arith.constant 8 : index
    %c0_157 = arith.constant 0 : index
    %170 = vector.load %arg18[%c8_156, %c0_157] : memref<36x32xf32, #tpu.memory_space<vmem>>, vector<22x32xf32>
    %c5_158 = arith.constant 5 : index
    %c0_159 = arith.constant 0 : index
    %c0_160 = arith.constant 0 : index
    %171 = vector.load %arg9[%c5_158, %c0_159, %c0_160] : memref<9x32x64xf32, #tpu.memory_space<vmem>>, vector<1x32x64xf32>
    %172 = vector.shape_cast %171 : vector<1x32x64xf32> to vector<32x64xf32>
    %cst_161 = arith.constant dense<0.000000e+00> : vector<22x64xf32>
    %173 = tpu.matmul %170, %172, %cst_161 {dimension_numbers = #tpu.dot_dimension_numbers<[1], [0], [0], [1], [0, 0, 1, 1], [], []>} : vector<22x32xf32>, vector<32x64xf32>, vector<22x64xf32> -> vector<22x64xf32>
    %174 = arith.addf %169, %173 : vector<22x64xf32>
    %c12_162 = arith.constant 12 : index
    %c0_163 = arith.constant 0 : index
    %175 = vector.load %arg18[%c12_162, %c0_163] : memref<36x32xf32, #tpu.memory_space<vmem>>, vector<22x32xf32>
    %c6_164 = arith.constant 6 : index
    %c0_165 = arith.constant 0 : index
    %c0_166 = arith.constant 0 : index
    %176 = vector.load %arg9[%c6_164, %c0_165, %c0_166] : memref<9x32x64xf32, #tpu.memory_space<vmem>>, vector<1x32x64xf32>
    %177 = vector.shape_cast %176 : vector<1x32x64xf32> to vector<32x64xf32>
    %cst_167 = arith.constant dense<0.000000e+00> : vector<22x64xf32>
    %178 = tpu.matmul %175, %177, %cst_167 {dimension_numbers = #tpu.dot_dimension_numbers<[1], [0], [0], [1], [0, 0, 1, 1], [], []>} : vector<22x32xf32>, vector<32x64xf32>, vector<22x64xf32> -> vector<22x64xf32>
    %179 = arith.addf %174, %178 : vector<22x64xf32>
    %c13 = arith.constant 13 : index
    %c0_168 = arith.constant 0 : index
    %180 = vector.load %arg18[%c13, %c0_168] : memref<36x32xf32, #tpu.memory_space<vmem>>, vector<22x32xf32>
    %c7_169 = arith.constant 7 : index
    %c0_170 = arith.constant 0 : index
    %c0_171 = arith.constant 0 : index
    %181 = vector.load %arg9[%c7_169, %c0_170, %c0_171] : memref<9x32x64xf32, #tpu.memory_space<vmem>>, vector<1x32x64xf32>
    %182 = vector.shape_cast %181 : vector<1x32x64xf32> to vector<32x64xf32>
    %cst_172 = arith.constant dense<0.000000e+00> : vector<22x64xf32>
    %183 = tpu.matmul %180, %182, %cst_172 {dimension_numbers = #tpu.dot_dimension_numbers<[1], [0], [0], [1], [0, 0, 1, 1], [], []>} : vector<22x32xf32>, vector<32x64xf32>, vector<22x64xf32> -> vector<22x64xf32>
    %184 = arith.addf %179, %183 : vector<22x64xf32>
    %c14 = arith.constant 14 : index
    %c0_173 = arith.constant 0 : index
    %185 = vector.load %arg18[%c14, %c0_173] : memref<36x32xf32, #tpu.memory_space<vmem>>, vector<22x32xf32>
    %c8_174 = arith.constant 8 : index
    %c0_175 = arith.constant 0 : index
    %c0_176 = arith.constant 0 : index
    %186 = vector.load %arg9[%c8_174, %c0_175, %c0_176] : memref<9x32x64xf32, #tpu.memory_space<vmem>>, vector<1x32x64xf32>
    %187 = vector.shape_cast %186 : vector<1x32x64xf32> to vector<32x64xf32>
    %cst_177 = arith.constant dense<0.000000e+00> : vector<22x64xf32>
    %188 = tpu.matmul %185, %187, %cst_177 {dimension_numbers = #tpu.dot_dimension_numbers<[1], [0], [0], [1], [0, 0, 1, 1], [], []>} : vector<22x32xf32>, vector<32x64xf32>, vector<22x64xf32> -> vector<22x64xf32>
    %189 = arith.addf %184, %188 : vector<22x64xf32>
    %c0_178 = arith.constant 0 : index
    %c0_179 = arith.constant 0 : index
    %190 = vector.load %arg10[%c0_178, %c0_179] : memref<1x64xf32, #tpu.memory_space<vmem>>, vector<1x64xf32>
    %191 = vector.broadcast %190 : vector<1x64xf32> to vector<22x64xf32>
    %192 = arith.addf %189, %191 : vector<22x64xf32>
    %193 = math.tanh %192 : vector<22x64xf32>
    %194 = vector.broadcast %143 : vector<22x1xf32> to vector<22x64xf32>
    %195 = arith.mulf %193, %194 : vector<22x64xf32>
    %c7_180 = arith.constant 7 : index
    %c0_181 = arith.constant 0 : index
    %196 = vector.load %arg19[%c7_180, %c0_181] : memref<36x64xf32, #tpu.memory_space<vmem>>, vector<22x64xf32>
    tpu.vector_store %arg19[%c7_180, %c0_181], %195 {strides = array<i32>} : memref<36x64xf32, #tpu.memory_space<vmem>>, vector<22x64xf32>,
    %cst_182 = arith.constant 0.000000e+00 : f32
    %197 = vector.broadcast %cst_182 : f32 to vector<22x64xf32>
    %c0_183 = arith.constant 0 : index
    %c0_184 = arith.constant 0 : index
    %198 = vector.load %arg19[%c0_183, %c0_184] : memref<36x64xf32, #tpu.memory_space<vmem>>, vector<22x64xf32>
    %c0_185 = arith.constant 0 : index
    %c0_186 = arith.constant 0 : index
    %c0_187 = arith.constant 0 : index
    %199 = vector.load %arg11[%c0_185, %c0_186, %c0_187] : memref<9x64x64xf32, #tpu.memory_space<vmem>>, vector<1x64x64xf32>
    %200 = vector.shape_cast %199 : vector<1x64x64xf32> to vector<64x64xf32>
    %cst_188 = arith.constant dense<0.000000e+00> : vector<22x64xf32>
    %201 = tpu.matmul %198, %200, %cst_188 {dimension_numbers = #tpu.dot_dimension_numbers<[1], [0], [0], [1], [0, 0, 1, 1], [], []>} : vector<22x64xf32>, vector<64x64xf32>, vector<22x64xf32> -> vector<22x64xf32>
    %202 = arith.addf %197, %201 : vector<22x64xf32>
    %c1_189 = arith.constant 1 : index
    %c0_190 = arith.constant 0 : index
    %203 = vector.load %arg19[%c1_189, %c0_190] : memref<36x64xf32, #tpu.memory_space<vmem>>, vector<22x64xf32>
    %c1_191 = arith.constant 1 : index
    %c0_192 = arith.constant 0 : index
    %c0_193 = arith.constant 0 : index
    %204 = vector.load %arg11[%c1_191, %c0_192, %c0_193] : memref<9x64x64xf32, #tpu.memory_space<vmem>>, vector<1x64x64xf32>
    %205 = vector.shape_cast %204 : vector<1x64x64xf32> to vector<64x64xf32>
    %cst_194 = arith.constant dense<0.000000e+00> : vector<22x64xf32>
    %206 = tpu.matmul %203, %205, %cst_194 {dimension_numbers = #tpu.dot_dimension_numbers<[1], [0], [0], [1], [0, 0, 1, 1], [], []>} : vector<22x64xf32>, vector<64x64xf32>, vector<22x64xf32> -> vector<22x64xf32>
    %207 = arith.addf %202, %206 : vector<22x64xf32>
    %c2_195 = arith.constant 2 : index
    %c0_196 = arith.constant 0 : index
    %208 = vector.load %arg19[%c2_195, %c0_196] : memref<36x64xf32, #tpu.memory_space<vmem>>, vector<22x64xf32>
    %c2_197 = arith.constant 2 : index
    %c0_198 = arith.constant 0 : index
    %c0_199 = arith.constant 0 : index
    %209 = vector.load %arg11[%c2_197, %c0_198, %c0_199] : memref<9x64x64xf32, #tpu.memory_space<vmem>>, vector<1x64x64xf32>
    %210 = vector.shape_cast %209 : vector<1x64x64xf32> to vector<64x64xf32>
    %cst_200 = arith.constant dense<0.000000e+00> : vector<22x64xf32>
    %211 = tpu.matmul %208, %210, %cst_200 {dimension_numbers = #tpu.dot_dimension_numbers<[1], [0], [0], [1], [0, 0, 1, 1], [], []>} : vector<22x64xf32>, vector<64x64xf32>, vector<22x64xf32> -> vector<22x64xf32>
    %212 = arith.addf %207, %211 : vector<22x64xf32>
    %c6_201 = arith.constant 6 : index
    %c0_202 = arith.constant 0 : index
    %213 = vector.load %arg19[%c6_201, %c0_202] : memref<36x64xf32, #tpu.memory_space<vmem>>, vector<22x64xf32>
    %c3_203 = arith.constant 3 : index
    %c0_204 = arith.constant 0 : index
    %c0_205 = arith.constant 0 : index
    %214 = vector.load %arg11[%c3_203, %c0_204, %c0_205] : memref<9x64x64xf32, #tpu.memory_space<vmem>>, vector<1x64x64xf32>
    %215 = vector.shape_cast %214 : vector<1x64x64xf32> to vector<64x64xf32>
    %cst_206 = arith.constant dense<0.000000e+00> : vector<22x64xf32>
    %216 = tpu.matmul %213, %215, %cst_206 {dimension_numbers = #tpu.dot_dimension_numbers<[1], [0], [0], [1], [0, 0, 1, 1], [], []>} : vector<22x64xf32>, vector<64x64xf32>, vector<22x64xf32> -> vector<22x64xf32>
    %217 = arith.addf %212, %216 : vector<22x64xf32>
    %c7_207 = arith.constant 7 : index
    %c0_208 = arith.constant 0 : index
    %218 = vector.load %arg19[%c7_207, %c0_208] : memref<36x64xf32, #tpu.memory_space<vmem>>, vector<22x64xf32>
    %c4_209 = arith.constant 4 : index
    %c0_210 = arith.constant 0 : index
    %c0_211 = arith.constant 0 : index
    %219 = vector.load %arg11[%c4_209, %c0_210, %c0_211] : memref<9x64x64xf32, #tpu.memory_space<vmem>>, vector<1x64x64xf32>
    %220 = vector.shape_cast %219 : vector<1x64x64xf32> to vector<64x64xf32>
    %cst_212 = arith.constant dense<0.000000e+00> : vector<22x64xf32>
    %221 = tpu.matmul %218, %220, %cst_212 {dimension_numbers = #tpu.dot_dimension_numbers<[1], [0], [0], [1], [0, 0, 1, 1], [], []>} : vector<22x64xf32>, vector<64x64xf32>, vector<22x64xf32> -> vector<22x64xf32>
    %222 = arith.addf %217, %221 : vector<22x64xf32>
    %c8_213 = arith.constant 8 : index
    %c0_214 = arith.constant 0 : index
    %223 = vector.load %arg19[%c8_213, %c0_214] : memref<36x64xf32, #tpu.memory_space<vmem>>, vector<22x64xf32>
    %c5_215 = arith.constant 5 : index
    %c0_216 = arith.constant 0 : index
    %c0_217 = arith.constant 0 : index
    %224 = vector.load %arg11[%c5_215, %c0_216, %c0_217] : memref<9x64x64xf32, #tpu.memory_space<vmem>>, vector<1x64x64xf32>
    %225 = vector.shape_cast %224 : vector<1x64x64xf32> to vector<64x64xf32>
    %cst_218 = arith.constant dense<0.000000e+00> : vector<22x64xf32>
    %226 = tpu.matmul %223, %225, %cst_218 {dimension_numbers = #tpu.dot_dimension_numbers<[1], [0], [0], [1], [0, 0, 1, 1], [], []>} : vector<22x64xf32>, vector<64x64xf32>, vector<22x64xf32> -> vector<22x64xf32>
    %227 = arith.addf %222, %226 : vector<22x64xf32>
    %c12_219 = arith.constant 12 : index
    %c0_220 = arith.constant 0 : index
    %228 = vector.load %arg19[%c12_219, %c0_220] : memref<36x64xf32, #tpu.memory_space<vmem>>, vector<22x64xf32>
    %c6_221 = arith.constant 6 : index
    %c0_222 = arith.constant 0 : index
    %c0_223 = arith.constant 0 : index
    %229 = vector.load %arg11[%c6_221, %c0_222, %c0_223] : memref<9x64x64xf32, #tpu.memory_space<vmem>>, vector<1x64x64xf32>
    %230 = vector.shape_cast %229 : vector<1x64x64xf32> to vector<64x64xf32>
    %cst_224 = arith.constant dense<0.000000e+00> : vector<22x64xf32>
    %231 = tpu.matmul %228, %230, %cst_224 {dimension_numbers = #tpu.dot_dimension_numbers<[1], [0], [0], [1], [0, 0, 1, 1], [], []>} : vector<22x64xf32>, vector<64x64xf32>, vector<22x64xf32> -> vector<22x64xf32>
    %232 = arith.addf %227, %231 : vector<22x64xf32>
    %c13_225 = arith.constant 13 : index
    %c0_226 = arith.constant 0 : index
    %233 = vector.load %arg19[%c13_225, %c0_226] : memref<36x64xf32, #tpu.memory_space<vmem>>, vector<22x64xf32>
    %c7_227 = arith.constant 7 : index
    %c0_228 = arith.constant 0 : index
    %c0_229 = arith.constant 0 : index
    %234 = vector.load %arg11[%c7_227, %c0_228, %c0_229] : memref<9x64x64xf32, #tpu.memory_space<vmem>>, vector<1x64x64xf32>
    %235 = vector.shape_cast %234 : vector<1x64x64xf32> to vector<64x64xf32>
    %cst_230 = arith.constant dense<0.000000e+00> : vector<22x64xf32>
    %236 = tpu.matmul %233, %235, %cst_230 {dimension_numbers = #tpu.dot_dimension_numbers<[1], [0], [0], [1], [0, 0, 1, 1], [], []>} : vector<22x64xf32>, vector<64x64xf32>, vector<22x64xf32> -> vector<22x64xf32>
    %237 = arith.addf %232, %236 : vector<22x64xf32>
    %c14_231 = arith.constant 14 : index
    %c0_232 = arith.constant 0 : index
    %238 = vector.load %arg19[%c14_231, %c0_232] : memref<36x64xf32, #tpu.memory_space<vmem>>, vector<22x64xf32>
    %c8_233 = arith.constant 8 : index
    %c0_234 = arith.constant 0 : index
    %c0_235 = arith.constant 0 : index
    %239 = vector.load %arg11[%c8_233, %c0_234, %c0_235] : memref<9x64x64xf32, #tpu.memory_space<vmem>>, vector<1x64x64xf32>
    %240 = vector.shape_cast %239 : vector<1x64x64xf32> to vector<64x64xf32>
    %cst_236 = arith.constant dense<0.000000e+00> : vector<22x64xf32>
    %241 = tpu.matmul %238, %240, %cst_236 {dimension_numbers = #tpu.dot_dimension_numbers<[1], [0], [0], [1], [0, 0, 1, 1], [], []>} : vector<22x64xf32>, vector<64x64xf32>, vector<22x64xf32> -> vector<22x64xf32>
    %242 = arith.addf %237, %241 : vector<22x64xf32>
    %c0_237 = arith.constant 0 : index
    %c0_238 = arith.constant 0 : index
    %243 = vector.load %arg12[%c0_237, %c0_238] : memref<1x64xf32, #tpu.memory_space<vmem>>, vector<1x64xf32>
    %244 = vector.broadcast %243 : vector<1x64xf32> to vector<22x64xf32>
    %245 = arith.addf %242, %244 : vector<22x64xf32>
    %246 = math.tanh %245 : vector<22x64xf32>
    %c7_239 = arith.constant 7 : index
    %c0_240 = arith.constant 0 : index
    %247 = vector.load %arg20[%c7_239, %c0_240] : memref<36x64xf32, #tpu.memory_space<vmem>>, vector<22x64xf32>
    tpu.vector_store %arg20[%c7_239, %c0_240], %246 {strides = array<i32>} : memref<36x64xf32, #tpu.memory_space<vmem>>, vector<22x64xf32>,
    %c7_241 = arith.constant 7 : index
    %c0_242 = arith.constant 0 : index
    %248 = vector.load %arg20[%c7_241, %c0_242] : memref<36x64xf32, #tpu.memory_space<vmem>>, vector<15x64xf32>
    %c8_243 = arith.constant 8 : index
    %c0_244 = arith.constant 0 : index
    %249 = vector.load %arg20[%c8_243, %c0_244] : memref<36x64xf32, #tpu.memory_space<vmem>>, vector<15x64xf32>
    %c13_245 = arith.constant 13 : index
    %c0_246 = arith.constant 0 : index
    %250 = vector.load %arg20[%c13_245, %c0_246] : memref<36x64xf32, #tpu.memory_space<vmem>>, vector<15x64xf32>
    %c14_247 = arith.constant 14 : index
    %c0_248 = arith.constant 0 : index
    %251 = vector.load %arg20[%c14_247, %c0_248] : memref<36x64xf32, #tpu.memory_space<vmem>>, vector<15x64xf32>
    %252 = arith.maximumf %248, %249 : vector<15x64xf32>
    %253 = arith.maximumf %250, %251 : vector<15x64xf32>
    %254 = arith.maximumf %252, %253 : vector<15x64xf32>
    %c0_249 = arith.constant 0 : index
    %c0_250 = arith.constant 0 : index
    %255 = vector.load %arg4[%c0_249, %c0_250] : memref<8x15xf32, #tpu.memory_space<vmem>>, vector<8x15xf32>
    %cst_251 = arith.constant dense<0.000000e+00> : vector<8x64xf32>
    %256 = tpu.matmul %255, %254, %cst_251 {dimension_numbers = #tpu.dot_dimension_numbers<[1], [0], [0], [1], [0, 0, 1, 1], [], []>} : vector<8x15xf32>, vector<15x64xf32>, vector<8x64xf32> -> vector<8x64xf32>
    %c0_252 = arith.constant 0 : index
    %c0_253 = arith.constant 0 : index
    %257 = vector.load %arg13[%c0_252, %c0_253] : memref<64x128xf32, #tpu.memory_space<vmem>>, vector<64x128xf32>
    %cst_254 = arith.constant dense<0.000000e+00> : vector<8x128xf32>
    %258 = tpu.matmul %256, %257, %cst_254 {dimension_numbers = #tpu.dot_dimension_numbers<[1], [0], [0], [1], [0, 0, 1, 1], [], []>} : vector<8x64xf32>, vector<64x128xf32>, vector<8x128xf32> -> vector<8x128xf32>
    %c0_255 = arith.constant 0 : index
    %c0_256 = arith.constant 0 : index
    %259 = vector.load %arg14[%c0_255, %c0_256] : memref<1x128xf32, #tpu.memory_space<vmem>>, vector<1x128xf32>
    %260 = vector.broadcast %259 : vector<1x128xf32> to vector<8x128xf32>
    %261 = arith.addf %258, %260 : vector<8x128xf32>
    %cst_257 = arith.constant dense<0xFF800000> : vector<8xf32>
    %262 = vector.multi_reduction <maximumf>, %261, %cst_257 [1] : vector<8x128xf32> to vector<8xf32>
    %263 = vector.shape_cast %262 : vector<8xf32> to vector<8x1xf32>
    %264 = vector.broadcast %263 : vector<8x1xf32> to vector<8x128xf32>
    %265 = arith.subf %261, %264 : vector<8x128xf32>
    %266 = math.exp %265 : vector<8x128xf32>
    %cst_258 = arith.constant dense<0.000000e+00> : vector<8xf32>
    %267 = vector.multi_reduction <add>, %266, %cst_258 [1] : vector<8x128xf32> to vector<8xf32>
    %268 = vector.shape_cast %267 : vector<8xf32> to vector<8x1xf32>
    %269 = tpu.reciprocal %268 {approx = true} : vector<8x1xf32> -> vector<8x1xf32>
    %270 = vector.broadcast %269 : vector<8x1xf32> to vector<8x128xf32>
    %271 = arith.mulf %266, %270 : vector<8x128xf32>
    %c0_259 = arith.constant 0 : index
    %c0_260 = arith.constant 0 : index
    %272 = vector.load %arg15[%c0_259, %c0_260] : memref<8x128xf32, #tpu.memory_space<vmem>>, vector<8x128xf32>
    tpu.vector_store %arg15[%c0_259, %c0_260], %271 {strides = array<i32>} : memref<8x128xf32, #tpu.memory_space<vmem>>, vector<8x128xf32>,
    return
  }
}

</mosaic_0001>

<llo_original>
// kernel: actor_forward.1
$region0: #{actor_forward.1}
  #allocation0 [shape = 'u32[]', space=smem, size = 0x4, offset = 0x4, fixed_abs, tag = 'smem constant byte address 0x4 - core index']
  #allocation1 [shape = 'u32[144,128]{1,0:T(1,128)}', space=vmem, size = 0x12000, scoped, tag = 'internal scratch']
  #allocation2 [shape = 'f32[100,32]{1,0:T(8,128)}', space=vmem, size = 0xd000, scoped, tag = 'scratch operand']
  #allocation3 [shape = 'f32[100,32]{1,0:T(8,128)}', space=vmem, size = 0xd000, scoped, tag = 'scratch operand']
  #allocation4 [shape = 'f32[36,32]{1,0:T(8,128)}', space=vmem, size = 0x5000, scoped, tag = 'scratch operand']
  #allocation5 [shape = 'f32[36,64]{1,0:T(8,128)}', space=vmem, size = 0x5000, scoped, tag = 'scratch operand']
  #allocation6 [shape = 'f32[36,64]{1,0:T(8,128)}', space=vmem, size = 0x5000, scoped, tag = 'scratch operand']
  %s0 = inlined_call_operand.vmem [shape: f32[100,1], index: 0, kind: input, shape index: {}]
  %s1 = inlined_call_operand.hbm [shape: f32[78,1], index: 1, kind: input, shape index: {}]
  %s2 = inlined_call_operand.vmem [shape: f32[22,1], index: 2, kind: input, shape index: {}]
  %s3 = inlined_call_operand.hbm [shape: f32[22,67], index: 3, kind: input, shape index: {}]
  %s4 = inlined_call_operand.vmem [shape: f32[8,15], index: 4, kind: input, shape index: {}]
  %s5 = inlined_call_operand.hbm [shape: f32[9,1,32], index: 5, kind: input, shape index: {}]
  %s6 = inlined_call_operand.vmem [shape: f32[1,32], index: 6, kind: input, shape index: {}]
  %s7 = inlined_call_operand.vmem [shape: f32[9,32,32], index: 7, kind: input, shape index: {}]
  %s8 = inlined_call_operand.vmem [shape: f32[1,32], index: 8, kind: input, shape index: {}]
  %s9 = inlined_call_operand.hbm [shape: f32[9,32,64], index: 9, kind: input, shape index: {}]
  %s10 = inlined_call_operand.vmem [shape: f32[1,64], index: 10, kind: input, shape index: {}]
  %s11 = inlined_call_operand.hbm [shape: f32[9,64,64], index: 11, kind: input, shape index: {}]
  %s12 = inlined_call_operand.hbm [shape: f32[1,64], index: 12, kind: input, shape index: {}]
  %s13 = inlined_call_operand.vmem [shape: f32[64,128], index: 13, kind: input, shape index: {}]
  %s14 = inlined_call_operand.vmem [shape: f32[1,128], index: 14, kind: input, shape index: {}]
  %s15 = inlined_call_operand.vmem [shape: f32[8,128], index: 15, kind: output, shape index: {}]
  %s16 = sld [smem:[#allocation0]]
  $region94: #{actor_forward.1} parent=0
    _
  %s18 = ssub.s32 1, %s16
  %s19 = scalar_select 0, %s18, %s16
  $region1: #{actor_forward.1} parent=0
    #allocation7 [shape = 'u8[40960]{0}', space=vmem, size = 0xa000, scoped, tag = 'input window, operand 1, single buffered']
    #allocation8 [shape = 's32[1]{0}', space=sflag, size = 0x4, scoped, tag = 'scoped memory for actor_forward.1']
    #allocation9 [shape = 'u8[12288]{0}', space=vmem, size = 0x3000, scoped, tag = 'input window, operand 3, single buffered']
    #allocation10 [shape = 's32[1]{0}', space=sflag, size = 0x4, scoped, tag = 'scoped memory for actor_forward.1']
    #allocation11 [shape = 'u8[4608]{0}', space=vmem, size = 0x1400, scoped, tag = 'input window, operand 5, single buffered']
    #allocation12 [shape = 'u8[147456]{0}', space=vmem, size = 0x24000, scoped, tag = 'input window, operand 9, single buffered']
    #allocation13 [shape = 's32[1]{0}', space=sflag, size = 0x4, scoped, tag = 'scoped memory for actor_forward.1']
    #allocation14 [shape = 'u8[294912]{0}', space=vmem, size = 0x48000, scoped, tag = 'input window, operand 11, single buffered']
    #allocation15 [shape = 'u8[512]{0}', space=vmem, size = 0x400, scoped, tag = 'input window, operand 12, single buffered']
    #allocation16 [shape = 's32[1]{0}', space=sflag, size = 0x4, scoped, tag = 'scoped memory for actor_forward.1']
    %20 = vsyncpa [#allocation8], 0
    %21 = vsyncpa [#allocation10], 0
    %22 = vsyncpa [#allocation13], 0
    %23 = vsyncpa [#allocation16], 0
    // Predicated region
    $region2: #{actor_forward.1} parent=1 // pred_check
      _
    $region3: #{actor_forward.1} parent=1 // pred_check_branch
      %25 = sbr.rel (0) target = $region5
    $region4: #{actor_forward.1} parent=1 // pred_region
      _
    $region5: #{actor_forward.1} parent=1 // pred_fallthru
      _
    // Predicated region
    $region6: #{actor_forward.1} parent=1 // pred_check
      _
    $region7: #{actor_forward.1} parent=1 // pred_check_branch
      %27 = sbr.rel (0) target = $region9
    $region8: #{actor_forward.1} parent=1 // pred_region
      %s29 = ssub.s32 1280, 1280
      %30 = vsyncadd [#allocation8], %s29
      %s31 = sshll.u32 [#allocation7], 4
      %s32 = int_to_ptr.vmem [resolvable:$true] %s31
      %37 = dma.hbm_to_vmem [thread:$0]  %s1, 1280, %s32, [#allocation8], 128, 128, 8
    $region9: #{actor_forward.1} parent=1 // pred_fallthru
      _
    // Predicated region
    $region10: #{actor_forward.1} parent=1 // pred_check
      _
    $region11: #{actor_forward.1} parent=1 // pred_check_branch
      %39 = sbr.rel (0) target = $region13
    $region12: #{actor_forward.1} parent=1 // pred_region
      _
    $region13: #{actor_forward.1} parent=1 // pred_fallthru
      _
    // Predicated region
    $region14: #{actor_forward.1} parent=1 // pred_check
      _
    $region15: #{actor_forward.1} parent=1 // pred_check_branch
      %41 = sbr.rel (0) target = $region17
    $region16: #{actor_forward.1} parent=1 // pred_region
      %s43 = ssub.s32 384, 384
      %44 = vsyncadd [#allocation10], %s43
      %s45 = sshll.u32 [#allocation9], 4
      %s46 = int_to_ptr.vmem [resolvable:$true] %s45
      %51 = dma.hbm_to_vmem [thread:$0]  %s3, 384, %s46, [#allocation10], 128, 128, 8
    $region17: #{actor_forward.1} parent=1 // pred_fallthru
      _
    // Predicated region
    $region18: #{actor_forward.1} parent=1 // pred_check
      _
    $region19: #{actor_forward.1} parent=1 // pred_check_branch
      %53 = sbr.rel (0) target = $region21
    $region20: #{actor_forward.1} parent=1 // pred_region
      _
    $region21: #{actor_forward.1} parent=1 // pred_fallthru
      _
    // Predicated region
    $region22: #{actor_forward.1} parent=1 // pred_check
      _
    $region23: #{actor_forward.1} parent=1 // pred_check_branch
      %55 = sbr.rel (0) target = $region25
    $region24: #{actor_forward.1} parent=1 // pred_region
      %s57 = ssub.s32 144, 144
      %58 = vsyncadd [#allocation10], %s57
      %s59 = sshll.u32 [#allocation11], 4
      %s60 = int_to_ptr.vmem [resolvable:$true] %s59
      %65 = dma.hbm_to_vmem [thread:$0]  %s5, 144, %s60, [#allocation10], 16, 16, 1
    $region25: #{actor_forward.1} parent=1 // pred_fallthru
      _
    // Predicated region
    $region26: #{actor_forward.1} parent=1 // pred_check
      _
    $region27: #{actor_forward.1} parent=1 // pred_check_branch
      %67 = sbr.rel (0) target = $region29
    $region28: #{actor_forward.1} parent=1 // pred_region
      _
    $region29: #{actor_forward.1} parent=1 // pred_fallthru
      _
    // Predicated region
    $region30: #{actor_forward.1} parent=1 // pred_check
      _
    $region31: #{actor_forward.1} parent=1 // pred_check_branch
      %69 = sbr.rel (0) target = $region33
    $region32: #{actor_forward.1} parent=1 // pred_region
      _
    $region33: #{actor_forward.1} parent=1 // pred_fallthru
      _
    // Predicated region
    $region34: #{actor_forward.1} parent=1 // pred_check
      _
    $region35: #{actor_forward.1} parent=1 // pred_check_branch
      %71 = sbr.rel (0) target = $region37
    $region36: #{actor_forward.1} parent=1 // pred_region
      _
    $region37: #{actor_forward.1} parent=1 // pred_fallthru
      _
    // Predicated region
    $region38: #{actor_forward.1} parent=1 // pred_check
      _
    $region39: #{actor_forward.1} parent=1 // pred_check_branch
      %73 = sbr.rel (0) target = $region41
    $region40: #{actor_forward.1} parent=1 // pred_region
      %s75 = ssub.s32 4608, 4608
      %76 = vsyncadd [#allocation13], %s75
      %s77 = sshll.u32 [#allocation12], 4
      %s78 = int_to_ptr.vmem [resolvable:$true] %s77
      %83 = dma.hbm_to_vmem [thread:$0]  %s9, 4608, %s78, [#allocation13], 128, 128, 8
    $region41: #{actor_forward.1} parent=1 // pred_fallthru
      _
    // Predicated region
    $region42: #{actor_forward.1} parent=1 // pred_check
      _
    $region43: #{actor_forward.1} parent=1 // pred_check_branch
      %85 = sbr.rel (0) target = $region45
    $region44: #{actor_forward.1} parent=1 // pred_region
      _
    $region45: #{actor_forward.1} parent=1 // pred_fallthru
      _
    // Predicated region
    $region46: #{actor_forward.1} parent=1 // pred_check
      _
    $region47: #{actor_forward.1} parent=1 // pred_check_branch
      %87 = sbr.rel (0) target = $region49
    $region48: #{actor_forward.1} parent=1 // pred_region
      %s89 = ssub.s32 9216, 9216
      %90 = vsyncadd [#allocation13], %s89
      %s91 = sshll.u32 [#allocation14], 4
      %s92 = int_to_ptr.vmem [resolvable:$true] %s91
      %97 = dma.hbm_to_vmem [thread:$0]  %s11, 9216, %s92, [#allocation13], 128, 128, 8
    $region49: #{actor_forward.1} parent=1 // pred_fallthru
      _
    // Predicated region
    $region50: #{actor_forward.1} parent=1 // pred_check
      _
    $region51: #{actor_forward.1} parent=1 // pred_check_branch
      %99 = sbr.rel (0) target = $region53
    $region52: #{actor_forward.1} parent=1 // pred_region
      %s101 = ssub.s32 16, 16
      %102 = vsyncadd [#allocation16], %s101
      %s104 = sshll.u32 [#allocation15], 4
      %s105 = int_to_ptr.vmem [resolvable:$true] %s104
      %107 = dma.hbm_to_vmem [thread:$0]  %s12, 16, %s105, [#allocation16]
    $region53: #{actor_forward.1} parent=1 // pred_fallthru
      _
    // Predicated region
    $region54: #{actor_forward.1} parent=1 // pred_check
      _
    $region55: #{actor_forward.1} parent=1 // pred_check_branch
      %109 = sbr.rel (0) target = $region57
    $region56: #{actor_forward.1} parent=1 // pred_region
      _
    $region57: #{actor_forward.1} parent=1 // pred_fallthru
      _
    // Predicated region
    $region58: #{actor_forward.1} parent=1 // pred_check
      _
    $region59: #{actor_forward.1} parent=1 // pred_check_branch
      %111 = sbr.rel (0) target = $region61
    $region60: #{actor_forward.1} parent=1 // pred_region
      _
    $region61: #{actor_forward.1} parent=1 // pred_fallthru
      _
    // Predicated region
    $region62: #{actor_forward.1} parent=1 // pred_check
      _
    $region63: #{actor_forward.1} parent=1 // pred_check_branch
      %113 = sbr.rel (0) target = $region65
    $region64: #{actor_forward.1} parent=1 // pred_region
      %114 = dma.done [#allocation8], 1280
    $region65: #{actor_forward.1} parent=1 // pred_fallthru
      _
    // Predicated region
    $region66: #{actor_forward.1} parent=1 // pred_check
      _
    $region67: #{actor_forward.1} parent=1 // pred_check_branch
      %116 = sbr.rel (0) target = $region69
    $region68: #{actor_forward.1} parent=1 // pred_region
      %117 = dma.done [#allocation10], 384
    $region69: #{actor_forward.1} parent=1 // pred_fallthru
      _
    // Predicated region
    $region70: #{actor_forward.1} parent=1 // pred_check
      _
    $region71: #{actor_forward.1} parent=1 // pred_check_branch
      %119 = sbr.rel (0) target = $region73
    $region72: #{actor_forward.1} parent=1 // pred_region
      %120 = dma.done [#allocation10], 144
    $region73: #{actor_forward.1} parent=1 // pred_fallthru
      _
    // Predicated region
    $region74: #{actor_forward.1} parent=1 // pred_check
      _
    $region75: #{actor_forward.1} parent=1 // pred_check_branch
      %122 = sbr.rel (0) target = $region77
    $region76: #{actor_forward.1} parent=1 // pred_region
      %123 = dma.done [#allocation13], 4608
    $region77: #{actor_forward.1} parent=1 // pred_fallthru
      _
    // Predicated region
    $region78: #{actor_forward.1} parent=1 // pred_check
      _
    $region79: #{actor_forward.1} parent=1 // pred_check_branch
      %125 = sbr.rel (0) target = $region81
    $region80: #{actor_forward.1} parent=1 // pred_region
      %126 = dma.done [#allocation13], 9216
    $region81: #{actor_forward.1} parent=1 // pred_fallthru
      _
    // Predicated region
    $region82: #{actor_forward.1} parent=1 // pred_check
      _
    $region83: #{actor_forward.1} parent=1 // pred_check_branch
      %128 = sbr.rel (0) target = $region85
    $region84: #{actor_forward.1} parent=1 // pred_region
      %129 = dma.done [#allocation16], 16
    $region85: #{actor_forward.1} parent=1 // pred_fallthru
      _
    %vm130 = vcmask 261120
    %131 = vst.msk [vmem:[#allocation2] sm:$0xff] %vm130, 0.0
    %132 = vst.msk [vmem:[#allocation2 + $0x8] sm:$0xff] %vm130, 0.0
    %133 = vst.msk [vmem:[#allocation2 + $0x10] sm:$0xff] %vm130, 0.0
    %134 = vst.msk [vmem:[#allocation2 + $0x18] sm:$0xff] %vm130, 0.0
    %135 = vst.msk [vmem:[#allocation2 + $0x20] sm:$0xff] %vm130, 0.0
    %136 = vst.msk [vmem:[#allocation2 + $0x28] sm:$0xff] %vm130, 0.0
    %137 = vst.msk [vmem:[#allocation2 + $0x30] sm:$0xff] %vm130, 0.0
    %138 = vst.msk [vmem:[#allocation2 + $0x38] sm:$0xff] %vm130, 0.0
    %139 = vst.msk [vmem:[#allocation2 + $0x40] sm:$0xff] %vm130, 0.0
    %140 = vst.msk [vmem:[#allocation2 + $0x48] sm:$0xff] %vm130, 0.0
    %141 = vst.msk [vmem:[#allocation2 + $0x50] sm:$0xff] %vm130, 0.0
    %142 = vst.msk [vmem:[#allocation2 + $0x58] sm:$0xff] %vm130, 0.0
    %vm143 = vcmask 257024
    %144 = vst.msk [vmem:[#allocation2 + $0x60] sm:$0xf] %vm143, 0.0
    %145 = vst.msk [vmem:[#allocation3] sm:$0xff] %vm130, 0.0
    %146 = vst.msk [vmem:[#allocation3 + $0x8] sm:$0xff] %vm130, 0.0
    %147 = vst.msk [vmem:[#allocation3 + $0x10] sm:$0xff] %vm130, 0.0
    %148 = vst.msk [vmem:[#allocation3 + $0x18] sm:$0xff] %vm130, 0.0
    %149 = vst.msk [vmem:[#allocation3 + $0x20] sm:$0xff] %vm130, 0.0
    %150 = vst.msk [vmem:[#allocation3 + $0x28] sm:$0xff] %vm130, 0.0
    %151 = vst.msk [vmem:[#allocation3 + $0x30] sm:$0xff] %vm130, 0.0
    %152 = vst.msk [vmem:[#allocation3 + $0x38] sm:$0xff] %vm130, 0.0
    %153 = vst.msk [vmem:[#allocation3 + $0x40] sm:$0xff] %vm130, 0.0
    %154 = vst.msk [vmem:[#allocation3 + $0x48] sm:$0xff] %vm130, 0.0
    %155 = vst.msk [vmem:[#allocation3 + $0x50] sm:$0xff] %vm130, 0.0
    %156 = vst.msk [vmem:[#allocation3 + $0x58] sm:$0xff] %vm130, 0.0
    %157 = vst.msk [vmem:[#allocation3 + $0x60] sm:$0xf] %vm143, 0.0
    %158 = vst.msk [vmem:[#allocation4] sm:$0xff] %vm130, 0.0
    %159 = vst.msk [vmem:[#allocation4 + $0x8] sm:$0xff] %vm130, 0.0
    %160 = vst.msk [vmem:[#allocation4 + $0x10] sm:$0xff] %vm130, 0.0
    %161 = vst.msk [vmem:[#allocation4 + $0x18] sm:$0xff] %vm130, 0.0
    %162 = vst.msk [vmem:[#allocation4 + $0x20] sm:$0xf] %vm143, 0.0
    %vm163 = vcmask 523264
    %164 = vst.msk [vmem:[#allocation5] sm:$0xff] %vm163, 0.0
    %165 = vst.msk [vmem:[#allocation5 + $0x8] sm:$0xff] %vm163, 0.0
    %166 = vst.msk [vmem:[#allocation5 + $0x10] sm:$0xff] %vm163, 0.0
    %167 = vst.msk [vmem:[#allocation5 + $0x18] sm:$0xff] %vm163, 0.0
    %vm168 = vcmask 519168
    %169 = vst.msk [vmem:[#allocation5 + $0x20] sm:$0xf] %vm168, 0.0
    %170 = vst.msk [vmem:[#allocation6] sm:$0xff] %vm163, 0.0
    %171 = vst.msk [vmem:[#allocation6 + $0x8] sm:$0xff] %vm163, 0.0
    %172 = vst.msk [vmem:[#allocation6 + $0x10] sm:$0xff] %vm163, 0.0
    %173 = vst.msk [vmem:[#allocation6 + $0x18] sm:$0xff] %vm163, 0.0
    %174 = vst.msk [vmem:[#allocation6 + $0x20] sm:$0xf] %vm168, 0.0
    %v175 = vld [vmem:[#allocation7] sm:$0xff]
    %v176 = vld [vmem:[#allocation7 + $0x8] sm:$0xff]
    %v177 = vld [vmem:[#allocation7 + $0x10] sm:$0xff]
    %v178 = vld [vmem:[#allocation7 + $0x18] sm:$0xff]
    %v179 = vld [vmem:[#allocation7 + $0x20] sm:$0xff]
    %v180 = vld [vmem:[#allocation7 + $0x28] sm:$0xff]
    %v181 = vld [vmem:[#allocation7 + $0x30] sm:$0xff]
    %v182 = vld [vmem:[#allocation7 + $0x38] sm:$0xff]
    %v183 = vld [vmem:[#allocation7 + $0x40] sm:$0xff]
    %v184 = vld [vmem:[#allocation7 + $0x48] sm:$0x3f]
    %v185 = vld [vmem:[%s0] sm:$0xff]
    %v186 = vld [vmem:[%s0 + $0x8] sm:$0xff]
    %v187 = vld [vmem:[%s0 + $0x10] sm:$0xff]
    %v188 = vld [vmem:[%s0 + $0x18] sm:$0xff]
    %v189 = vld [vmem:[%s0 + $0x20] sm:$0xff]
    %v190 = vld [vmem:[%s0 + $0x28] sm:$0xff]
    %v191 = vld [vmem:[%s0 + $0x30] sm:$0xff]
    %v192 = vld [vmem:[%s0 + $0x38] sm:$0xff]
    %v193 = vld [vmem:[%s0 + $0x40] sm:$0xff]
    %v194 = vld [vmem:[%s0 + $0x48] sm:$0x3f]
    %v195 = vld [vmem:[#allocation11] sm:$0x1]
    %197 = vset.pattern.permute.xlu0 0
    %198 = vperm.xlu0 %197, %v185
    %v199 = vpop.permute.xlu0 %198
    %202 = vset.pattern.permute.xlu0 0
    %203 = vperm.xlu0 %202, %v186
    %v204 = vpop.permute.xlu0 %203
    %207 = vset.pattern.permute.xlu0 0
    %208 = vperm.xlu0 %207, %v187
    %v209 = vpop.permute.xlu0 %208
    %212 = vset.pattern.permute.xlu0 0
    %213 = vperm.xlu0 %212, %v188
    %v214 = vpop.permute.xlu0 %213
    %217 = vset.pattern.permute.xlu0 0
    %218 = vperm.xlu0 %217, %v189
    %v219 = vpop.permute.xlu0 %218
    %222 = vset.pattern.permute.xlu0 0
    %223 = vperm.xlu0 %222, %v190
    %v224 = vpop.permute.xlu0 %223
    %227 = vset.pattern.permute.xlu0 0
    %228 = vperm.xlu0 %227, %v191
    %v229 = vpop.permute.xlu0 %228
    %232 = vset.pattern.permute.xlu0 0
    %233 = vperm.xlu0 %232, %v192
    %v234 = vpop.permute.xlu0 %233
    %237 = vset.pattern.permute.xlu0 0
    %238 = vperm.xlu0 %237, %v193
    %v239 = vpop.permute.xlu0 %238
    %242 = vset.pattern.permute.xlu0 0
    %243 = vperm.xlu0 %242, %v194
    %v244 = vpop.permute.xlu0 %243
    %v247 = vlaneseq
    %v248 = vshrl.u32 %v247, 7
    %v249 = vsub.s32 0, %v248
    %v250 = vrot.slane %v195, %v249
    %v252 = vmul.f32 %v199, %v250
    %v253 = vmul.f32 %v204, %v250
    %v254 = vmul.f32 %v209, %v250
    %v255 = vmul.f32 %v214, %v250
    %v256 = vmul.f32 %v219, %v250
    %v257 = vmul.f32 %v224, %v250
    %v258 = vmul.f32 %v229, %v250
    %v259 = vmul.f32 %v234, %v250
    %v260 = vmul.f32 %v239, %v250
    %v261 = vmul.f32 %v244, %v250
    %v262 = vadd.f32 %v252, 0.0
    %v263 = vadd.f32 %v253, 0.0
    %v264 = vadd.f32 %v254, 0.0
    %v265 = vadd.f32 %v255, 0.0
    %v266 = vadd.f32 %v256, 0.0
    %v267 = vadd.f32 %v257, 0.0
    %v268 = vadd.f32 %v258, 0.0
    %v269 = vadd.f32 %v259, 0.0
    %v270 = vadd.f32 %v260, 0.0
    %v271 = vadd.f32 %v261, 0.0
    %v272 = vld [vmem:[%s0 + $0x1] sm:$0xff]
    %v273 = vld [vmem:[%s0 + $0x9] sm:$0xff]
    %v274 = vld [vmem:[%s0 + $0x11] sm:$0xff]
    %v275 = vld [vmem:[%s0 + $0x19] sm:$0xff]
    %v276 = vld [vmem:[%s0 + $0x21] sm:$0xff]
    %v277 = vld [vmem:[%s0 + $0x29] sm:$0xff]
    %v278 = vld [vmem:[%s0 + $0x31] sm:$0xff]
    %v279 = vld [vmem:[%s0 + $0x39] sm:$0xff]
    %v280 = vld [vmem:[%s0 + $0x41] sm:$0xff]
    %v281 = vld [vmem:[%s0 + $0x49] sm:$0x3f]
    %s282 = scalar_lea.vmem [#allocation11], 1
    %v283 = vld [vmem:[%s282] sm:$0x1]
    %285 = vset.pattern.permute.xlu0 0
    %286 = vperm.xlu0 %285, %v272
    %v287 = vpop.permute.xlu0 %286
    %290 = vset.pattern.permute.xlu0 0
    %291 = vperm.xlu0 %290, %v273
    %v292 = vpop.permute.xlu0 %291
    %295 = vset.pattern.permute.xlu0 0
    %296 = vperm.xlu0 %295, %v274
    %v297 = vpop.permute.xlu0 %296
    %300 = vset.pattern.permute.xlu0 0
    %301 = vperm.xlu0 %300, %v275
    %v302 = vpop.permute.xlu0 %301
    %305 = vset.pattern.permute.xlu0 0
    %306 = vperm.xlu0 %305, %v276
    %v307 = vpop.permute.xlu0 %306
    %310 = vset.pattern.permute.xlu0 0
    %311 = vperm.xlu0 %310, %v277
    %v312 = vpop.permute.xlu0 %311
    %315 = vset.pattern.permute.xlu0 0
    %316 = vperm.xlu0 %315, %v278
    %v317 = vpop.permute.xlu0 %316
    %320 = vset.pattern.permute.xlu0 0
    %321 = vperm.xlu0 %320, %v279
    %v322 = vpop.permute.xlu0 %321
    %325 = vset.pattern.permute.xlu0 0
    %326 = vperm.xlu0 %325, %v280
    %v327 = vpop.permute.xlu0 %326
    %330 = vset.pattern.permute.xlu0 0
    %331 = vperm.xlu0 %330, %v281
    %v332 = vpop.permute.xlu0 %331
    %v335 = vlaneseq
    %v336 = vshrl.u32 %v335, 7
    %v337 = vsub.s32 0, %v336
    %v338 = vrot.slane %v283, %v337
    %v340 = vmul.f32 %v287, %v338
    %v341 = vmul.f32 %v292, %v338
    %v342 = vmul.f32 %v297, %v338
    %v343 = vmul.f32 %v302, %v338
    %v344 = vmul.f32 %v307, %v338
    %v345 = vmul.f32 %v312, %v338
    %v346 = vmul.f32 %v317, %v338
    %v347 = vmul.f32 %v322, %v338
    %v348 = vmul.f32 %v327, %v338
    %v349 = vmul.f32 %v332, %v338
    %v350 = vadd.f32 %v262, %v340
    %v351 = vadd.f32 %v263, %v341
    %v352 = vadd.f32 %v264, %v342
    %v353 = vadd.f32 %v265, %v343
    %v354 = vadd.f32 %v266, %v344
    %v355 = vadd.f32 %v267, %v345
    %v356 = vadd.f32 %v268, %v346
    %v357 = vadd.f32 %v269, %v347
    %v358 = vadd.f32 %v270, %v348
    %v359 = vadd.f32 %v271, %v349
    %v360 = vld [vmem:[%s0 + $0x2] sm:$0xff]
    %v361 = vld [vmem:[%s0 + $0xa] sm:$0xff]
    %v362 = vld [vmem:[%s0 + $0x12] sm:$0xff]
    %v363 = vld [vmem:[%s0 + $0x1a] sm:$0xff]
    %v364 = vld [vmem:[%s0 + $0x22] sm:$0xff]
    %v365 = vld [vmem:[%s0 + $0x2a] sm:$0xff]
    %v366 = vld [vmem:[%s0 + $0x32] sm:$0xff]
    %v367 = vld [vmem:[%s0 + $0x3a] sm:$0xff]
    %v368 = vld [vmem:[%s0 + $0x42] sm:$0xff]
    %v369 = vld [vmem:[%s0 + $0x4a] sm:$0x3f]
    %s370 = scalar_lea.vmem [#allocation11], 2
    %v371 = vld [vmem:[%s370] sm:$0x1]
    %373 = vset.pattern.permute.xlu0 0
    %374 = vperm.xlu0 %373, %v360
    %v375 = vpop.permute.xlu0 %374
    %378 = vset.pattern.permute.xlu0 0
    %379 = vperm.xlu0 %378, %v361
    %v380 = vpop.permute.xlu0 %379
    %383 = vset.pattern.permute.xlu0 0
    %384 = vperm.xlu0 %383, %v362
    %v385 = vpop.permute.xlu0 %384
    %388 = vset.pattern.permute.xlu0 0
    %389 = vperm.xlu0 %388, %v363
    %v390 = vpop.permute.xlu0 %389
    %393 = vset.pattern.permute.xlu0 0
    %394 = vperm.xlu0 %393, %v364
    %v395 = vpop.permute.xlu0 %394
    %398 = vset.pattern.permute.xlu0 0
    %399 = vperm.xlu0 %398, %v365
    %v400 = vpop.permute.xlu0 %399
    %403 = vset.pattern.permute.xlu0 0
    %404 = vperm.xlu0 %403, %v366
    %v405 = vpop.permute.xlu0 %404
    %408 = vset.pattern.permute.xlu0 0
    %409 = vperm.xlu0 %408, %v367
    %v410 = vpop.permute.xlu0 %409
    %413 = vset.pattern.permute.xlu0 0
    %414 = vperm.xlu0 %413, %v368
    %v415 = vpop.permute.xlu0 %414
    %418 = vset.pattern.permute.xlu0 0
    %419 = vperm.xlu0 %418, %v369
    %v420 = vpop.permute.xlu0 %419
    %v423 = vlaneseq
    %v424 = vshrl.u32 %v423, 7
    %v425 = vsub.s32 0, %v424
    %v426 = vrot.slane %v371, %v425
    %v428 = vmul.f32 %v375, %v426
    %v429 = vmul.f32 %v380, %v426
    %v430 = vmul.f32 %v385, %v426
    %v431 = vmul.f32 %v390, %v426
    %v432 = vmul.f32 %v395, %v426
    %v433 = vmul.f32 %v400, %v426
    %v434 = vmul.f32 %v405, %v426
    %v435 = vmul.f32 %v410, %v426
    %v436 = vmul.f32 %v415, %v426
    %v437 = vmul.f32 %v420, %v426
    %v438 = vadd.f32 %v350, %v428
    %v439 = vadd.f32 %v351, %v429
    %v440 = vadd.f32 %v352, %v430
    %v441 = vadd.f32 %v353, %v431
    %v442 = vadd.f32 %v354, %v432
    %v443 = vadd.f32 %v355, %v433
    %v444 = vadd.f32 %v356, %v434
    %v445 = vadd.f32 %v357, %v435
    %v446 = vadd.f32 %v358, %v436
    %v447 = vadd.f32 %v359, %v437
    %v448 = vld [vmem:[%s0 + $0xa] sm:$0xff]
    %v449 = vld [vmem:[%s0 + $0x12] sm:$0xff]
    %v450 = vld [vmem:[%s0 + $0x1a] sm:$0xff]
    %v451 = vld [vmem:[%s0 + $0x22] sm:$0xff]
    %v452 = vld [vmem:[%s0 + $0x2a] sm:$0xff]
    %v453 = vld [vmem:[%s0 + $0x32] sm:$0xff]
    %v454 = vld [vmem:[%s0 + $0x3a] sm:$0xff]
    %v455 = vld [vmem:[%s0 + $0x42] sm:$0xff]
    %v456 = vld [vmem:[%s0 + $0x4a] sm:$0xff]
    %v457 = vld [vmem:[%s0 + $0x52] sm:$0x3f]
    %s458 = scalar_lea.vmem [#allocation11], 3
    %v459 = vld [vmem:[%s458] sm:$0x1]
    %461 = vset.pattern.permute.xlu0 0
    %462 = vperm.xlu0 %461, %v448
    %v463 = vpop.permute.xlu0 %462
    %466 = vset.pattern.permute.xlu0 0
    %467 = vperm.xlu0 %466, %v449
    %v468 = vpop.permute.xlu0 %467
    %471 = vset.pattern.permute.xlu0 0
    %472 = vperm.xlu0 %471, %v450
    %v473 = vpop.permute.xlu0 %472
    %476 = vset.pattern.permute.xlu0 0
    %477 = vperm.xlu0 %476, %v451
    %v478 = vpop.permute.xlu0 %477
    %481 = vset.pattern.permute.xlu0 0
    %482 = vperm.xlu0 %481, %v452
    %v483 = vpop.permute.xlu0 %482
    %486 = vset.pattern.permute.xlu0 0
    %487 = vperm.xlu0 %486, %v453
    %v488 = vpop.permute.xlu0 %487
    %491 = vset.pattern.permute.xlu0 0
    %492 = vperm.xlu0 %491, %v454
    %v493 = vpop.permute.xlu0 %492
    %496 = vset.pattern.permute.xlu0 0
    %497 = vperm.xlu0 %496, %v455
    %v498 = vpop.permute.xlu0 %497
    %501 = vset.pattern.permute.xlu0 0
    %502 = vperm.xlu0 %501, %v456
    %v503 = vpop.permute.xlu0 %502
    %506 = vset.pattern.permute.xlu0 0
    %507 = vperm.xlu0 %506, %v457
    %v508 = vpop.permute.xlu0 %507
    %v511 = vlaneseq
    %v512 = vshrl.u32 %v511, 7
    %v513 = vsub.s32 0, %v512
    %v514 = vrot.slane %v459, %v513
    %v516 = vmul.f32 %v463, %v514
    %v517 = vmul.f32 %v468, %v514
    %v518 = vmul.f32 %v473, %v514
    %v519 = vmul.f32 %v478, %v514
    %v520 = vmul.f32 %v483, %v514
    %v521 = vmul.f32 %v488, %v514
    %v522 = vmul.f32 %v493, %v514
    %v523 = vmul.f32 %v498, %v514
    %v524 = vmul.f32 %v503, %v514
    %v525 = vmul.f32 %v508, %v514
    %v526 = vadd.f32 %v438, %v516
    %v527 = vadd.f32 %v439, %v517
    %v528 = vadd.f32 %v440, %v518
    %v529 = vadd.f32 %v441, %v519
    %v530 = vadd.f32 %v442, %v520
    %v531 = vadd.f32 %v443, %v521
    %v532 = vadd.f32 %v444, %v522
    %v533 = vadd.f32 %v445, %v523
    %v534 = vadd.f32 %v446, %v524
    %v535 = vadd.f32 %v447, %v525
    %v536 = vld [vmem:[%s0 + $0xb] sm:$0xff]
    %v537 = vld [vmem:[%s0 + $0x13] sm:$0xff]
    %v538 = vld [vmem:[%s0 + $0x1b] sm:$0xff]
    %v539 = vld [vmem:[%s0 + $0x23] sm:$0xff]
    %v540 = vld [vmem:[%s0 + $0x2b] sm:$0xff]
    %v541 = vld [vmem:[%s0 + $0x33] sm:$0xff]
    %v542 = vld [vmem:[%s0 + $0x3b] sm:$0xff]
    %v543 = vld [vmem:[%s0 + $0x43] sm:$0xff]
    %v544 = vld [vmem:[%s0 + $0x4b] sm:$0xff]
    %v545 = vld [vmem:[%s0 + $0x53] sm:$0x3f]
    %s546 = scalar_lea.vmem [#allocation11], 4
    %v547 = vld [vmem:[%s546] sm:$0x1]
    %549 = vset.pattern.permute.xlu0 0
    %550 = vperm.xlu0 %549, %v536
    %v551 = vpop.permute.xlu0 %550
    %554 = vset.pattern.permute.xlu0 0
    %555 = vperm.xlu0 %554, %v537
    %v556 = vpop.permute.xlu0 %555
    %559 = vset.pattern.permute.xlu0 0
    %560 = vperm.xlu0 %559, %v538
    %v561 = vpop.permute.xlu0 %560
    %564 = vset.pattern.permute.xlu0 0
    %565 = vperm.xlu0 %564, %v539
    %v566 = vpop.permute.xlu0 %565
    %569 = vset.pattern.permute.xlu0 0
    %570 = vperm.xlu0 %569, %v540
    %v571 = vpop.permute.xlu0 %570
    %574 = vset.pattern.permute.xlu0 0
    %575 = vperm.xlu0 %574, %v541
    %v576 = vpop.permute.xlu0 %575
    %579 = vset.pattern.permute.xlu0 0
    %580 = vperm.xlu0 %579, %v542
    %v581 = vpop.permute.xlu0 %580
    %584 = vset.pattern.permute.xlu0 0
    %585 = vperm.xlu0 %584, %v543
    %v586 = vpop.permute.xlu0 %585
    %589 = vset.pattern.permute.xlu0 0
    %590 = vperm.xlu0 %589, %v544
    %v591 = vpop.permute.xlu0 %590
    %594 = vset.pattern.permute.xlu0 0
    %595 = vperm.xlu0 %594, %v545
    %v596 = vpop.permute.xlu0 %595
    %v599 = vlaneseq
    %v600 = vshrl.u32 %v599, 7
    %v601 = vsub.s32 0, %v600
    %v602 = vrot.slane %v547, %v601
    %v604 = vmul.f32 %v551, %v602
    %v605 = vmul.f32 %v556, %v602
    %v606 = vmul.f32 %v561, %v602
    %v607 = vmul.f32 %v566, %v602
    %v608 = vmul.f32 %v571, %v602
    %v609 = vmul.f32 %v576, %v602
    %v610 = vmul.f32 %v581, %v602
    %v611 = vmul.f32 %v586, %v602
    %v612 = vmul.f32 %v591, %v602
    %v613 = vmul.f32 %v596, %v602
    %v614 = vadd.f32 %v526, %v604
    %v615 = vadd.f32 %v527, %v605
    %v616 = vadd.f32 %v528, %v606
    %v617 = vadd.f32 %v529, %v607
    %v618 = vadd.f32 %v530, %v608
    %v619 = vadd.f32 %v531, %v609
    %v620 = vadd.f32 %v532, %v610
    %v621 = vadd.f32 %v533, %v611
    %v622 = vadd.f32 %v534, %v612
    %v623 = vadd.f32 %v535, %v613
    %v624 = vld [vmem:[%s0 + $0xc] sm:$0xff]
    %v625 = vld [vmem:[%s0 + $0x14] sm:$0xff]
    %v626 = vld [vmem:[%s0 + $0x1c] sm:$0xff]
    %v627 = vld [vmem:[%s0 + $0x24] sm:$0xff]
    %v628 = vld [vmem:[%s0 + $0x2c] sm:$0xff]
    %v629 = vld [vmem:[%s0 + $0x34] sm:$0xff]
    %v630 = vld [vmem:[%s0 + $0x3c] sm:$0xff]
    %v631 = vld [vmem:[%s0 + $0x44] sm:$0xff]
    %v632 = vld [vmem:[%s0 + $0x4c] sm:$0xff]
    %v633 = vld [vmem:[%s0 + $0x54] sm:$0x3f]
    %s634 = scalar_lea.vmem [#allocation11], 5
    %v635 = vld [vmem:[%s634] sm:$0x1]
    %637 = vset.pattern.permute.xlu0 0
    %638 = vperm.xlu0 %637, %v624
    %v639 = vpop.permute.xlu0 %638
    %642 = vset.pattern.permute.xlu0 0
    %643 = vperm.xlu0 %642, %v625
    %v644 = vpop.permute.xlu0 %643
    %647 = vset.pattern.permute.xlu0 0
    %648 = vperm.xlu0 %647, %v626
    %v649 = vpop.permute.xlu0 %648
    %652 = vset.pattern.permute.xlu0 0
    %653 = vperm.xlu0 %652, %v627
    %v654 = vpop.permute.xlu0 %653
    %657 = vset.pattern.permute.xlu0 0
    %658 = vperm.xlu0 %657, %v628
    %v659 = vpop.permute.xlu0 %658
    %662 = vset.pattern.permute.xlu0 0
    %663 = vperm.xlu0 %662, %v629
    %v664 = vpop.permute.xlu0 %663
    %667 = vset.pattern.permute.xlu0 0
    %668 = vperm.xlu0 %667, %v630
    %v669 = vpop.permute.xlu0 %668
    %672 = vset.pattern.permute.xlu0 0
    %673 = vperm.xlu0 %672, %v631
    %v674 = vpop.permute.xlu0 %673
    %677 = vset.pattern.permute.xlu0 0
    %678 = vperm.xlu0 %677, %v632
    %v679 = vpop.permute.xlu0 %678
    %682 = vset.pattern.permute.xlu0 0
    %683 = vperm.xlu0 %682, %v633
    %v684 = vpop.permute.xlu0 %683
    %v687 = vlaneseq
    %v688 = vshrl.u32 %v687, 7
    %v689 = vsub.s32 0, %v688
    %v690 = vrot.slane %v635, %v689
    %v692 = vmul.f32 %v639, %v690
    %v693 = vmul.f32 %v644, %v690
    %v694 = vmul.f32 %v649, %v690
    %v695 = vmul.f32 %v654, %v690
    %v696 = vmul.f32 %v659, %v690
    %v697 = vmul.f32 %v664, %v690
    %v698 = vmul.f32 %v669, %v690
    %v699 = vmul.f32 %v674, %v690
    %v700 = vmul.f32 %v679, %v690
    %v701 = vmul.f32 %v684, %v690
    %v702 = vadd.f32 %v614, %v692
    %v703 = vadd.f32 %v615, %v693
    %v704 = vadd.f32 %v616, %v694
    %v705 = vadd.f32 %v617, %v695
    %v706 = vadd.f32 %v618, %v696
    %v707 = vadd.f32 %v619, %v697
    %v708 = vadd.f32 %v620, %v698
    %v709 = vadd.f32 %v621, %v699
    %v710 = vadd.f32 %v622, %v700
    %v711 = vadd.f32 %v623, %v701
    %v712 = vld [vmem:[%s0 + $0x14] sm:$0xff]
    %v713 = vld [vmem:[%s0 + $0x1c] sm:$0xff]
    %v714 = vld [vmem:[%s0 + $0x24] sm:$0xff]
    %v715 = vld [vmem:[%s0 + $0x2c] sm:$0xff]
    %v716 = vld [vmem:[%s0 + $0x34] sm:$0xff]
    %v717 = vld [vmem:[%s0 + $0x3c] sm:$0xff]
    %v718 = vld [vmem:[%s0 + $0x44] sm:$0xff]
    %v719 = vld [vmem:[%s0 + $0x4c] sm:$0xff]
    %v720 = vld [vmem:[%s0 + $0x54] sm:$0xff]
    %v721 = vld [vmem:[%s0 + $0x5c] sm:$0x3f]
    %s722 = scalar_lea.vmem [#allocation11], 6
    %v723 = vld [vmem:[%s722] sm:$0x1]
    %725 = vset.pattern.permute.xlu0 0
    %726 = vperm.xlu0 %725, %v712
    %v727 = vpop.permute.xlu0 %726
    %730 = vset.pattern.permute.xlu0 0
    %731 = vperm.xlu0 %730, %v713
    %v732 = vpop.permute.xlu0 %731
    %735 = vset.pattern.permute.xlu0 0
    %736 = vperm.xlu0 %735, %v714
    %v737 = vpop.permute.xlu0 %736
    %740 = vset.pattern.permute.xlu0 0
    %741 = vperm.xlu0 %740, %v715
    %v742 = vpop.permute.xlu0 %741
    %745 = vset.pattern.permute.xlu0 0
    %746 = vperm.xlu0 %745, %v716
    %v747 = vpop.permute.xlu0 %746
    %750 = vset.pattern.permute.xlu0 0
    %751 = vperm.xlu0 %750, %v717
    %v752 = vpop.permute.xlu0 %751
    %755 = vset.pattern.permute.xlu0 0
    %756 = vperm.xlu0 %755, %v718
    %v757 = vpop.permute.xlu0 %756
    %760 = vset.pattern.permute.xlu0 0
    %761 = vperm.xlu0 %760, %v719
    %v762 = vpop.permute.xlu0 %761
    %765 = vset.pattern.permute.xlu0 0
    %766 = vperm.xlu0 %765, %v720
    %v767 = vpop.permute.xlu0 %766
    %770 = vset.pattern.permute.xlu0 0
    %771 = vperm.xlu0 %770, %v721
    %v772 = vpop.permute.xlu0 %771
    %v775 = vlaneseq
    %v776 = vshrl.u32 %v775, 7
    %v777 = vsub.s32 0, %v776
    %v778 = vrot.slane %v723, %v777
    %v780 = vmul.f32 %v727, %v778
    %v781 = vmul.f32 %v732, %v778
    %v782 = vmul.f32 %v737, %v778
    %v783 = vmul.f32 %v742, %v778
    %v784 = vmul.f32 %v747, %v778
    %v785 = vmul.f32 %v752, %v778
    %v786 = vmul.f32 %v757, %v778
    %v787 = vmul.f32 %v762, %v778
    %v788 = vmul.f32 %v767, %v778
    %v789 = vmul.f32 %v772, %v778
    %v790 = vadd.f32 %v702, %v780
    %v791 = vadd.f32 %v703, %v781
    %v792 = vadd.f32 %v704, %v782
    %v793 = vadd.f32 %v705, %v783
    %v794 = vadd.f32 %v706, %v784
    %v795 = vadd.f32 %v707, %v785
    %v796 = vadd.f32 %v708, %v786
    %v797 = vadd.f32 %v709, %v787
    %v798 = vadd.f32 %v710, %v788
    %v799 = vadd.f32 %v711, %v789
    %v800 = vld [vmem:[%s0 + $0x15] sm:$0xff]
    %v801 = vld [vmem:[%s0 + $0x1d] sm:$0xff]
    %v802 = vld [vmem:[%s0 + $0x25] sm:$0xff]
    %v803 = vld [vmem:[%s0 + $0x2d] sm:$0xff]
    %v804 = vld [vmem:[%s0 + $0x35] sm:$0xff]
    %v805 = vld [vmem:[%s0 + $0x3d] sm:$0xff]
    %v806 = vld [vmem:[%s0 + $0x45] sm:$0xff]
    %v807 = vld [vmem:[%s0 + $0x4d] sm:$0xff]
    %v808 = vld [vmem:[%s0 + $0x55] sm:$0xff]
    %v809 = vld [vmem:[%s0 + $0x5d] sm:$0x3f]
    %s810 = scalar_lea.vmem [#allocation11], 7
    %v811 = vld [vmem:[%s810] sm:$0x1]
    %813 = vset.pattern.permute.xlu0 0
    %814 = vperm.xlu0 %813, %v800
    %v815 = vpop.permute.xlu0 %814
    %818 = vset.pattern.permute.xlu0 0
    %819 = vperm.xlu0 %818, %v801
    %v820 = vpop.permute.xlu0 %819
    %823 = vset.pattern.permute.xlu0 0
    %824 = vperm.xlu0 %823, %v802
    %v825 = vpop.permute.xlu0 %824
    %828 = vset.pattern.permute.xlu0 0
    %829 = vperm.xlu0 %828, %v803
    %v830 = vpop.permute.xlu0 %829
    %833 = vset.pattern.permute.xlu0 0
    %834 = vperm.xlu0 %833, %v804
    %v835 = vpop.permute.xlu0 %834
    %838 = vset.pattern.permute.xlu0 0
    %839 = vperm.xlu0 %838, %v805
    %v840 = vpop.permute.xlu0 %839
    %843 = vset.pattern.permute.xlu0 0
    %844 = vperm.xlu0 %843, %v806
    %v845 = vpop.permute.xlu0 %844
    %848 = vset.pattern.permute.xlu0 0
    %849 = vperm.xlu0 %848, %v807
    %v850 = vpop.permute.xlu0 %849
    %853 = vset.pattern.permute.xlu0 0
    %854 = vperm.xlu0 %853, %v808
    %v855 = vpop.permute.xlu0 %854
    %858 = vset.pattern.permute.xlu0 0
    %859 = vperm.xlu0 %858, %v809
    %v860 = vpop.permute.xlu0 %859
    %v863 = vlaneseq
    %v864 = vshrl.u32 %v863, 7
    %v865 = vsub.s32 0, %v864
    %v866 = vrot.slane %v811, %v865
    %v868 = vmul.f32 %v815, %v866
    %v869 = vmul.f32 %v820, %v866
    %v870 = vmul.f32 %v825, %v866
    %v871 = vmul.f32 %v830, %v866
    %v872 = vmul.f32 %v835, %v866
    %v873 = vmul.f32 %v840, %v866
    %v874 = vmul.f32 %v845, %v866
    %v875 = vmul.f32 %v850, %v866
    %v876 = vmul.f32 %v855, %v866
    %v877 = vmul.f32 %v860, %v866
    %v878 = vadd.f32 %v790, %v868
    %v879 = vadd.f32 %v791, %v869
    %v880 = vadd.f32 %v792, %v870
    %v881 = vadd.f32 %v793, %v871
    %v882 = vadd.f32 %v794, %v872
    %v883 = vadd.f32 %v795, %v873
    %v884 = vadd.f32 %v796, %v874
    %v885 = vadd.f32 %v797, %v875
    %v886 = vadd.f32 %v798, %v876
    %v887 = vadd.f32 %v799, %v877
    %v888 = vld [vmem:[%s0 + $0x16] sm:$0xff]
    %v889 = vld [vmem:[%s0 + $0x1e] sm:$0xff]
    %v890 = vld [vmem:[%s0 + $0x26] sm:$0xff]
    %v891 = vld [vmem:[%s0 + $0x2e] sm:$0xff]
    %v892 = vld [vmem:[%s0 + $0x36] sm:$0xff]
    %v893 = vld [vmem:[%s0 + $0x3e] sm:$0xff]
    %v894 = vld [vmem:[%s0 + $0x46] sm:$0xff]
    %v895 = vld [vmem:[%s0 + $0x4e] sm:$0xff]
    %v896 = vld [vmem:[%s0 + $0x56] sm:$0xff]
    %v897 = vld [vmem:[%s0 + $0x5e] sm:$0x3f]
    %s898 = scalar_lea.vmem [#allocation11], 8
    %v899 = vld [vmem:[%s898] sm:$0x1]
    %901 = vset.pattern.permute.xlu0 0
    %902 = vperm.xlu0 %901, %v888
    %v903 = vpop.permute.xlu0 %902
    %906 = vset.pattern.permute.xlu0 0
    %907 = vperm.xlu0 %906, %v889
    %v908 = vpop.permute.xlu0 %907
    %911 = vset.pattern.permute.xlu0 0
    %912 = vperm.xlu0 %911, %v890
    %v913 = vpop.permute.xlu0 %912
    %916 = vset.pattern.permute.xlu0 0
    %917 = vperm.xlu0 %916, %v891
    %v918 = vpop.permute.xlu0 %917
    %921 = vset.pattern.permute.xlu0 0
    %922 = vperm.xlu0 %921, %v892
    %v923 = vpop.permute.xlu0 %922
    %926 = vset.pattern.permute.xlu0 0
    %927 = vperm.xlu0 %926, %v893
    %v928 = vpop.permute.xlu0 %927
    %931 = vset.pattern.permute.xlu0 0
    %932 = vperm.xlu0 %931, %v894
    %v933 = vpop.permute.xlu0 %932
    %936 = vset.pattern.permute.xlu0 0
    %937 = vperm.xlu0 %936, %v895
    %v938 = vpop.permute.xlu0 %937
    %941 = vset.pattern.permute.xlu0 0
    %942 = vperm.xlu0 %941, %v896
    %v943 = vpop.permute.xlu0 %942
    %946 = vset.pattern.permute.xlu0 0
    %947 = vperm.xlu0 %946, %v897
    %v948 = vpop.permute.xlu0 %947
    %v951 = vlaneseq
    %v952 = vshrl.u32 %v951, 7
    %v953 = vsub.s32 0, %v952
    %v954 = vrot.slane %v899, %v953
    %v956 = vmul.f32 %v903, %v954
    %v957 = vmul.f32 %v908, %v954
    %v958 = vmul.f32 %v913, %v954
    %v959 = vmul.f32 %v918, %v954
    %v960 = vmul.f32 %v923, %v954
    %v961 = vmul.f32 %v928, %v954
    %v962 = vmul.f32 %v933, %v954
    %v963 = vmul.f32 %v938, %v954
    %v964 = vmul.f32 %v943, %v954
    %v965 = vmul.f32 %v948, %v954
    %v966 = vadd.f32 %v878, %v956
    %v967 = vadd.f32 %v879, %v957
    %v968 = vadd.f32 %v880, %v958
    %v969 = vadd.f32 %v881, %v959
    %v970 = vadd.f32 %v882, %v960
    %v971 = vadd.f32 %v883, %v961
    %v972 = vadd.f32 %v884, %v962
    %v973 = vadd.f32 %v885, %v963
    %v974 = vadd.f32 %v886, %v964
    %v975 = vadd.f32 %v887, %v965
    %v976 = vld [vmem:[%s6] sm:$0x1]
    %v978 = vlaneseq
    %v979 = vshrl.u32 %v978, 7
    %v980 = vsub.s32 0, %v979
    %v981 = vrot.slane %v976, %v980
    %v983 = vadd.f32 %v966, %v981
    %v984 = vadd.f32 %v967, %v981
    %v985 = vadd.f32 %v968, %v981
    %v986 = vadd.f32 %v969, %v981
    %v987 = vadd.f32 %v970, %v981
    %v988 = vadd.f32 %v971, %v981
    %v989 = vadd.f32 %v972, %v981
    %v990 = vadd.f32 %v973, %v981
    %v991 = vadd.f32 %v974, %v981
    %v992 = vadd.f32 %v975, %v981
    %v993 = vtanh.pop %v983
    %v994 = vtanh.pop %v984
    %v995 = vtanh.pop %v985
    %v996 = vtanh.pop %v986
    %v997 = vtanh.pop %v987
    %v998 = vtanh.pop %v988
    %v999 = vtanh.pop %v989
    %v1000 = vtanh.pop %v990
    %v1001 = vtanh.pop %v991
    %v1002 = vtanh.pop %v992
    %1004 = vset.pattern.permute.xlu0 0
    %1005 = vperm.xlu0 %1004, %v175
    %v1006 = vpop.permute.xlu0 %1005
    %1009 = vset.pattern.permute.xlu0 0
    %1010 = vperm.xlu0 %1009, %v176
    %v1011 = vpop.permute.xlu0 %1010
    %1014 = vset.pattern.permute.xlu0 0
    %1015 = vperm.xlu0 %1014, %v177
    %v1016 = vpop.permute.xlu0 %1015
    %1019 = vset.pattern.permute.xlu0 0
    %1020 = vperm.xlu0 %1019, %v178
    %v1021 = vpop.permute.xlu0 %1020
    %1024 = vset.pattern.permute.xlu0 0
    %1025 = vperm.xlu0 %1024, %v179
    %v1026 = vpop.permute.xlu0 %1025
    %1029 = vset.pattern.permute.xlu0 0
    %1030 = vperm.xlu0 %1029, %v180
    %v1031 = vpop.permute.xlu0 %1030
    %1034 = vset.pattern.permute.xlu0 0
    %1035 = vperm.xlu0 %1034, %v181
    %v1036 = vpop.permute.xlu0 %1035
    %1039 = vset.pattern.permute.xlu0 0
    %1040 = vperm.xlu0 %1039, %v182
    %v1041 = vpop.permute.xlu0 %1040
    %1044 = vset.pattern.permute.xlu0 0
    %1045 = vperm.xlu0 %1044, %v183
    %v1046 = vpop.permute.xlu0 %1045
    %1049 = vset.pattern.permute.xlu0 0
    %1050 = vperm.xlu0 %1049, %v184
    %v1051 = vpop.permute.xlu0 %1050
    %v1053 = vmul.f32 %v993, %v1006
    %v1054 = vmul.f32 %v994, %v1011
    %v1055 = vmul.f32 %v995, %v1016
    %v1056 = vmul.f32 %v996, %v1021
    %v1057 = vmul.f32 %v997, %v1026
    %v1058 = vmul.f32 %v998, %v1031
    %v1059 = vmul.f32 %v999, %v1036
    %v1060 = vmul.f32 %v1000, %v1041
    %v1061 = vmul.f32 %v1001, %v1046
    %v1062 = vmul.f32 %v1002, %v1051
    %1063 = vst.msk [vmem:[#allocation2 + $0xb] sm:$0xff] %vm130, %v1053
    %1064 = vst.msk [vmem:[#allocation2 + $0x13] sm:$0xff] %vm130, %v1054
    %1065 = vst.msk [vmem:[#allocation2 + $0x1b] sm:$0xff] %vm130, %v1055
    %1066 = vst.msk [vmem:[#allocation2 + $0x23] sm:$0xff] %vm130, %v1056
    %1067 = vst.msk [vmem:[#allocation2 + $0x2b] sm:$0xff] %vm130, %v1057
    %1068 = vst.msk [vmem:[#allocation2 + $0x33] sm:$0xff] %vm130, %v1058
    %1069 = vst.msk [vmem:[#allocation2 + $0x3b] sm:$0xff] %vm130, %v1059
    %1070 = vst.msk [vmem:[#allocation2 + $0x43] sm:$0xff] %vm130, %v1060
    %1071 = vst.msk [vmem:[#allocation2 + $0x4b] sm:$0xff] %vm130, %v1061
    %vm1072 = vcmask 259072
    %1073 = vst.msk [vmem:[#allocation2 + $0x53] sm:$0x3f] %vm1072, %v1062
    %v1074 = vld [vmem:[#allocation2] sm:$0xff]
    %v1075 = vld [vmem:[#allocation2 + $0x8] sm:$0xff]
    %v1076 = vld [vmem:[#allocation2 + $0x10] sm:$0xff]
    %v1077 = vld [vmem:[#allocation2 + $0x18] sm:$0xff]
    %v1078 = vld [vmem:[#allocation2 + $0x20] sm:$0xff]
    %v1079 = vld [vmem:[#allocation2 + $0x28] sm:$0xff]
    %v1080 = vld [vmem:[#allocation2 + $0x30] sm:$0xff]
    %v1081 = vld [vmem:[#allocation2 + $0x38] sm:$0xff]
    %v1082 = vld [vmem:[#allocation2 + $0x40] sm:$0xff]
    %v1083 = vld [vmem:[#allocation2 + $0x48] sm:$0x3f]
    %v1084 = vld [vmem:[%s7] sm:$0xff]
    %v1085 = vld [vmem:[%s7 + $0x8] sm:$0xff]
    %v1086 = vld [vmem:[%s7 + $0x10] sm:$0xff]
    %v1087 = vld [vmem:[%s7 + $0x18] sm:$0xff]
    %v1088 = vld [vmem:[#allocation2 + $0x1] sm:$0xff]
    %v1089 = vld [vmem:[#allocation2 + $0x9] sm:$0xff]
    %v1090 = vld [vmem:[#allocation2 + $0x11] sm:$0xff]
    %v1091 = vld [vmem:[#allocation2 + $0x19] sm:$0xff]
    %v1092 = vld [vmem:[#allocation2 + $0x21] sm:$0xff]
    %v1093 = vld [vmem:[#allocation2 + $0x29] sm:$0xff]
    %v1094 = vld [vmem:[#allocation2 + $0x31] sm:$0xff]
    %v1095 = vld [vmem:[#allocation2 + $0x39] sm:$0xff]
    %v1096 = vld [vmem:[#allocation2 + $0x41] sm:$0xff]
    %v1097 = vld [vmem:[#allocation2 + $0x49] sm:$0x3f]
    %s1098 = scalar_lea.vmem %s7, 32
    %v1099 = vld [vmem:[%s1098] sm:$0xff]
    %v1100 = vld [vmem:[%s1098 + $0x8] sm:$0xff]
    %v1101 = vld [vmem:[%s1098 + $0x10] sm:$0xff]
    %v1102 = vld [vmem:[%s1098 + $0x18] sm:$0xff]
    %v1104 = vsel %vm130, %v1088, 0
    %v1107 = vsel %vm130, %v1089, 0
    %v1110 = vsel %vm130, %v1090, 0
    %v1113 = vsel %vm130, %v1091, 0
    %v1116 = vsel %vm130, %v1092, 0
    %v1119 = vsel %vm130, %v1093, 0
    %v1122 = vsel %vm130, %v1094, 0
    %v1125 = vsel %vm130, %v1095, 0
    %v1128 = vsel %vm130, %v1096, 0
    %v1131 = vsel %vm130, %v1097, 0
    %1133 = vmatprep.subr.mxu0 0.0
    %1134 = vmatpush1.msra.mxu0 %v1099
    %1135 = vmatprep.subr.mxu0 0.0
    %1136 = vmatpush1.msra.mxu0 %v1100
    %1137 = vmatprep.subr.mxu0 0.0
    %1138 = vmatpush1.msra.mxu0 %v1101
    %1139 = vmatprep.subr.mxu0 0.0
    %1140 = vmatpush1.msra.mxu0 %v1102
    %1141 = vmatprep.subr.mxu0 0.0
    %1142 = vmatpush1.msra.mxu0 0.0
    %1143 = vmatprep.subr.mxu0 0.0
    %1144 = vmatpush1.msra.mxu0 0.0
    %1145 = vmatprep.subr.mxu0 0.0
    %1146 = vmatpush1.msra.mxu0 0.0
    %1147 = vmatprep.subr.mxu0 0.0
    %1148 = vmatpush1.msra.mxu0 0.0
    %1149 = vmatprep.subr.mxu0 0.0
    %1150 = vmatpush1.msra.mxu0 0.0
    %1151 = vmatprep.subr.mxu0 0.0
    %1152 = vmatpush1.msra.mxu0 0.0
    %1153 = vmatprep.subr.mxu0 0.0
    %1154 = vmatpush1.msra.mxu0 0.0
    %1155 = vmatprep.subr.mxu0 0.0
    %1156 = vmatpush1.msra.mxu0 0.0
    %1157 = vmatprep.subr.mxu0 0.0
    %1158 = vmatpush1.msra.mxu0 0.0
    %1159 = vmatprep.subr.mxu0 0.0
    %1160 = vmatpush1.msra.mxu0 0.0
    %1161 = vmatprep.subr.mxu0 0.0
    %1162 = vmatpush1.msra.mxu0 0.0
    %1163 = vmatprep.subr.mxu0 0.0
    %1164 = vmatpush1.msra.mxu0 0.0
    %1165 = vmatprep.subr.mxu0 0.0
    %1166 = vmatpush1.msra.mxu0 0.0
    %1167 = vmatprep.subr.mxu0 0.0
    %1168 = vmatpush1.msra.mxu0 0.0
    %1169 = vmatprep.subr.mxu0 0.0
    %1170 = vmatpush1.msra.mxu0 0.0
    %1171 = vmatprep.subr.mxu0 0.0
    %1172 = vmatpush1.msra.mxu0 0.0
    %1173 = vmatprep.subr.mxu0 0.0
    %1174 = vmatpush1.msra.mxu0 0.0
    %1175 = vmatprep.subr.mxu0 0.0
    %1176 = vmatpush1.msra.mxu0 0.0
    %1177 = vmatprep.subr.mxu0 0.0
    %1178 = vmatpush1.msra.mxu0 0.0
    %1179 = vmatprep.subr.mxu0 0.0
    %1180 = vmatpush1.msra.mxu0 0.0
    %1181 = vmatprep.subr.mxu0 0.0
    %1182 = vmatpush1.msra.mxu0 0.0
    %1183 = vmatprep.subr.mxu0 0.0
    %1184 = vmatpush1.msra.mxu0 0.0
    %1185 = vmatprep.subr.mxu0 0.0
    %1186 = vmatpush1.msra.mxu0 0.0
    %1187 = vmatprep.subr.mxu0 0.0
    %1188 = vmatpush1.msra.mxu0 0.0
    %1189 = vmatprep.subr.mxu0 0.0
    %1190 = vmatpush1.msra.mxu0 0.0
    %1191 = vmatprep.subr.mxu0 0.0
    %1192 = vmatpush1.msra.mxu0 0.0
    %1193 = vmatprep.subr.mxu0 0.0
    %1194 = vmatpush1.msra.mxu0 0.0
    %1195 = vmatprep.subr.mxu0 0.0
    %1196 = vmatpush1.msra.mxu0 0.0
    %1197 = vmatprep.mubr.f32.mxu0 0.0
    %1198 = vmatmul.mubr.f32.gmra.mrb[0].mxu0 %v1104
    %v1199 = vpop.f32.mrb[0].mxu0
    %v1200 = vadd.f32 0.0, %v1199
    %v1201 = vpop.f32.mrb[0].mxu0
    %1202 = vmatprep.mubr.f32.mxu0 0.0
    %1203 = vmatmul.mubr.f32.gmra.mrb[0].mxu0 %v1107
    %v1204 = vpop.f32.mrb[0].mxu0
    %v1205 = vadd.f32 0.0, %v1204
    %v1206 = vpop.f32.mrb[0].mxu0
    %1207 = vmatprep.mubr.f32.mxu0 0.0
    %1208 = vmatmul.mubr.f32.gmra.mrb[0].mxu0 %v1110
    %v1209 = vpop.f32.mrb[0].mxu0
    %v1210 = vadd.f32 0.0, %v1209
    %v1211 = vpop.f32.mrb[0].mxu0
    %1212 = vmatprep.mubr.f32.mxu0 0.0
    %1213 = vmatmul.mubr.f32.gmra.mrb[0].mxu0 %v1113
    %v1214 = vpop.f32.mrb[0].mxu0
    %v1215 = vadd.f32 0.0, %v1214
    %v1216 = vpop.f32.mrb[0].mxu0
    %1217 = vmatprep.mubr.f32.mxu0 0.0
    %1218 = vmatmul.mubr.f32.gmra.mrb[0].mxu0 %v1116
    %v1219 = vpop.f32.mrb[0].mxu0
    %v1220 = vadd.f32 0.0, %v1219
    %v1221 = vpop.f32.mrb[0].mxu0
    %1222 = vmatprep.mubr.f32.mxu0 0.0
    %1223 = vmatmul.mubr.f32.gmra.mrb[0].mxu0 %v1119
    %v1224 = vpop.f32.mrb[0].mxu0
    %v1225 = vadd.f32 0.0, %v1224
    %v1226 = vpop.f32.mrb[0].mxu0
    %1227 = vmatprep.mubr.f32.mxu0 0.0
    %1228 = vmatmul.mubr.f32.gmra.mrb[0].mxu0 %v1122
    %v1229 = vpop.f32.mrb[0].mxu0
    %v1230 = vadd.f32 0.0, %v1229
    %v1231 = vpop.f32.mrb[0].mxu0
    %1232 = vmatprep.mubr.f32.mxu0 0.0
    %1233 = vmatmul.mubr.f32.gmra.mrb[0].mxu0 %v1125
    %v1234 = vpop.f32.mrb[0].mxu0
    %v1235 = vadd.f32 0.0, %v1234
    %v1236 = vpop.f32.mrb[0].mxu0
    %1237 = vmatprep.mubr.f32.mxu0 0.0
    %1238 = vmatmul.mubr.f32.gmra.mrb[0].mxu0 %v1128
    %v1239 = vpop.f32.mrb[0].mxu0
    %v1240 = vadd.f32 0.0, %v1239
    %v1241 = vpop.f32.mrb[0].mxu0
    %1242 = vmatprep.mubr.f32.mxu0 0.0
    %1243 = vmatmul.mubr.f32.gmra.mrb[0].mxu0 %v1131
    %v1244 = vpop.f32.mrb[0].mxu0
    %v1245 = vadd.f32 0.0, %v1244
    %v1246 = vpop.f32.mrb[0].mxu0
    %1247 = vdwg.mxu0
    %v1249 = vsel %vm130, %v1074, 0
    %v1252 = vsel %vm130, %v1075, 0
    %v1255 = vsel %vm130, %v1076, 0
    %v1258 = vsel %vm130, %v1077, 0
    %v1261 = vsel %vm130, %v1078, 0
    %v1264 = vsel %vm130, %v1079, 0
    %v1267 = vsel %vm130, %v1080, 0
    %v1270 = vsel %vm130, %v1081, 0
    %v1273 = vsel %vm130, %v1082, 0
    %v1276 = vsel %vm130, %v1083, 0
    %1278 = vmatprep.subr.mxu0 0.0
    %1279 = vmatpush1.msra.mxu0 %v1084
    %1280 = vmatprep.subr.mxu0 0.0
    %1281 = vmatpush1.msra.mxu0 %v1085
    %1282 = vmatprep.subr.mxu0 0.0
    %1283 = vmatpush1.msra.mxu0 %v1086
    %1284 = vmatprep.subr.mxu0 0.0
    %1285 = vmatpush1.msra.mxu0 %v1087
    %1286 = vmatprep.subr.mxu0 0.0
    %1287 = vmatpush1.msra.mxu0 0.0
    %1288 = vmatprep.subr.mxu0 0.0
    %1289 = vmatpush1.msra.mxu0 0.0
    %1290 = vmatprep.subr.mxu0 0.0
    %1291 = vmatpush1.msra.mxu0 0.0
    %1292 = vmatprep.subr.mxu0 0.0
    %1293 = vmatpush1.msra.mxu0 0.0
    %1294 = vmatprep.subr.mxu0 0.0
    %1295 = vmatpush1.msra.mxu0 0.0
    %1296 = vmatprep.subr.mxu0 0.0
    %1297 = vmatpush1.msra.mxu0 0.0
    %1298 = vmatprep.subr.mxu0 0.0
    %1299 = vmatpush1.msra.mxu0 0.0
    %1300 = vmatprep.subr.mxu0 0.0
    %1301 = vmatpush1.msra.mxu0 0.0
    %1302 = vmatprep.subr.mxu0 0.0
    %1303 = vmatpush1.msra.mxu0 0.0
    %1304 = vmatprep.subr.mxu0 0.0
    %1305 = vmatpush1.msra.mxu0 0.0
    %1306 = vmatprep.subr.mxu0 0.0
    %1307 = vmatpush1.msra.mxu0 0.0
    %1308 = vmatprep.subr.mxu0 0.0
    %1309 = vmatpush1.msra.mxu0 0.0
    %1310 = vmatprep.subr.mxu0 0.0
    %1311 = vmatpush1.msra.mxu0 0.0
    %1312 = vmatprep.subr.mxu0 0.0
    %1313 = vmatpush1.msra.mxu0 0.0
    %1314 = vmatprep.subr.mxu0 0.0
    %1315 = vmatpush1.msra.mxu0 0.0
    %1316 = vmatprep.subr.mxu0 0.0
    %1317 = vmatpush1.msra.mxu0 0.0
    %1318 = vmatprep.subr.mxu0 0.0
    %1319 = vmatpush1.msra.mxu0 0.0
    %1320 = vmatprep.subr.mxu0 0.0
    %1321 = vmatpush1.msra.mxu0 0.0
    %1322 = vmatprep.subr.mxu0 0.0
    %1323 = vmatpush1.msra.mxu0 0.0
    %1324 = vmatprep.subr.mxu0 0.0
    %1325 = vmatpush1.msra.mxu0 0.0
    %1326 = vmatprep.subr.mxu0 0.0
    %1327 = vmatpush1.msra.mxu0 0.0
    %1328 = vmatprep.subr.mxu0 0.0
    %1329 = vmatpush1.msra.mxu0 0.0
    %1330 = vmatprep.subr.mxu0 0.0
    %1331 = vmatpush1.msra.mxu0 0.0
    %1332 = vmatprep.subr.mxu0 0.0
    %1333 = vmatpush1.msra.mxu0 0.0
    %1334 = vmatprep.subr.mxu0 0.0
    %1335 = vmatpush1.msra.mxu0 0.0
    %1336 = vmatprep.subr.mxu0 0.0
    %1337 = vmatpush1.msra.mxu0 0.0
    %1338 = vmatprep.subr.mxu0 0.0
    %1339 = vmatpush1.msra.mxu0 0.0
    %1340 = vmatprep.subr.mxu0 0.0
    %1341 = vmatpush1.msra.mxu0 0.0
    %1342 = vmatprep.mubr.f32.mxu0 0.0
    %1343 = vmatmul.mubr.f32.gmra.mrb[0].mxu0 %v1249
    %v1344 = vpop.f32.mrb[0].mxu0
    %v1345 = vadd.f32 %v1200, %v1344
    %v1346 = vpop.f32.mrb[0].mxu0
    %1347 = vmatprep.mubr.f32.mxu0 0.0
    %1348 = vmatmul.mubr.f32.gmra.mrb[0].mxu0 %v1252
    %v1349 = vpop.f32.mrb[0].mxu0
    %v1350 = vadd.f32 %v1205, %v1349
    %v1351 = vpop.f32.mrb[0].mxu0
    %1352 = vmatprep.mubr.f32.mxu0 0.0
    %1353 = vmatmul.mubr.f32.gmra.mrb[0].mxu0 %v1255
    %v1354 = vpop.f32.mrb[0].mxu0
    %v1355 = vadd.f32 %v1210, %v1354
    %v1356 = vpop.f32.mrb[0].mxu0
    %1357 = vmatprep.mubr.f32.mxu0 0.0
    %1358 = vmatmul.mubr.f32.gmra.mrb[0].mxu0 %v1258
    %v1359 = vpop.f32.mrb[0].mxu0
    %v1360 = vadd.f32 %v1215, %v1359
    %v1361 = vpop.f32.mrb[0].mxu0
    %1362 = vmatprep.mubr.f32.mxu0 0.0
    %1363 = vmatmul.mubr.f32.gmra.mrb[0].mxu0 %v1261
    %v1364 = vpop.f32.mrb[0].mxu0
    %v1365 = vadd.f32 %v1220, %v1364
    %v1366 = vpop.f32.mrb[0].mxu0
    %1367 = vmatprep.mubr.f32.mxu0 0.0
    %1368 = vmatmul.mubr.f32.gmra.mrb[0].mxu0 %v1264
    %v1369 = vpop.f32.mrb[0].mxu0
    %v1370 = vadd.f32 %v1225, %v1369
    %v1371 = vpop.f32.mrb[0].mxu0
    %1372 = vmatprep.mubr.f32.mxu0 0.0
    %1373 = vmatmul.mubr.f32.gmra.mrb[0].mxu0 %v1267
    %v1374 = vpop.f32.mrb[0].mxu0
    %v1375 = vadd.f32 %v1230, %v1374
    %v1376 = vpop.f32.mrb[0].mxu0
    %1377 = vmatprep.mubr.f32.mxu0 0.0
    %1378 = vmatmul.mubr.f32.gmra.mrb[0].mxu0 %v1270
    %v1379 = vpop.f32.mrb[0].mxu0
    %v1380 = vadd.f32 %v1235, %v1379
    %v1381 = vpop.f32.mrb[0].mxu0
    %1382 = vmatprep.mubr.f32.mxu0 0.0
    %1383 = vmatmul.mubr.f32.gmra.mrb[0].mxu0 %v1273
    %v1384 = vpop.f32.mrb[0].mxu0
    %v1385 = vadd.f32 %v1240, %v1384
    %v1386 = vpop.f32.mrb[0].mxu0
    %1387 = vmatprep.mubr.f32.mxu0 0.0
    %1388 = vmatmul.mubr.f32.gmra.mrb[0].mxu0 %v1276
    %v1389 = vpop.f32.mrb[0].mxu0
    %v1390 = vadd.f32 %v1245, %v1389
    %v1391 = vpop.f32.mrb[0].mxu0
    %1392 = vdwg.mxu0
    %v1393 = vld [vmem:[#allocation2 + $0x2] sm:$0xff]
    %v1394 = vld [vmem:[#allocation2 + $0xa] sm:$0xff]
    %v1395 = vld [vmem:[#allocation2 + $0x12] sm:$0xff]
    %v1396 = vld [vmem:[#allocation2 + $0x1a] sm:$0xff]
    %v1397 = vld [vmem:[#allocation2 + $0x22] sm:$0xff]
    %v1398 = vld [vmem:[#allocation2 + $0x2a] sm:$0xff]
    %v1399 = vld [vmem:[#allocation2 + $0x32] sm:$0xff]
    %v1400 = vld [vmem:[#allocation2 + $0x3a] sm:$0xff]
    %v1401 = vld [vmem:[#allocation2 + $0x42] sm:$0xff]
    %v1402 = vld [vmem:[#allocation2 + $0x4a] sm:$0x3f]
    %s1403 = scalar_lea.vmem %s7, 64
    %v1404 = vld [vmem:[%s1403] sm:$0xff]
    %v1405 = vld [vmem:[%s1403 + $0x8] sm:$0xff]
    %v1406 = vld [vmem:[%s1403 + $0x10] sm:$0xff]
    %v1407 = vld [vmem:[%s1403 + $0x18] sm:$0xff]
    %v1409 = vsel %vm130, %v1393, 0
    %v1412 = vsel %vm130, %v1394, 0
    %v1415 = vsel %vm130, %v1395, 0
    %v1418 = vsel %vm130, %v1396, 0
    %v1421 = vsel %vm130, %v1397, 0
    %v1424 = vsel %vm130, %v1398, 0
    %v1427 = vsel %vm130, %v1399, 0
    %v1430 = vsel %vm130, %v1400, 0
    %v1433 = vsel %vm130, %v1401, 0
    %v1436 = vsel %vm130, %v1402, 0
    %1438 = vmatprep.subr.mxu0 0.0
    %1439 = vmatpush1.msra.mxu0 %v1404
    %1440 = vmatprep.subr.mxu0 0.0
    %1441 = vmatpush1.msra.mxu0 %v1405
    %1442 = vmatprep.subr.mxu0 0.0
    %1443 = vmatpush1.msra.mxu0 %v1406
    %1444 = vmatprep.subr.mxu0 0.0
    %1445 = vmatpush1.msra.mxu0 %v1407
    %1446 = vmatprep.subr.mxu0 0.0
    %1447 = vmatpush1.msra.mxu0 0.0
    %1448 = vmatprep.subr.mxu0 0.0
    %1449 = vmatpush1.msra.mxu0 0.0
    %1450 = vmatprep.subr.mxu0 0.0
    %1451 = vmatpush1.msra.mxu0 0.0
    %1452 = vmatprep.subr.mxu0 0.0
    %1453 = vmatpush1.msra.mxu0 0.0
    %1454 = vmatprep.subr.mxu0 0.0
    %1455 = vmatpush1.msra.mxu0 0.0
    %1456 = vmatprep.subr.mxu0 0.0
    %1457 = vmatpush1.msra.mxu0 0.0
    %1458 = vmatprep.subr.mxu0 0.0
    %1459 = vmatpush1.msra.mxu0 0.0
    %1460 = vmatprep.subr.mxu0 0.0
    %1461 = vmatpush1.msra.mxu0 0.0
    %1462 = vmatprep.subr.mxu0 0.0
    %1463 = vmatpush1.msra.mxu0 0.0
    %1464 = vmatprep.subr.mxu0 0.0
    %1465 = vmatpush1.msra.mxu0 0.0
    %1466 = vmatprep.subr.mxu0 0.0
    %1467 = vmatpush1.msra.mxu0 0.0
    %1468 = vmatprep.subr.mxu0 0.0
    %1469 = vmatpush1.msra.mxu0 0.0
    %1470 = vmatprep.subr.mxu0 0.0
    %1471 = vmatpush1.msra.mxu0 0.0
    %1472 = vmatprep.subr.mxu0 0.0
    %1473 = vmatpush1.msra.mxu0 0.0
    %1474 = vmatprep.subr.mxu0 0.0
    %1475 = vmatpush1.msra.mxu0 0.0
    %1476 = vmatprep.subr.mxu0 0.0
    %1477 = vmatpush1.msra.mxu0 0.0
    %1478 = vmatprep.subr.mxu0 0.0
    %1479 = vmatpush1.msra.mxu0 0.0
    %1480 = vmatprep.subr.mxu0 0.0
    %1481 = vmatpush1.msra.mxu0 0.0
    %1482 = vmatprep.subr.mxu0 0.0
    %1483 = vmatpush1.msra.mxu0 0.0
    %1484 = vmatprep.subr.mxu0 0.0
    %1485 = vmatpush1.msra.mxu0 0.0
    %1486 = vmatprep.subr.mxu0 0.0
    %1487 = vmatpush1.msra.mxu0 0.0
    %1488 = vmatprep.subr.mxu0 0.0
    %1489 = vmatpush1.msra.mxu0 0.0
    %1490 = vmatprep.subr.mxu0 0.0
    %1491 = vmatpush1.msra.mxu0 0.0
    %1492 = vmatprep.subr.mxu0 0.0
    %1493 = vmatpush1.msra.mxu0 0.0
    %1494 = vmatprep.subr.mxu0 0.0
    %1495 = vmatpush1.msra.mxu0 0.0
    %1496 = vmatprep.subr.mxu0 0.0
    %1497 = vmatpush1.msra.mxu0 0.0
    %1498 = vmatprep.subr.mxu0 0.0
    %1499 = vmatpush1.msra.mxu0 0.0
    %1500 = vmatprep.subr.mxu0 0.0
    %1501 = vmatpush1.msra.mxu0 0.0
    %1502 = vmatprep.mubr.f32.mxu0 0.0
    %1503 = vmatmul.mubr.f32.gmra.mrb[0].mxu0 %v1409
    %v1504 = vpop.f32.mrb[0].mxu0
    %v1505 = vadd.f32 0.0, %v1504
    %v1506 = vpop.f32.mrb[0].mxu0
    %1507 = vmatprep.mubr.f32.mxu0 0.0
    %1508 = vmatmul.mubr.f32.gmra.mrb[0].mxu0 %v1412
    %v1509 = vpop.f32.mrb[0].mxu0
    %v1510 = vadd.f32 0.0, %v1509
    %v1511 = vpop.f32.mrb[0].mxu0
    %1512 = vmatprep.mubr.f32.mxu0 0.0
    %1513 = vmatmul.mubr.f32.gmra.mrb[0].mxu0 %v1415
    %v1514 = vpop.f32.mrb[0].mxu0
    %v1515 = vadd.f32 0.0, %v1514
    %v1516 = vpop.f32.mrb[0].mxu0
    %1517 = vmatprep.mubr.f32.mxu0 0.0
    %1518 = vmatmul.mubr.f32.gmra.mrb[0].mxu0 %v1418
    %v1519 = vpop.f32.mrb[0].mxu0
    %v1520 = vadd.f32 0.0, %v1519
    %v1521 = vpop.f32.mrb[0].mxu0
    %1522 = vmatprep.mubr.f32.mxu0 0.0
    %1523 = vmatmul.mubr.f32.gmra.mrb[0].mxu0 %v1421
    %v1524 = vpop.f32.mrb[0].mxu0
    %v1525 = vadd.f32 0.0, %v1524
    %v1526 = vpop.f32.mrb[0].mxu0
    %1527 = vmatprep.mubr.f32.mxu0 0.0
    %1528 = vmatmul.mubr.f32.gmra.mrb[0].mxu0 %v1424
    %v1529 = vpop.f32.mrb[0].mxu0
    %v1530 = vadd.f32 0.0, %v1529
    %v1531 = vpop.f32.mrb[0].mxu0
    %1532 = vmatprep.mubr.f32.mxu0 0.0
    %1533 = vmatmul.mubr.f32.gmra.mrb[0].mxu0 %v1427
    %v1534 = vpop.f32.mrb[0].mxu0
    %v1535 = vadd.f32 0.0, %v1534
    %v1536 = vpop.f32.mrb[0].mxu0
    %1537 = vmatprep.mubr.f32.mxu0 0.0
    %1538 = vmatmul.mubr.f32.gmra.mrb[0].mxu0 %v1430
    %v1539 = vpop.f32.mrb[0].mxu0
    %v1540 = vadd.f32 0.0, %v1539
    %v1541 = vpop.f32.mrb[0].mxu0
    %1542 = vmatprep.mubr.f32.mxu0 0.0
    %1543 = vmatmul.mubr.f32.gmra.mrb[0].mxu0 %v1433
    %v1544 = vpop.f32.mrb[0].mxu0
    %v1545 = vadd.f32 0.0, %v1544
    %v1546 = vpop.f32.mrb[0].mxu0
    %1547 = vmatprep.mubr.f32.mxu0 0.0
    %1548 = vmatmul.mubr.f32.gmra.mrb[0].mxu0 %v1436
    %v1549 = vpop.f32.mrb[0].mxu0
    %v1550 = vadd.f32 0.0, %v1549
    %v1551 = vpop.f32.mrb[0].mxu0
    %1552 = vdwg.mxu0
    %v1553 = vadd.f32 %v1345, %v1505
    %v1554 = vadd.f32 %v1350, %v1510
    %v1555 = vadd.f32 %v1355, %v1515
    %v1556 = vadd.f32 %v1360, %v1520
    %v1557 = vadd.f32 %v1365, %v1525
    %v1558 = vadd.f32 %v1370, %v1530
    %v1559 = vadd.f32 %v1375, %v1535
    %v1560 = vadd.f32 %v1380, %v1540
    %v1561 = vadd.f32 %v1385, %v1545
    %v1562 = vadd.f32 %v1390, %v1550
    %v1563 = vld [vmem:[#allocation2 + $0xa] sm:$0xff]
    %v1564 = vld [vmem:[#allocation2 + $0x12] sm:$0xff]
    %v1565 = vld [vmem:[#allocation2 + $0x1a] sm:$0xff]
    %v1566 = vld [vmem:[#allocation2 + $0x22] sm:$0xff]
    %v1567 = vld [vmem:[#allocation2 + $0x2a] sm:$0xff]
    %v1568 = vld [vmem:[#allocation2 + $0x32] sm:$0xff]
    %v1569 = vld [vmem:[#allocation2 + $0x3a] sm:$0xff]
    %v1570 = vld [vmem:[#allocation2 + $0x42] sm:$0xff]
    %v1571 = vld [vmem:[#allocation2 + $0x4a] sm:$0xff]
    %v1572 = vld [vmem:[#allocation2 + $0x52] sm:$0x3f]
    %s1573 = scalar_lea.vmem %s7, 96
    %v1574 = vld [vmem:[%s1573] sm:$0xff]
    %v1575 = vld [vmem:[%s1573 + $0x8] sm:$0xff]
    %v1576 = vld [vmem:[%s1573 + $0x10] sm:$0xff]
    %v1577 = vld [vmem:[%s1573 + $0x18] sm:$0xff]
    %v1579 = vsel %vm130, %v1563, 0
    %v1582 = vsel %vm130, %v1564, 0
    %v1585 = vsel %vm130, %v1565, 0
    %v1588 = vsel %vm130, %v1566, 0
    %v1591 = vsel %vm130, %v1567, 0
    %v1594 = vsel %vm130, %v1568, 0
    %v1597 = vsel %vm130, %v1569, 0
    %v1600 = vsel %vm130, %v1570, 0
    %v1603 = vsel %vm130, %v1571, 0
    %v1606 = vsel %vm130, %v1572, 0
    %1608 = vmatprep.subr.mxu0 0.0
    %1609 = vmatpush1.msra.mxu0 %v1574
    %1610 = vmatprep.subr.mxu0 0.0
    %1611 = vmatpush1.msra.mxu0 %v1575
    %1612 = vmatprep.subr.mxu0 0.0
    %1613 = vmatpush1.msra.mxu0 %v1576
    %1614 = vmatprep.subr.mxu0 0.0
    %1615 = vmatpush1.msra.mxu0 %v1577
    %1616 = vmatprep.subr.mxu0 0.0
    %1617 = vmatpush1.msra.mxu0 0.0
    %1618 = vmatprep.subr.mxu0 0.0
    %1619 = vmatpush1.msra.mxu0 0.0
    %1620 = vmatprep.subr.mxu0 0.0
    %1621 = vmatpush1.msra.mxu0 0.0
    %1622 = vmatprep.subr.mxu0 0.0
    %1623 = vmatpush1.msra.mxu0 0.0
    %1624 = vmatprep.subr.mxu0 0.0
    %1625 = vmatpush1.msra.mxu0 0.0
    %1626 = vmatprep.subr.mxu0 0.0
    %1627 = vmatpush1.msra.mxu0 0.0
    %1628 = vmatprep.subr.mxu0 0.0
    %1629 = vmatpush1.msra.mxu0 0.0
    %1630 = vmatprep.subr.mxu0 0.0
    %1631 = vmatpush1.msra.mxu0 0.0
    %1632 = vmatprep.subr.mxu0 0.0
    %1633 = vmatpush1.msra.mxu0 0.0
    %1634 = vmatprep.subr.mxu0 0.0
    %1635 = vmatpush1.msra.mxu0 0.0
    %1636 = vmatprep.subr.mxu0 0.0
    %1637 = vmatpush1.msra.mxu0 0.0
    %1638 = vmatprep.subr.mxu0 0.0
    %1639 = vmatpush1.msra.mxu0 0.0
    %1640 = vmatprep.subr.mxu0 0.0
    %1641 = vmatpush1.msra.mxu0 0.0
    %1642 = vmatprep.subr.mxu0 0.0
    %1643 = vmatpush1.msra.mxu0 0.0
    %1644 = vmatprep.subr.mxu0 0.0
    %1645 = vmatpush1.msra.mxu0 0.0
    %1646 = vmatprep.subr.mxu0 0.0
    %1647 = vmatpush1.msra.mxu0 0.0
    %1648 = vmatprep.subr.mxu0 0.0
    %1649 = vmatpush1.msra.mxu0 0.0
    %1650 = vmatprep.subr.mxu0 0.0
    %1651 = vmatpush1.msra.mxu0 0.0
    %1652 = vmatprep.subr.mxu0 0.0
    %1653 = vmatpush1.msra.mxu0 0.0
    %1654 = vmatprep.subr.mxu0 0.0
    %1655 = vmatpush1.msra.mxu0 0.0
    %1656 = vmatprep.subr.mxu0 0.0
    %1657 = vmatpush1.msra.mxu0 0.0
    %1658 = vmatprep.subr.mxu0 0.0
    %1659 = vmatpush1.msra.mxu0 0.0
    %1660 = vmatprep.subr.mxu0 0.0
    %1661 = vmatpush1.msra.mxu0 0.0
    %1662 = vmatprep.subr.mxu0 0.0
    %1663 = vmatpush1.msra.mxu0 0.0
    %1664 = vmatprep.subr.mxu0 0.0
    %1665 = vmatpush1.msra.mxu0 0.0
    %1666 = vmatprep.subr.mxu0 0.0
    %1667 = vmatpush1.msra.mxu0 0.0
    %1668 = vmatprep.subr.mxu0 0.0
    %1669 = vmatpush1.msra.mxu0 0.0
    %1670 = vmatprep.subr.mxu0 0.0
    %1671 = vmatpush1.msra.mxu0 0.0
    %1672 = vmatprep.mubr.f32.mxu0 0.0
    %1673 = vmatmul.mubr.f32.gmra.mrb[0].mxu0 %v1579
    %v1674 = vpop.f32.mrb[0].mxu0
    %v1675 = vadd.f32 0.0, %v1674
    %v1676 = vpop.f32.mrb[0].mxu0
    %1677 = vmatprep.mubr.f32.mxu0 0.0
    %1678 = vmatmul.mubr.f32.gmra.mrb[0].mxu0 %v1582
    %v1679 = vpop.f32.mrb[0].mxu0
    %v1680 = vadd.f32 0.0, %v1679
    %v1681 = vpop.f32.mrb[0].mxu0
    %1682 = vmatprep.mubr.f32.mxu0 0.0
    %1683 = vmatmul.mubr.f32.gmra.mrb[0].mxu0 %v1585
    %v1684 = vpop.f32.mrb[0].mxu0
    %v1685 = vadd.f32 0.0, %v1684
    %v1686 = vpop.f32.mrb[0].mxu0
    %1687 = vmatprep.mubr.f32.mxu0 0.0
    %1688 = vmatmul.mubr.f32.gmra.mrb[0].mxu0 %v1588
    %v1689 = vpop.f32.mrb[0].mxu0
    %v1690 = vadd.f32 0.0, %v1689
    %v1691 = vpop.f32.mrb[0].mxu0
    %1692 = vmatprep.mubr.f32.mxu0 0.0
    %1693 = vmatmul.mubr.f32.gmra.mrb[0].mxu0 %v1591
    %v1694 = vpop.f32.mrb[0].mxu0
    %v1695 = vadd.f32 0.0, %v1694
    %v1696 = vpop.f32.mrb[0].mxu0
    %1697 = vmatprep.mubr.f32.mxu0 0.0
    %1698 = vmatmul.mubr.f32.gmra.mrb[0].mxu0 %v1594
    %v1699 = vpop.f32.mrb[0].mxu0
    %v1700 = vadd.f32 0.0, %v1699
    %v1701 = vpop.f32.mrb[0].mxu0
    %1702 = vmatprep.mubr.f32.mxu0 0.0
    %1703 = vmatmul.mubr.f32.gmra.mrb[0].mxu0 %v1597
    %v1704 = vpop.f32.mrb[0].mxu0
    %v1705 = vadd.f32 0.0, %v1704
    %v1706 = vpop.f32.mrb[0].mxu0
    %1707 = vmatprep.mubr.f32.mxu0 0.0
    %1708 = vmatmul.mubr.f32.gmra.mrb[0].mxu0 %v1600
    %v1709 = vpop.f32.mrb[0].mxu0
    %v1710 = vadd.f32 0.0, %v1709
    %v1711 = vpop.f32.mrb[0].mxu0
    %1712 = vmatprep.mubr.f32.mxu0 0.0
    %1713 = vmatmul.mubr.f32.gmra.mrb[0].mxu0 %v1603
    %v1714 = vpop.f32.mrb[0].mxu0
    %v1715 = vadd.f32 0.0, %v1714
    %v1716 = vpop.f32.mrb[0].mxu0
    %1717 = vmatprep.mubr.f32.mxu0 0.0
    %1718 = vmatmul.mubr.f32.gmra.mrb[0].mxu0 %v1606
    %v1719 = vpop.f32.mrb[0].mxu0
    %v1720 = vadd.f32 0.0, %v1719
    %v1721 = vpop.f32.mrb[0].mxu0
    %1722 = vdwg.mxu0
    %v1723 = vadd.f32 %v1553, %v1675
    %v1724 = vadd.f32 %v1554, %v1680
    %v1725 = vadd.f32 %v1555, %v1685
    %v1726 = vadd.f32 %v1556, %v1690
    %v1727 = vadd.f32 %v1557, %v1695
    %v1728 = vadd.f32 %v1558, %v1700
    %v1729 = vadd.f32 %v1559, %v1705
    %v1730 = vadd.f32 %v1560, %v1710
    %v1731 = vadd.f32 %v1561, %v1715
    %v1732 = vadd.f32 %v1562, %v1720
    %v1733 = vld [vmem:[#allocation2 + $0xb] sm:$0xff]
    %v1734 = vld [vmem:[#allocation2 + $0x13] sm:$0xff]
    %v1735 = vld [vmem:[#allocation2 + $0x1b] sm:$0xff]
    %v1736 = vld [vmem:[#allocation2 + $0x23] sm:$0xff]
    %v1737 = vld [vmem:[#allocation2 + $0x2b] sm:$0xff]
    %v1738 = vld [vmem:[#allocation2 + $0x33] sm:$0xff]
    %v1739 = vld [vmem:[#allocation2 + $0x3b] sm:$0xff]
    %v1740 = vld [vmem:[#allocation2 + $0x43] sm:$0xff]
    %v1741 = vld [vmem:[#allocation2 + $0x4b] sm:$0xff]
    %v1742 = vld [vmem:[#allocation2 + $0x53] sm:$0x3f]
    %s1743 = scalar_lea.vmem %s7, 128
    %v1744 = vld [vmem:[%s1743] sm:$0xff]
    %v1745 = vld [vmem:[%s1743 + $0x8] sm:$0xff]
    %v1746 = vld [vmem:[%s1743 + $0x10] sm:$0xff]
    %v1747 = vld [vmem:[%s1743 + $0x18] sm:$0xff]
    %v1749 = vsel %vm130, %v1733, 0
    %v1752 = vsel %vm130, %v1734, 0
    %v1755 = vsel %vm130, %v1735, 0
    %v1758 = vsel %vm130, %v1736, 0
    %v1761 = vsel %vm130, %v1737, 0
    %v1764 = vsel %vm130, %v1738, 0
    %v1767 = vsel %vm130, %v1739, 0
    %v1770 = vsel %vm130, %v1740, 0
    %v1773 = vsel %vm130, %v1741, 0
    %v1776 = vsel %vm130, %v1742, 0
    %1778 = vmatprep.subr.mxu0 0.0
    %1779 = vmatpush1.msra.mxu0 %v1744
    %1780 = vmatprep.subr.mxu0 0.0
    %1781 = vmatpush1.msra.mxu0 %v1745
    %1782 = vmatprep.subr.mxu0 0.0
    %1783 = vmatpush1.msra.mxu0 %v1746
    %1784 = vmatprep.subr.mxu0 0.0
    %1785 = vmatpush1.msra.mxu0 %v1747
    %1786 = vmatprep.subr.mxu0 0.0
    %1787 = vmatpush1.msra.mxu0 0.0
    %1788 = vmatprep.subr.mxu0 0.0
    %1789 = vmatpush1.msra.mxu0 0.0
    %1790 = vmatprep.subr.mxu0 0.0
    %1791 = vmatpush1.msra.mxu0 0.0
    %1792 = vmatprep.subr.mxu0 0.0
    %1793 = vmatpush1.msra.mxu0 0.0
    %1794 = vmatprep.subr.mxu0 0.0
    %1795 = vmatpush1.msra.mxu0 0.0
    %1796 = vmatprep.subr.mxu0 0.0
    %1797 = vmatpush1.msra.mxu0 0.0
    %1798 = vmatprep.subr.mxu0 0.0
    %1799 = vmatpush1.msra.mxu0 0.0
    %1800 = vmatprep.subr.mxu0 0.0
    %1801 = vmatpush1.msra.mxu0 0.0
    %1802 = vmatprep.subr.mxu0 0.0
    %1803 = vmatpush1.msra.mxu0 0.0
    %1804 = vmatprep.subr.mxu0 0.0
    %1805 = vmatpush1.msra.mxu0 0.0
    %1806 = vmatprep.subr.mxu0 0.0
    %1807 = vmatpush1.msra.mxu0 0.0
    %1808 = vmatprep.subr.mxu0 0.0
    %1809 = vmatpush1.msra.mxu0 0.0
    %1810 = vmatprep.subr.mxu0 0.0
    %1811 = vmatpush1.msra.mxu0 0.0
    %1812 = vmatprep.subr.mxu0 0.0
    %1813 = vmatpush1.msra.mxu0 0.0
    %1814 = vmatprep.subr.mxu0 0.0
    %1815 = vmatpush1.msra.mxu0 0.0
    %1816 = vmatprep.subr.mxu0 0.0
    %1817 = vmatpush1.msra.mxu0 0.0
    %1818 = vmatprep.subr.mxu0 0.0
    %1819 = vmatpush1.msra.mxu0 0.0
    %1820 = vmatprep.subr.mxu0 0.0
    %1821 = vmatpush1.msra.mxu0 0.0
    %1822 = vmatprep.subr.mxu0 0.0
    %1823 = vmatpush1.msra.mxu0 0.0
    %1824 = vmatprep.subr.mxu0 0.0
    %1825 = vmatpush1.msra.mxu0 0.0
    %1826 = vmatprep.subr.mxu0 0.0
    %1827 = vmatpush1.msra.mxu0 0.0
    %1828 = vmatprep.subr.mxu0 0.0
    %1829 = vmatpush1.msra.mxu0 0.0
    %1830 = vmatprep.subr.mxu0 0.0
    %1831 = vmatpush1.msra.mxu0 0.0
    %1832 = vmatprep.subr.mxu0 0.0
    %1833 = vmatpush1.msra.mxu0 0.0
    %1834 = vmatprep.subr.mxu0 0.0
    %1835 = vmatpush1.msra.mxu0 0.0
    %1836 = vmatprep.subr.mxu0 0.0
    %1837 = vmatpush1.msra.mxu0 0.0
    %1838 = vmatprep.subr.mxu0 0.0
    %1839 = vmatpush1.msra.mxu0 0.0
    %1840 = vmatprep.subr.mxu0 0.0
    %1841 = vmatpush1.msra.mxu0 0.0
    %1842 = vmatprep.mubr.f32.mxu0 0.0
    %1843 = vmatmul.mubr.f32.gmra.mrb[0].mxu0 %v1749
    %v1844 = vpop.f32.mrb[0].mxu0
    %v1845 = vadd.f32 0.0, %v1844
    %v1846 = vpop.f32.mrb[0].mxu0
    %1847 = vmatprep.mubr.f32.mxu0 0.0
    %1848 = vmatmul.mubr.f32.gmra.mrb[0].mxu0 %v1752
    %v1849 = vpop.f32.mrb[0].mxu0
    %v1850 = vadd.f32 0.0, %v1849
    %v1851 = vpop.f32.mrb[0].mxu0
    %1852 = vmatprep.mubr.f32.mxu0 0.0
    %1853 = vmatmul.mubr.f32.gmra.mrb[0].mxu0 %v1755
    %v1854 = vpop.f32.mrb[0].mxu0
    %v1855 = vadd.f32 0.0, %v1854
    %v1856 = vpop.f32.mrb[0].mxu0
    %1857 = vmatprep.mubr.f32.mxu0 0.0
    %1858 = vmatmul.mubr.f32.gmra.mrb[0].mxu0 %v1758
    %v1859 = vpop.f32.mrb[0].mxu0
    %v1860 = vadd.f32 0.0, %v1859
    %v1861 = vpop.f32.mrb[0].mxu0
    %1862 = vmatprep.mubr.f32.mxu0 0.0
    %1863 = vmatmul.mubr.f32.gmra.mrb[0].mxu0 %v1761
    %v1864 = vpop.f32.mrb[0].mxu0
    %v1865 = vadd.f32 0.0, %v1864
    %v1866 = vpop.f32.mrb[0].mxu0
    %1867 = vmatprep.mubr.f32.mxu0 0.0
    %1868 = vmatmul.mubr.f32.gmra.mrb[0].mxu0 %v1764
    %v1869 = vpop.f32.mrb[0].mxu0
    %v1870 = vadd.f32 0.0, %v1869
    %v1871 = vpop.f32.mrb[0].mxu0
    %1872 = vmatprep.mubr.f32.mxu0 0.0
    %1873 = vmatmul.mubr.f32.gmra.mrb[0].mxu0 %v1767
    %v1874 = vpop.f32.mrb[0].mxu0
    %v1875 = vadd.f32 0.0, %v1874
    %v1876 = vpop.f32.mrb[0].mxu0
    %1877 = vmatprep.mubr.f32.mxu0 0.0
    %1878 = vmatmul.mubr.f32.gmra.mrb[0].mxu0 %v1770
    %v1879 = vpop.f32.mrb[0].mxu0
    %v1880 = vadd.f32 0.0, %v1879
    %v1881 = vpop.f32.mrb[0].mxu0
    %1882 = vmatprep.mubr.f32.mxu0 0.0
    %1883 = vmatmul.mubr.f32.gmra.mrb[0].mxu0 %v1773
    %v1884 = vpop.f32.mrb[0].mxu0
    %v1885 = vadd.f32 0.0, %v1884
    %v1886 = vpop.f32.mrb[0].mxu0
    %1887 = vmatprep.mubr.f32.mxu0 0.0
    %1888 = vmatmul.mubr.f32.gmra.mrb[0].mxu0 %v1776
    %v1889 = vpop.f32.mrb[0].mxu0
    %v1890 = vadd.f32 0.0, %v1889
    %v1891 = vpop.f32.mrb[0].mxu0
    %1892 = vdwg.mxu0
    %v1893 = vadd.f32 %v1723, %v1845
    %v1894 = vadd.f32 %v1724, %v1850
    %v1895 = vadd.f32 %v1725, %v1855
    %v1896 = vadd.f32 %v1726, %v1860
    %v1897 = vadd.f32 %v1727, %v1865
    %v1898 = vadd.f32 %v1728, %v1870
    %v1899 = vadd.f32 %v1729, %v1875
    %v1900 = vadd.f32 %v1730, %v1880
    %v1901 = vadd.f32 %v1731, %v1885
    %v1902 = vadd.f32 %v1732, %v1890
    %v1903 = vld [vmem:[#allocation2 + $0xc] sm:$0xff]
    %v1904 = vld [vmem:[#allocation2 + $0x14] sm:$0xff]
    %v1905 = vld [vmem:[#allocation2 + $0x1c] sm:$0xff]
    %v1906 = vld [vmem:[#allocation2 + $0x24] sm:$0xff]
    %v1907 = vld [vmem:[#allocation2 + $0x2c] sm:$0xff]
    %v1908 = vld [vmem:[#allocation2 + $0x34] sm:$0xff]
    %v1909 = vld [vmem:[#allocation2 + $0x3c] sm:$0xff]
    %v1910 = vld [vmem:[#allocation2 + $0x44] sm:$0xff]
    %v1911 = vld [vmem:[#allocation2 + $0x4c] sm:$0xff]
    %v1912 = vld [vmem:[#allocation2 + $0x54] sm:$0x3f]
    %s1913 = scalar_lea.vmem %s7, 160
    %v1914 = vld [vmem:[%s1913] sm:$0xff]
    %v1915 = vld [vmem:[%s1913 + $0x8] sm:$0xff]
    %v1916 = vld [vmem:[%s1913 + $0x10] sm:$0xff]
    %v1917 = vld [vmem:[%s1913 + $0x18] sm:$0xff]
    %v1919 = vsel %vm130, %v1903, 0
    %v1922 = vsel %vm130, %v1904, 0
    %v1925 = vsel %vm130, %v1905, 0
    %v1928 = vsel %vm130, %v1906, 0
    %v1931 = vsel %vm130, %v1907, 0
    %v1934 = vsel %vm130, %v1908, 0
    %v1937 = vsel %vm130, %v1909, 0
    %v1940 = vsel %vm130, %v1910, 0
    %v1943 = vsel %vm130, %v1911, 0
    %v1946 = vsel %vm130, %v1912, 0
    %1948 = vmatprep.subr.mxu0 0.0
    %1949 = vmatpush1.msra.mxu0 %v1914
    %1950 = vmatprep.subr.mxu0 0.0
    %1951 = vmatpush1.msra.mxu0 %v1915
    %1952 = vmatprep.subr.mxu0 0.0
    %1953 = vmatpush1.msra.mxu0 %v1916
    %1954 = vmatprep.subr.mxu0 0.0
    %1955 = vmatpush1.msra.mxu0 %v1917
    %1956 = vmatprep.subr.mxu0 0.0
    %1957 = vmatpush1.msra.mxu0 0.0
    %1958 = vmatprep.subr.mxu0 0.0
    %1959 = vmatpush1.msra.mxu0 0.0
    %1960 = vmatprep.subr.mxu0 0.0
    %1961 = vmatpush1.msra.mxu0 0.0
    %1962 = vmatprep.subr.mxu0 0.0
    %1963 = vmatpush1.msra.mxu0 0.0
    %1964 = vmatprep.subr.mxu0 0.0
    %1965 = vmatpush1.msra.mxu0 0.0
    %1966 = vmatprep.subr.mxu0 0.0
    %1967 = vmatpush1.msra.mxu0 0.0
    %1968 = vmatprep.subr.mxu0 0.0
    %1969 = vmatpush1.msra.mxu0 0.0
    %1970 = vmatprep.subr.mxu0 0.0
    %1971 = vmatpush1.msra.mxu0 0.0
    %1972 = vmatprep.subr.mxu0 0.0
    %1973 = vmatpush1.msra.mxu0 0.0
    %1974 = vmatprep.subr.mxu0 0.0
    %1975 = vmatpush1.msra.mxu0 0.0
    %1976 = vmatprep.subr.mxu0 0.0
    %1977 = vmatpush1.msra.mxu0 0.0
    %1978 = vmatprep.subr.mxu0 0.0
    %1979 = vmatpush1.msra.mxu0 0.0
    %1980 = vmatprep.subr.mxu0 0.0
    %1981 = vmatpush1.msra.mxu0 0.0
    %1982 = vmatprep.subr.mxu0 0.0
    %1983 = vmatpush1.msra.mxu0 0.0
    %1984 = vmatprep.subr.mxu0 0.0
    %1985 = vmatpush1.msra.mxu0 0.0
    %1986 = vmatprep.subr.mxu0 0.0
    %1987 = vmatpush1.msra.mxu0 0.0
    %1988 = vmatprep.subr.mxu0 0.0
    %1989 = vmatpush1.msra.mxu0 0.0
    %1990 = vmatprep.subr.mxu0 0.0
    %1991 = vmatpush1.msra.mxu0 0.0
    %1992 = vmatprep.subr.mxu0 0.0
    %1993 = vmatpush1.msra.mxu0 0.0
    %1994 = vmatprep.subr.mxu0 0.0
    %1995 = vmatpush1.msra.mxu0 0.0
    %1996 = vmatprep.subr.mxu0 0.0
    %1997 = vmatpush1.msra.mxu0 0.0
    %1998 = vmatprep.subr.mxu0 0.0
    %1999 = vmatpush1.msra.mxu0 0.0
    %2000 = vmatprep.subr.mxu0 0.0
    %2001 = vmatpush1.msra.mxu0 0.0
    %2002 = vmatprep.subr.mxu0 0.0
    %2003 = vmatpush1.msra.mxu0 0.0
    %2004 = vmatprep.subr.mxu0 0.0
    %2005 = vmatpush1.msra.mxu0 0.0
    %2006 = vmatprep.subr.mxu0 0.0
    %2007 = vmatpush1.msra.mxu0 0.0
    %2008 = vmatprep.subr.mxu0 0.0
    %2009 = vmatpush1.msra.mxu0 0.0
    %2010 = vmatprep.subr.mxu0 0.0
    %2011 = vmatpush1.msra.mxu0 0.0
    %2012 = vmatprep.mubr.f32.mxu0 0.0
    %2013 = vmatmul.mubr.f32.gmra.mrb[0].mxu0 %v1919
    %v2014 = vpop.f32.mrb[0].mxu0
    %v2015 = vadd.f32 0.0, %v2014
    %v2016 = vpop.f32.mrb[0].mxu0
    %2017 = vmatprep.mubr.f32.mxu0 0.0
    %2018 = vmatmul.mubr.f32.gmra.mrb[0].mxu0 %v1922
    %v2019 = vpop.f32.mrb[0].mxu0
    %v2020 = vadd.f32 0.0, %v2019
    %v2021 = vpop.f32.mrb[0].mxu0
    %2022 = vmatprep.mubr.f32.mxu0 0.0
    %2023 = vmatmul.mubr.f32.gmra.mrb[0].mxu0 %v1925
    %v2024 = vpop.f32.mrb[0].mxu0
    %v2025 = vadd.f32 0.0, %v2024
    %v2026 = vpop.f32.mrb[0].mxu0
    %2027 = vmatprep.mubr.f32.mxu0 0.0
    %2028 = vmatmul.mubr.f32.gmra.mrb[0].mxu0 %v1928
    %v2029 = vpop.f32.mrb[0].mxu0
    %v2030 = vadd.f32 0.0, %v2029
    %v2031 = vpop.f32.mrb[0].mxu0
    %2032 = vmatprep.mubr.f32.mxu0 0.0
    %2033 = vmatmul.mubr.f32.gmra.mrb[0].mxu0 %v1931
    %v2034 = vpop.f32.mrb[0].mxu0
    %v2035 = vadd.f32 0.0, %v2034
    %v2036 = vpop.f32.mrb[0].mxu0
    %2037 = vmatprep.mubr.f32.mxu0 0.0
    %2038 = vmatmul.mubr.f32.gmra.mrb[0].mxu0 %v1934
    %v2039 = vpop.f32.mrb[0].mxu0
    %v2040 = vadd.f32 0.0, %v2039
    %v2041 = vpop.f32.mrb[0].mxu0
    %2042 = vmatprep.mubr.f32.mxu0 0.0
    %2043 = vmatmul.mubr.f32.gmra.mrb[0].mxu0 %v1937
    %v2044 = vpop.f32.mrb[0].mxu0
    %v2045 = vadd.f32 0.0, %v2044
    %v2046 = vpop.f32.mrb[0].mxu0
    %2047 = vmatprep.mubr.f32.mxu0 0.0
    %2048 = vmatmul.mubr.f32.gmra.mrb[0].mxu0 %v1940
    %v2049 = vpop.f32.mrb[0].mxu0
    %v2050 = vadd.f32 0.0, %v2049
    %v2051 = vpop.f32.mrb[0].mxu0
    %2052 = vmatprep.mubr.f32.mxu0 0.0
    %2053 = vmatmul.mubr.f32.gmra.mrb[0].mxu0 %v1943
    %v2054 = vpop.f32.mrb[0].mxu0
    %v2055 = vadd.f32 0.0, %v2054
    %v2056 = vpop.f32.mrb[0].mxu0
    %2057 = vmatprep.mubr.f32.mxu0 0.0
    %2058 = vmatmul.mubr.f32.gmra.mrb[0].mxu0 %v1946
    %v2059 = vpop.f32.mrb[0].mxu0
    %v2060 = vadd.f32 0.0, %v2059
    %v2061 = vpop.f32.mrb[0].mxu0
    %2062 = vdwg.mxu0
    %v2063 = vadd.f32 %v1893, %v2015
    %v2064 = vadd.f32 %v1894, %v2020
    %v2065 = vadd.f32 %v1895, %v2025
    %v2066 = vadd.f32 %v1896, %v2030
    %v2067 = vadd.f32 %v1897, %v2035
    %v2068 = vadd.f32 %v1898, %v2040
    %v2069 = vadd.f32 %v1899, %v2045
    %v2070 = vadd.f32 %v1900, %v2050
    %v2071 = vadd.f32 %v1901, %v2055
    %v2072 = vadd.f32 %v1902, %v2060
    %v2073 = vld [vmem:[#allocation2 + $0x14] sm:$0xff]
    %v2074 = vld [vmem:[#allocation2 + $0x1c] sm:$0xff]
    %v2075 = vld [vmem:[#allocation2 + $0x24] sm:$0xff]
    %v2076 = vld [vmem:[#allocation2 + $0x2c] sm:$0xff]
    %v2077 = vld [vmem:[#allocation2 + $0x34] sm:$0xff]
    %v2078 = vld [vmem:[#allocation2 + $0x3c] sm:$0xff]
    %v2079 = vld [vmem:[#allocation2 + $0x44] sm:$0xff]
    %v2080 = vld [vmem:[#allocation2 + $0x4c] sm:$0xff]
    %v2081 = vld [vmem:[#allocation2 + $0x54] sm:$0xff]
    %v2082 = vld [vmem:[#allocation2 + $0x5c] sm:$0x3f]
    %s2083 = scalar_lea.vmem %s7, 192
    %v2084 = vld [vmem:[%s2083] sm:$0xff]
    %v2085 = vld [vmem:[%s2083 + $0x8] sm:$0xff]
    %v2086 = vld [vmem:[%s2083 + $0x10] sm:$0xff]
    %v2087 = vld [vmem:[%s2083 + $0x18] sm:$0xff]
    %v2089 = vsel %vm130, %v2073, 0
    %v2092 = vsel %vm130, %v2074, 0
    %v2095 = vsel %vm130, %v2075, 0
    %v2098 = vsel %vm130, %v2076, 0
    %v2101 = vsel %vm130, %v2077, 0
    %v2104 = vsel %vm130, %v2078, 0
    %v2107 = vsel %vm130, %v2079, 0
    %v2110 = vsel %vm130, %v2080, 0
    %v2113 = vsel %vm130, %v2081, 0
    %v2116 = vsel %vm130, %v2082, 0
    %2118 = vmatprep.subr.mxu0 0.0
    %2119 = vmatpush1.msra.mxu0 %v2084
    %2120 = vmatprep.subr.mxu0 0.0
    %2121 = vmatpush1.msra.mxu0 %v2085
    %2122 = vmatprep.subr.mxu0 0.0
    %2123 = vmatpush1.msra.mxu0 %v2086
    %2124 = vmatprep.subr.mxu0 0.0
    %2125 = vmatpush1.msra.mxu0 %v2087
    %2126 = vmatprep.subr.mxu0 0.0
    %2127 = vmatpush1.msra.mxu0 0.0
    %2128 = vmatprep.subr.mxu0 0.0
    %2129 = vmatpush1.msra.mxu0 0.0
    %2130 = vmatprep.subr.mxu0 0.0
    %2131 = vmatpush1.msra.mxu0 0.0
    %2132 = vmatprep.subr.mxu0 0.0
    %2133 = vmatpush1.msra.mxu0 0.0
    %2134 = vmatprep.subr.mxu0 0.0
    %2135 = vmatpush1.msra.mxu0 0.0
    %2136 = vmatprep.subr.mxu0 0.0
    %2137 = vmatpush1.msra.mxu0 0.0
    %2138 = vmatprep.subr.mxu0 0.0
    %2139 = vmatpush1.msra.mxu0 0.0
    %2140 = vmatprep.subr.mxu0 0.0
    %2141 = vmatpush1.msra.mxu0 0.0
    %2142 = vmatprep.subr.mxu0 0.0
    %2143 = vmatpush1.msra.mxu0 0.0
    %2144 = vmatprep.subr.mxu0 0.0
    %2145 = vmatpush1.msra.mxu0 0.0
    %2146 = vmatprep.subr.mxu0 0.0
    %2147 = vmatpush1.msra.mxu0 0.0
    %2148 = vmatprep.subr.mxu0 0.0
    %2149 = vmatpush1.msra.mxu0 0.0
    %2150 = vmatprep.subr.mxu0 0.0
    %2151 = vmatpush1.msra.mxu0 0.0
    %2152 = vmatprep.subr.mxu0 0.0
    %2153 = vmatpush1.msra.mxu0 0.0
    %2154 = vmatprep.subr.mxu0 0.0
    %2155 = vmatpush1.msra.mxu0 0.0
    %2156 = vmatprep.subr.mxu0 0.0
    %2157 = vmatpush1.msra.mxu0 0.0
    %2158 = vmatprep.subr.mxu0 0.0
    %2159 = vmatpush1.msra.mxu0 0.0
    %2160 = vmatprep.subr.mxu0 0.0
    %2161 = vmatpush1.msra.mxu0 0.0
    %2162 = vmatprep.subr.mxu0 0.0
    %2163 = vmatpush1.msra.mxu0 0.0
    %2164 = vmatprep.subr.mxu0 0.0
    %2165 = vmatpush1.msra.mxu0 0.0
    %2166 = vmatprep.subr.mxu0 0.0
    %2167 = vmatpush1.msra.mxu0 0.0
    %2168 = vmatprep.subr.mxu0 0.0
    %2169 = vmatpush1.msra.mxu0 0.0
    %2170 = vmatprep.subr.mxu0 0.0
    %2171 = vmatpush1.msra.mxu0 0.0
    %2172 = vmatprep.subr.mxu0 0.0
    %2173 = vmatpush1.msra.mxu0 0.0
    %2174 = vmatprep.subr.mxu0 0.0
    %2175 = vmatpush1.msra.mxu0 0.0
    %2176 = vmatprep.subr.mxu0 0.0
    %2177 = vmatpush1.msra.mxu0 0.0
    %2178 = vmatprep.subr.mxu0 0.0
    %2179 = vmatpush1.msra.mxu0 0.0
    %2180 = vmatprep.subr.mxu0 0.0
    %2181 = vmatpush1.msra.mxu0 0.0
    %2182 = vmatprep.mubr.f32.mxu0 0.0
    %2183 = vmatmul.mubr.f32.gmra.mrb[0].mxu0 %v2089
    %v2184 = vpop.f32.mrb[0].mxu0
    %v2185 = vadd.f32 0.0, %v2184
    %v2186 = vpop.f32.mrb[0].mxu0
    %2187 = vmatprep.mubr.f32.mxu0 0.0
    %2188 = vmatmul.mubr.f32.gmra.mrb[0].mxu0 %v2092
    %v2189 = vpop.f32.mrb[0].mxu0
    %v2190 = vadd.f32 0.0, %v2189
    %v2191 = vpop.f32.mrb[0].mxu0
    %2192 = vmatprep.mubr.f32.mxu0 0.0
    %2193 = vmatmul.mubr.f32.gmra.mrb[0].mxu0 %v2095
    %v2194 = vpop.f32.mrb[0].mxu0
    %v2195 = vadd.f32 0.0, %v2194
    %v2196 = vpop.f32.mrb[0].mxu0
    %2197 = vmatprep.mubr.f32.mxu0 0.0
    %2198 = vmatmul.mubr.f32.gmra.mrb[0].mxu0 %v2098
    %v2199 = vpop.f32.mrb[0].mxu0
    %v2200 = vadd.f32 0.0, %v2199
    %v2201 = vpop.f32.mrb[0].mxu0
    %2202 = vmatprep.mubr.f32.mxu0 0.0
    %2203 = vmatmul.mubr.f32.gmra.mrb[0].mxu0 %v2101
    %v2204 = vpop.f32.mrb[0].mxu0
    %v2205 = vadd.f32 0.0, %v2204
    %v2206 = vpop.f32.mrb[0].mxu0
    %2207 = vmatprep.mubr.f32.mxu0 0.0
    %2208 = vmatmul.mubr.f32.gmra.mrb[0].mxu0 %v2104
    %v2209 = vpop.f32.mrb[0].mxu0
    %v2210 = vadd.f32 0.0, %v2209
    %v2211 = vpop.f32.mrb[0].mxu0
    %2212 = vmatprep.mubr.f32.mxu0 0.0
    %2213 = vmatmul.mubr.f32.gmra.mrb[0].mxu0 %v2107
    %v2214 = vpop.f32.mrb[0].mxu0
    %v2215 = vadd.f32 0.0, %v2214
    %v2216 = vpop.f32.mrb[0].mxu0
    %2217 = vmatprep.mubr.f32.mxu0 0.0
    %2218 = vmatmul.mubr.f32.gmra.mrb[0].mxu0 %v2110
    %v2219 = vpop.f32.mrb[0].mxu0
    %v2220 = vadd.f32 0.0, %v2219
    %v2221 = vpop.f32.mrb[0].mxu0
    %2222 = vmatprep.mubr.f32.mxu0 0.0
    %2223 = vmatmul.mubr.f32.gmra.mrb[0].mxu0 %v2113
    %v2224 = vpop.f32.mrb[0].mxu0
    %v2225 = vadd.f32 0.0, %v2224
    %v2226 = vpop.f32.mrb[0].mxu0
    %2227 = vmatprep.mubr.f32.mxu0 0.0
    %2228 = vmatmul.mubr.f32.gmra.mrb[0].mxu0 %v2116
    %v2229 = vpop.f32.mrb[0].mxu0
    %v2230 = vadd.f32 0.0, %v2229
    %v2231 = vpop.f32.mrb[0].mxu0
    %2232 = vdwg.mxu0
    %v2233 = vadd.f32 %v2063, %v2185
    %v2234 = vadd.f32 %v2064, %v2190
    %v2235 = vadd.f32 %v2065, %v2195
    %v2236 = vadd.f32 %v2066, %v2200
    %v2237 = vadd.f32 %v2067, %v2205
    %v2238 = vadd.f32 %v2068, %v2210
    %v2239 = vadd.f32 %v2069, %v2215
    %v2240 = vadd.f32 %v2070, %v2220
    %v2241 = vadd.f32 %v2071, %v2225
    %v2242 = vadd.f32 %v2072, %v2230
    %v2243 = vld [vmem:[#allocation2 + $0x15] sm:$0xff]
    %v2244 = vld [vmem:[#allocation2 + $0x1d] sm:$0xff]
    %v2245 = vld [vmem:[#allocation2 + $0x25] sm:$0xff]
    %v2246 = vld [vmem:[#allocation2 + $0x2d] sm:$0xff]
    %v2247 = vld [vmem:[#allocation2 + $0x35] sm:$0xff]
    %v2248 = vld [vmem:[#allocation2 + $0x3d] sm:$0xff]
    %v2249 = vld [vmem:[#allocation2 + $0x45] sm:$0xff]
    %v2250 = vld [vmem:[#allocation2 + $0x4d] sm:$0xff]
    %v2251 = vld [vmem:[#allocation2 + $0x55] sm:$0xff]
    %v2252 = vld [vmem:[#allocation2 + $0x5d] sm:$0x3f]
    %s2253 = scalar_lea.vmem %s7, 224
    %v2254 = vld [vmem:[%s2253] sm:$0xff]
    %v2255 = vld [vmem:[%s2253 + $0x8] sm:$0xff]
    %v2256 = vld [vmem:[%s2253 + $0x10] sm:$0xff]
    %v2257 = vld [vmem:[%s2253 + $0x18] sm:$0xff]
    %v2259 = vsel %vm130, %v2243, 0
    %v2262 = vsel %vm130, %v2244, 0
    %v2265 = vsel %vm130, %v2245, 0
    %v2268 = vsel %vm130, %v2246, 0
    %v2271 = vsel %vm130, %v2247, 0
    %v2274 = vsel %vm130, %v2248, 0
    %v2277 = vsel %vm130, %v2249, 0
    %v2280 = vsel %vm130, %v2250, 0
    %v2283 = vsel %vm130, %v2251, 0
    %v2286 = vsel %vm130, %v2252, 0
    %2288 = vmatprep.subr.mxu0 0.0
    %2289 = vmatpush1.msra.mxu0 %v2254
    %2290 = vmatprep.subr.mxu0 0.0
    %2291 = vmatpush1.msra.mxu0 %v2255
    %2292 = vmatprep.subr.mxu0 0.0
    %2293 = vmatpush1.msra.mxu0 %v2256
    %2294 = vmatprep.subr.mxu0 0.0
    %2295 = vmatpush1.msra.mxu0 %v2257
    %2296 = vmatprep.subr.mxu0 0.0
    %2297 = vmatpush1.msra.mxu0 0.0
    %2298 = vmatprep.subr.mxu0 0.0
    %2299 = vmatpush1.msra.mxu0 0.0
    %2300 = vmatprep.subr.mxu0 0.0
    %2301 = vmatpush1.msra.mxu0 0.0
    %2302 = vmatprep.subr.mxu0 0.0
    %2303 = vmatpush1.msra.mxu0 0.0
    %2304 = vmatprep.subr.mxu0 0.0
    %2305 = vmatpush1.msra.mxu0 0.0
    %2306 = vmatprep.subr.mxu0 0.0
    %2307 = vmatpush1.msra.mxu0 0.0
    %2308 = vmatprep.subr.mxu0 0.0
    %2309 = vmatpush1.msra.mxu0 0.0
    %2310 = vmatprep.subr.mxu0 0.0
    %2311 = vmatpush1.msra.mxu0 0.0
    %2312 = vmatprep.subr.mxu0 0.0
    %2313 = vmatpush1.msra.mxu0 0.0
    %2314 = vmatprep.subr.mxu0 0.0
    %2315 = vmatpush1.msra.mxu0 0.0
    %2316 = vmatprep.subr.mxu0 0.0
    %2317 = vmatpush1.msra.mxu0 0.0
    %2318 = vmatprep.subr.mxu0 0.0
    %2319 = vmatpush1.msra.mxu0 0.0
    %2320 = vmatprep.subr.mxu0 0.0
    %2321 = vmatpush1.msra.mxu0 0.0
    %2322 = vmatprep.subr.mxu0 0.0
    %2323 = vmatpush1.msra.mxu0 0.0
    %2324 = vmatprep.subr.mxu0 0.0
    %2325 = vmatpush1.msra.mxu0 0.0
    %2326 = vmatprep.subr.mxu0 0.0
    %2327 = vmatpush1.msra.mxu0 0.0
    %2328 = vmatprep.subr.mxu0 0.0
    %2329 = vmatpush1.msra.mxu0 0.0
    %2330 = vmatprep.subr.mxu0 0.0
    %2331 = vmatpush1.msra.mxu0 0.0
    %2332 = vmatprep.subr.mxu0 0.0
    %2333 = vmatpush1.msra.mxu0 0.0
    %2334 = vmatprep.subr.mxu0 0.0
    %2335 = vmatpush1.msra.mxu0 0.0
    %2336 = vmatprep.subr.mxu0 0.0
    %2337 = vmatpush1.msra.mxu0 0.0
    %2338 = vmatprep.subr.mxu0 0.0
    %2339 = vmatpush1.msra.mxu0 0.0
    %2340 = vmatprep.subr.mxu0 0.0
    %2341 = vmatpush1.msra.mxu0 0.0
    %2342 = vmatprep.subr.mxu0 0.0
    %2343 = vmatpush1.msra.mxu0 0.0
    %2344 = vmatprep.subr.mxu0 0.0
    %2345 = vmatpush1.msra.mxu0 0.0
    %2346 = vmatprep.subr.mxu0 0.0
    %2347 = vmatpush1.msra.mxu0 0.0
    %2348 = vmatprep.subr.mxu0 0.0
    %2349 = vmatpush1.msra.mxu0 0.0
    %2350 = vmatprep.subr.mxu0 0.0
    %2351 = vmatpush1.msra.mxu0 0.0
    %2352 = vmatprep.mubr.f32.mxu0 0.0
    %2353 = vmatmul.mubr.f32.gmra.mrb[0].mxu0 %v2259
    %v2354 = vpop.f32.mrb[0].mxu0
    %v2355 = vadd.f32 0.0, %v2354
    %v2356 = vpop.f32.mrb[0].mxu0
    %2357 = vmatprep.mubr.f32.mxu0 0.0
    %2358 = vmatmul.mubr.f32.gmra.mrb[0].mxu0 %v2262
    %v2359 = vpop.f32.mrb[0].mxu0
    %v2360 = vadd.f32 0.0, %v2359
    %v2361 = vpop.f32.mrb[0].mxu0
    %2362 = vmatprep.mubr.f32.mxu0 0.0
    %2363 = vmatmul.mubr.f32.gmra.mrb[0].mxu0 %v2265
    %v2364 = vpop.f32.mrb[0].mxu0
    %v2365 = vadd.f32 0.0, %v2364
    %v2366 = vpop.f32.mrb[0].mxu0
    %2367 = vmatprep.mubr.f32.mxu0 0.0
    %2368 = vmatmul.mubr.f32.gmra.mrb[0].mxu0 %v2268
    %v2369 = vpop.f32.mrb[0].mxu0
    %v2370 = vadd.f32 0.0, %v2369
    %v2371 = vpop.f32.mrb[0].mxu0
    %2372 = vmatprep.mubr.f32.mxu0 0.0
    %2373 = vmatmul.mubr.f32.gmra.mrb[0].mxu0 %v2271
    %v2374 = vpop.f32.mrb[0].mxu0
    %v2375 = vadd.f32 0.0, %v2374
    %v2376 = vpop.f32.mrb[0].mxu0
    %2377 = vmatprep.mubr.f32.mxu0 0.0
    %2378 = vmatmul.mubr.f32.gmra.mrb[0].mxu0 %v2274
    %v2379 = vpop.f32.mrb[0].mxu0
    %v2380 = vadd.f32 0.0, %v2379
    %v2381 = vpop.f32.mrb[0].mxu0
    %2382 = vmatprep.mubr.f32.mxu0 0.0
    %2383 = vmatmul.mubr.f32.gmra.mrb[0].mxu0 %v2277
    %v2384 = vpop.f32.mrb[0].mxu0
    %v2385 = vadd.f32 0.0, %v2384
    %v2386 = vpop.f32.mrb[0].mxu0
    %2387 = vmatprep.mubr.f32.mxu0 0.0
    %2388 = vmatmul.mubr.f32.gmra.mrb[0].mxu0 %v2280
    %v2389 = vpop.f32.mrb[0].mxu0
    %v2390 = vadd.f32 0.0, %v2389
    %v2391 = vpop.f32.mrb[0].mxu0
    %2392 = vmatprep.mubr.f32.mxu0 0.0
    %2393 = vmatmul.mubr.f32.gmra.mrb[0].mxu0 %v2283
    %v2394 = vpop.f32.mrb[0].mxu0
    %v2395 = vadd.f32 0.0, %v2394
    %v2396 = vpop.f32.mrb[0].mxu0
    %2397 = vmatprep.mubr.f32.mxu0 0.0
    %2398 = vmatmul.mubr.f32.gmra.mrb[0].mxu0 %v2286
    %v2399 = vpop.f32.mrb[0].mxu0
    %v2400 = vadd.f32 0.0, %v2399
    %v2401 = vpop.f32.mrb[0].mxu0
    %2402 = vdwg.mxu0
    %v2403 = vadd.f32 %v2233, %v2355
    %v2404 = vadd.f32 %v2234, %v2360
    %v2405 = vadd.f32 %v2235, %v2365
    %v2406 = vadd.f32 %v2236, %v2370
    %v2407 = vadd.f32 %v2237, %v2375
    %v2408 = vadd.f32 %v2238, %v2380
    %v2409 = vadd.f32 %v2239, %v2385
    %v2410 = vadd.f32 %v2240, %v2390
    %v2411 = vadd.f32 %v2241, %v2395
    %v2412 = vadd.f32 %v2242, %v2400
    %v2413 = vld [vmem:[#allocation2 + $0x16] sm:$0xff]
    %v2414 = vld [vmem:[#allocation2 + $0x1e] sm:$0xff]
    %v2415 = vld [vmem:[#allocation2 + $0x26] sm:$0xff]
    %v2416 = vld [vmem:[#allocation2 + $0x2e] sm:$0xff]
    %v2417 = vld [vmem:[#allocation2 + $0x36] sm:$0xff]
    %v2418 = vld [vmem:[#allocation2 + $0x3e] sm:$0xff]
    %v2419 = vld [vmem:[#allocation2 + $0x46] sm:$0xff]
    %v2420 = vld [vmem:[#allocation2 + $0x4e] sm:$0xff]
    %v2421 = vld [vmem:[#allocation2 + $0x56] sm:$0xff]
    %v2422 = vld [vmem:[#allocation2 + $0x5e] sm:$0x3f]
    %s2423 = scalar_lea.vmem %s7, 256
    %v2424 = vld [vmem:[%s2423] sm:$0xff]
    %v2425 = vld [vmem:[%s2423 + $0x8] sm:$0xff]
    %v2426 = vld [vmem:[%s2423 + $0x10] sm:$0xff]
    %v2427 = vld [vmem:[%s2423 + $0x18] sm:$0xff]
    %v2429 = vsel %vm130, %v2413, 0
    %v2432 = vsel %vm130, %v2414, 0
    %v2435 = vsel %vm130, %v2415, 0
    %v2438 = vsel %vm130, %v2416, 0
    %v2441 = vsel %vm130, %v2417, 0
    %v2444 = vsel %vm130, %v2418, 0
    %v2447 = vsel %vm130, %v2419, 0
    %v2450 = vsel %vm130, %v2420, 0
    %v2453 = vsel %vm130, %v2421, 0
    %v2456 = vsel %vm130, %v2422, 0
    %2458 = vmatprep.subr.mxu0 0.0
    %2459 = vmatpush1.msra.mxu0 %v2424
    %2460 = vmatprep.subr.mxu0 0.0
    %2461 = vmatpush1.msra.mxu0 %v2425
    %2462 = vmatprep.subr.mxu0 0.0
    %2463 = vmatpush1.msra.mxu0 %v2426
    %2464 = vmatprep.subr.mxu0 0.0
    %2465 = vmatpush1.msra.mxu0 %v2427
    %2466 = vmatprep.subr.mxu0 0.0
    %2467 = vmatpush1.msra.mxu0 0.0
    %2468 = vmatprep.subr.mxu0 0.0
    %2469 = vmatpush1.msra.mxu0 0.0
    %2470 = vmatprep.subr.mxu0 0.0
    %2471 = vmatpush1.msra.mxu0 0.0
    %2472 = vmatprep.subr.mxu0 0.0
    %2473 = vmatpush1.msra.mxu0 0.0
    %2474 = vmatprep.subr.mxu0 0.0
    %2475 = vmatpush1.msra.mxu0 0.0
    %2476 = vmatprep.subr.mxu0 0.0
    %2477 = vmatpush1.msra.mxu0 0.0
    %2478 = vmatprep.subr.mxu0 0.0
    %2479 = vmatpush1.msra.mxu0 0.0
    %2480 = vmatprep.subr.mxu0 0.0
    %2481 = vmatpush1.msra.mxu0 0.0
    %2482 = vmatprep.subr.mxu0 0.0
    %2483 = vmatpush1.msra.mxu0 0.0
    %2484 = vmatprep.subr.mxu0 0.0
    %2485 = vmatpush1.msra.mxu0 0.0
    %2486 = vmatprep.subr.mxu0 0.0
    %2487 = vmatpush1.msra.mxu0 0.0
    %2488 = vmatprep.subr.mxu0 0.0
    %2489 = vmatpush1.msra.mxu0 0.0
    %2490 = vmatprep.subr.mxu0 0.0
    %2491 = vmatpush1.msra.mxu0 0.0
    %2492 = vmatprep.subr.mxu0 0.0
    %2493 = vmatpush1.msra.mxu0 0.0
    %2494 = vmatprep.subr.mxu0 0.0
    %2495 = vmatpush1.msra.mxu0 0.0
    %2496 = vmatprep.subr.mxu0 0.0
    %2497 = vmatpush1.msra.mxu0 0.0
    %2498 = vmatprep.subr.mxu0 0.0
    %2499 = vmatpush1.msra.mxu0 0.0
    %2500 = vmatprep.subr.mxu0 0.0
    %2501 = vmatpush1.msra.mxu0 0.0
    %2502 = vmatprep.subr.mxu0 0.0
    %2503 = vmatpush1.msra.mxu0 0.0
    %2504 = vmatprep.subr.mxu0 0.0
    %2505 = vmatpush1.msra.mxu0 0.0
    %2506 = vmatprep.subr.mxu0 0.0
    %2507 = vmatpush1.msra.mxu0 0.0
    %2508 = vmatprep.subr.mxu0 0.0
    %2509 = vmatpush1.msra.mxu0 0.0
    %2510 = vmatprep.subr.mxu0 0.0
    %2511 = vmatpush1.msra.mxu0 0.0
    %2512 = vmatprep.subr.mxu0 0.0
    %2513 = vmatpush1.msra.mxu0 0.0
    %2514 = vmatprep.subr.mxu0 0.0
    %2515 = vmatpush1.msra.mxu0 0.0
    %2516 = vmatprep.subr.mxu0 0.0
    %2517 = vmatpush1.msra.mxu0 0.0
    %2518 = vmatprep.subr.mxu0 0.0
    %2519 = vmatpush1.msra.mxu0 0.0
    %2520 = vmatprep.subr.mxu0 0.0
    %2521 = vmatpush1.msra.mxu0 0.0
    %2522 = vmatprep.mubr.f32.mxu0 0.0
    %2523 = vmatmul.mubr.f32.gmra.mrb[0].mxu0 %v2429
    %v2524 = vpop.f32.mrb[0].mxu0
    %v2525 = vadd.f32 0.0, %v2524
    %v2526 = vpop.f32.mrb[0].mxu0
    %2527 = vmatprep.mubr.f32.mxu0 0.0
    %2528 = vmatmul.mubr.f32.gmra.mrb[0].mxu0 %v2432
    %v2529 = vpop.f32.mrb[0].mxu0
    %v2530 = vadd.f32 0.0, %v2529
    %v2531 = vpop.f32.mrb[0].mxu0
    %2532 = vmatprep.mubr.f32.mxu0 0.0
    %2533 = vmatmul.mubr.f32.gmra.mrb[0].mxu0 %v2435
    %v2534 = vpop.f32.mrb[0].mxu0
    %v2535 = vadd.f32 0.0, %v2534
    %v2536 = vpop.f32.mrb[0].mxu0
    %2537 = vmatprep.mubr.f32.mxu0 0.0
    %2538 = vmatmul.mubr.f32.gmra.mrb[0].mxu0 %v2438
    %v2539 = vpop.f32.mrb[0].mxu0
    %v2540 = vadd.f32 0.0, %v2539
    %v2541 = vpop.f32.mrb[0].mxu0
    %2542 = vmatprep.mubr.f32.mxu0 0.0
    %2543 = vmatmul.mubr.f32.gmra.mrb[0].mxu0 %v2441
    %v2544 = vpop.f32.mrb[0].mxu0
    %v2545 = vadd.f32 0.0, %v2544
    %v2546 = vpop.f32.mrb[0].mxu0
    %2547 = vmatprep.mubr.f32.mxu0 0.0
    %2548 = vmatmul.mubr.f32.gmra.mrb[0].mxu0 %v2444
    %v2549 = vpop.f32.mrb[0].mxu0
    %v2550 = vadd.f32 0.0, %v2549
    %v2551 = vpop.f32.mrb[0].mxu0
    %2552 = vmatprep.mubr.f32.mxu0 0.0
    %2553 = vmatmul.mubr.f32.gmra.mrb[0].mxu0 %v2447
    %v2554 = vpop.f32.mrb[0].mxu0
    %v2555 = vadd.f32 0.0, %v2554
    %v2556 = vpop.f32.mrb[0].mxu0
    %2557 = vmatprep.mubr.f32.mxu0 0.0
    %2558 = vmatmul.mubr.f32.gmra.mrb[0].mxu0 %v2450
    %v2559 = vpop.f32.mrb[0].mxu0
    %v2560 = vadd.f32 0.0, %v2559
    %v2561 = vpop.f32.mrb[0].mxu0
    %2562 = vmatprep.mubr.f32.mxu0 0.0
    %2563 = vmatmul.mubr.f32.gmra.mrb[0].mxu0 %v2453
    %v2564 = vpop.f32.mrb[0].mxu0
    %v2565 = vadd.f32 0.0, %v2564
    %v2566 = vpop.f32.mrb[0].mxu0
    %2567 = vmatprep.mubr.f32.mxu0 0.0
    %2568 = vmatmul.mubr.f32.gmra.mrb[0].mxu0 %v2456
    %v2569 = vpop.f32.mrb[0].mxu0
    %v2570 = vadd.f32 0.0, %v2569
    %v2571 = vpop.f32.mrb[0].mxu0
    %2572 = vdwg.mxu0
    %v2573 = vadd.f32 %v2403, %v2525
    %v2574 = vadd.f32 %v2404, %v2530
    %v2575 = vadd.f32 %v2405, %v2535
    %v2576 = vadd.f32 %v2406, %v2540
    %v2577 = vadd.f32 %v2407, %v2545
    %v2578 = vadd.f32 %v2408, %v2550
    %v2579 = vadd.f32 %v2409, %v2555
    %v2580 = vadd.f32 %v2410, %v2560
    %v2581 = vadd.f32 %v2411, %v2565
    %v2582 = vadd.f32 %v2412, %v2570
    %v2583 = vld [vmem:[%s8] sm:$0x1]
    %v2585 = vlaneseq
    %v2586 = vshrl.u32 %v2585, 7
    %v2587 = vsub.s32 0, %v2586
    %v2588 = vrot.slane %v2583, %v2587
    %v2590 = vadd.f32 %v2573, %v2588
    %v2591 = vadd.f32 %v2574, %v2588
    %v2592 = vadd.f32 %v2575, %v2588
    %v2593 = vadd.f32 %v2576, %v2588
    %v2594 = vadd.f32 %v2577, %v2588
    %v2595 = vadd.f32 %v2578, %v2588
    %v2596 = vadd.f32 %v2579, %v2588
    %v2597 = vadd.f32 %v2580, %v2588
    %v2598 = vadd.f32 %v2581, %v2588
    %v2599 = vadd.f32 %v2582, %v2588
    %v2600 = vtanh.pop %v2590
    %v2601 = vtanh.pop %v2591
    %v2602 = vtanh.pop %v2592
    %v2603 = vtanh.pop %v2593
    %v2604 = vtanh.pop %v2594
    %v2605 = vtanh.pop %v2595
    %v2606 = vtanh.pop %v2596
    %v2607 = vtanh.pop %v2597
    %v2608 = vtanh.pop %v2598
    %v2609 = vtanh.pop %v2599
    %2610 = vst.msk [vmem:[#allocation3 + $0xb] sm:$0xff] %vm130, %v2600
    %2611 = vst.msk [vmem:[#allocation3 + $0x13] sm:$0xff] %vm130, %v2601
    %2612 = vst.msk [vmem:[#allocation3 + $0x1b] sm:$0xff] %vm130, %v2602
    %2613 = vst.msk [vmem:[#allocation3 + $0x23] sm:$0xff] %vm130, %v2603
    %2614 = vst.msk [vmem:[#allocation3 + $0x2b] sm:$0xff] %vm130, %v2604
    %2615 = vst.msk [vmem:[#allocation3 + $0x33] sm:$0xff] %vm130, %v2605
    %2616 = vst.msk [vmem:[#allocation3 + $0x3b] sm:$0xff] %vm130, %v2606
    %2617 = vst.msk [vmem:[#allocation3 + $0x43] sm:$0xff] %vm130, %v2607
    %2618 = vst.msk [vmem:[#allocation3 + $0x4b] sm:$0xff] %vm130, %v2608
    %2619 = vst.msk [vmem:[#allocation3 + $0x53] sm:$0x3f] %vm1072, %v2609
    %v2620 = vld [vmem:[#allocation3 + $0xb] sm:$0xff]
    %v2621 = vld [vmem:[#allocation3 + $0x13] sm:$0xff]
    %v2622 = vld [vmem:[#allocation3 + $0x1b] sm:$0xff]
    %v2623 = vld [vmem:[#allocation3 + $0x23] sm:$0xff]
    %v2624 = vld [vmem:[#allocation3 + $0x2b] sm:$0xff]
    %v2625 = vld [vmem:[#allocation3 + $0x33] sm:$0xff]
    %v2626 = vld [vmem:[#allocation3 + $0x3b] sm:$0xff]
    %v2627 = vld [vmem:[#allocation3 + $0x43] sm:$0xff]
    %v2628 = vld [vmem:[#allocation3 + $0x4b] sm:$0x7]
    %v2629 = vld [vmem:[#allocation3 + $0xc] sm:$0xff]
    %v2630 = vld [vmem:[#allocation3 + $0x14] sm:$0xff]
    %v2631 = vld [vmem:[#allocation3 + $0x1c] sm:$0xff]
    %v2632 = vld [vmem:[#allocation3 + $0x24] sm:$0xff]
    %v2633 = vld [vmem:[#allocation3 + $0x2c] sm:$0xff]
    %v2634 = vld [vmem:[#allocation3 + $0x34] sm:$0xff]
    %v2635 = vld [vmem:[#allocation3 + $0x3c] sm:$0xff]
    %v2636 = vld [vmem:[#allocation3 + $0x44] sm:$0xff]
    %v2637 = vld [vmem:[#allocation3 + $0x4c] sm:$0x7]
    %v2638 = vld [vmem:[#allocation3 + $0x15] sm:$0xff]
    %v2639 = vld [vmem:[#allocation3 + $0x1d] sm:$0xff]
    %v2640 = vld [vmem:[#allocation3 + $0x25] sm:$0xff]
    %v2641 = vld [vmem:[#allocation3 + $0x2d] sm:$0xff]
    %v2642 = vld [vmem:[#allocation3 + $0x35] sm:$0xff]
    %v2643 = vld [vmem:[#allocation3 + $0x3d] sm:$0xff]
    %v2644 = vld [vmem:[#allocation3 + $0x45] sm:$0xff]
    %v2645 = vld [vmem:[#allocation3 + $0x4d] sm:$0xff]
    %v2646 = vld [vmem:[#allocation3 + $0x55] sm:$0x7]
    %v2647 = vld [vmem:[#allocation3 + $0x16] sm:$0xff]
    %v2648 = vld [vmem:[#allocation3 + $0x1e] sm:$0xff]
    %v2649 = vld [vmem:[#allocation3 + $0x26] sm:$0xff]
    %v2650 = vld [vmem:[#allocation3 + $0x2e] sm:$0xff]
    %v2651 = vld [vmem:[#allocation3 + $0x36] sm:$0xff]
    %v2652 = vld [vmem:[#allocation3 + $0x3e] sm:$0xff]
    %v2653 = vld [vmem:[#allocation3 + $0x46] sm:$0xff]
    %v2654 = vld [vmem:[#allocation3 + $0x4e] sm:$0xff]
    %v2655 = vld [vmem:[#allocation3 + $0x56] sm:$0x7]
    %v2656 = vmax.f32 %v2620, %v2629
    %v2657 = vmax.f32 %v2621, %v2630
    %v2658 = vmax.f32 %v2622, %v2631
    %v2659 = vmax.f32 %v2623, %v2632
    %v2660 = vmax.f32 %v2624, %v2633
    %v2661 = vmax.f32 %v2625, %v2634
    %v2662 = vmax.f32 %v2626, %v2635
    %v2663 = vmax.f32 %v2627, %v2636
    %v2664 = vmax.f32 %v2628, %v2637
    %v2665 = vmax.f32 %v2638, %v2647
    %v2666 = vmax.f32 %v2639, %v2648
    %v2667 = vmax.f32 %v2640, %v2649
    %v2668 = vmax.f32 %v2641, %v2650
    %v2669 = vmax.f32 %v2642, %v2651
    %v2670 = vmax.f32 %v2643, %v2652
    %v2671 = vmax.f32 %v2644, %v2653
    %v2672 = vmax.f32 %v2645, %v2654
    %v2673 = vmax.f32 %v2646, %v2655
    %v2674 = vmax.f32 %v2656, %v2665
    %v2675 = vmax.f32 %v2657, %v2666
    %v2676 = vmax.f32 %v2658, %v2667
    %v2677 = vmax.f32 %v2659, %v2668
    %v2678 = vmax.f32 %v2660, %v2669
    %v2679 = vmax.f32 %v2661, %v2670
    %v2680 = vmax.f32 %v2662, %v2671
    %v2681 = vmax.f32 %v2663, %v2672
    %v2682 = vmax.f32 %v2664, %v2673
    %v2683 = vld [vmem:[#allocation9] sm:$0xff]
    %v2684 = vld [vmem:[#allocation9 + $0x8] sm:$0xff]
    %v2685 = vld [vmem:[#allocation9 + $0x10] sm:$0x3f]
    %vm2686 = vcmask 547840
    %v2688 = vsel %vm2686, %v2683, 0
    %v2691 = vsel %vm2686, %v2684, 0
    %v2694 = vsel %vm2686, %v2685, 0
    %vm2696 = vcmask 1042432
    %v2698 = vsel %vm2696, %v2682, 0
    %2700 = vmatprep.subr.mxu0 0.0
    %2701 = vmatpush1.msra.mxu0 %v2674
    %2702 = vmatprep.subr.mxu0 0.0
    %2703 = vmatpush1.msra.mxu0 %v2675
    %2704 = vmatprep.subr.mxu0 0.0
    %2705 = vmatpush1.msra.mxu0 %v2676
    %2706 = vmatprep.subr.mxu0 0.0
    %2707 = vmatpush1.msra.mxu0 %v2677
    %2708 = vmatprep.subr.mxu0 0.0
    %2709 = vmatpush1.msra.mxu0 %v2678
    %2710 = vmatprep.subr.mxu0 0.0
    %2711 = vmatpush1.msra.mxu0 %v2679
    %2712 = vmatprep.subr.mxu0 0.0
    %2713 = vmatpush1.msra.mxu0 %v2680
    %2714 = vmatprep.subr.mxu0 0.0
    %2715 = vmatpush1.msra.mxu0 %v2681
    %2716 = vmatprep.subr.mxu0 0.0
    %2717 = vmatpush1.msra.mxu0 %v2698
    %2718 = vmatprep.subr.mxu0 0.0
    %2719 = vmatpush1.msra.mxu0 0.0
    %2720 = vmatprep.subr.mxu0 0.0
    %2721 = vmatpush1.msra.mxu0 0.0
    %2722 = vmatprep.subr.mxu0 0.0
    %2723 = vmatpush1.msra.mxu0 0.0
    %2724 = vmatprep.subr.mxu0 0.0
    %2725 = vmatpush1.msra.mxu0 0.0
    %2726 = vmatprep.subr.mxu0 0.0
    %2727 = vmatpush1.msra.mxu0 0.0
    %2728 = vmatprep.subr.mxu0 0.0
    %2729 = vmatpush1.msra.mxu0 0.0
    %2730 = vmatprep.subr.mxu0 0.0
    %2731 = vmatpush1.msra.mxu0 0.0
    %2732 = vmatprep.subr.mxu0 0.0
    %2733 = vmatpush1.msra.mxu0 0.0
    %2734 = vmatprep.subr.mxu0 0.0
    %2735 = vmatpush1.msra.mxu0 0.0
    %2736 = vmatprep.subr.mxu0 0.0
    %2737 = vmatpush1.msra.mxu0 0.0
    %2738 = vmatprep.subr.mxu0 0.0
    %2739 = vmatpush1.msra.mxu0 0.0
    %2740 = vmatprep.subr.mxu0 0.0
    %2741 = vmatpush1.msra.mxu0 0.0
    %2742 = vmatprep.subr.mxu0 0.0
    %2743 = vmatpush1.msra.mxu0 0.0
    %2744 = vmatprep.subr.mxu0 0.0
    %2745 = vmatpush1.msra.mxu0 0.0
    %2746 = vmatprep.subr.mxu0 0.0
    %2747 = vmatpush1.msra.mxu0 0.0
    %2748 = vmatprep.subr.mxu0 0.0
    %2749 = vmatpush1.msra.mxu0 0.0
    %2750 = vmatprep.subr.mxu0 0.0
    %2751 = vmatpush1.msra.mxu0 0.0
    %2752 = vmatprep.subr.mxu0 0.0
    %2753 = vmatpush1.msra.mxu0 0.0
    %2754 = vmatprep.subr.mxu0 0.0
    %2755 = vmatpush1.msra.mxu0 0.0
    %2756 = vmatprep.subr.mxu0 0.0
    %2757 = vmatpush1.msra.mxu0 0.0
    %2758 = vmatprep.subr.mxu0 0.0
    %2759 = vmatpush1.msra.mxu0 0.0
    %2760 = vmatprep.subr.mxu0 0.0
    %2761 = vmatpush1.msra.mxu0 0.0
    %2762 = vmatprep.subr.mxu0 0.0
    %2763 = vmatpush1.msra.mxu0 0.0
    %2764 = vmatprep.mubr.f32.mxu0 0.0
    %2765 = vmatmul.mubr.f32.gmra.mrb[0].mxu0 %v2688
    %v2766 = vpop.f32.mrb[0].mxu0
    %v2767 = vadd.f32 0.0, %v2766
    %v2768 = vpop.f32.mrb[0].mxu0
    %2769 = vmatprep.mubr.f32.mxu0 0.0
    %2770 = vmatmul.mubr.f32.gmra.mrb[0].mxu0 %v2691
    %v2771 = vpop.f32.mrb[0].mxu0
    %v2772 = vadd.f32 0.0, %v2771
    %v2773 = vpop.f32.mrb[0].mxu0
    %2774 = vmatprep.mubr.f32.mxu0 0.0
    %2775 = vmatmul.mubr.f32.gmra.mrb[0].mxu0 %v2694
    %v2776 = vpop.f32.mrb[0].mxu0
    %v2777 = vadd.f32 0.0, %v2776
    %v2778 = vpop.f32.mrb[0].mxu0
    %2779 = vdwg.mxu0
    %2780 = vst.msk [vmem:[#allocation4 + $0x7] sm:$0xff] %vm130, %v2767
    %2781 = vst.msk [vmem:[#allocation4 + $0xf] sm:$0xff] %vm130, %v2772
    %2782 = vst.msk [vmem:[#allocation4 + $0x17] sm:$0x3f] %vm1072, %v2777
    %v2783 = vld [vmem:[%s2] sm:$0xff]
    %v2784 = vld [vmem:[%s2 + $0x8] sm:$0xff]
    %v2785 = vld [vmem:[%s2 + $0x10] sm:$0x3f]
    %v2786 = vld [vmem:[#allocation4] sm:$0xff]
    %v2787 = vld [vmem:[#allocation4 + $0x8] sm:$0xff]
    %v2788 = vld [vmem:[#allocation4 + $0x10] sm:$0x3f]
    %v2789 = vld [vmem:[#allocation12] sm:$0xff]
    %v2790 = vld [vmem:[#allocation12 + $0x8] sm:$0xff]
    %v2791 = vld [vmem:[#allocation12 + $0x10] sm:$0xff]
    %v2792 = vld [vmem:[#allocation12 + $0x18] sm:$0xff]
    %v2793 = vld [vmem:[#allocation4 + $0x1] sm:$0xff]
    %v2794 = vld [vmem:[#allocation4 + $0x9] sm:$0xff]
    %v2795 = vld [vmem:[#allocation4 + $0x11] sm:$0x3f]
    %s2796 = scalar_lea.vmem [#allocation12], 32
    %v2797 = vld [vmem:[%s2796] sm:$0xff]
    %v2798 = vld [vmem:[%s2796 + $0x8] sm:$0xff]
    %v2799 = vld [vmem:[%s2796 + $0x10] sm:$0xff]
    %v2800 = vld [vmem:[%s2796 + $0x18] sm:$0xff]
    %v2802 = vsel %vm130, %v2793, 0
    %v2805 = vsel %vm130, %v2794, 0
    %v2808 = vsel %vm130, %v2795, 0
    %2810 = vmatprep.subr.mxu0 0.0
    %2811 = vmatpush1.msra.mxu0 %v2797
    %2812 = vmatprep.subr.mxu0 0.0
    %2813 = vmatpush1.msra.mxu0 %v2798
    %2814 = vmatprep.subr.mxu0 0.0
    %2815 = vmatpush1.msra.mxu0 %v2799
    %2816 = vmatprep.subr.mxu0 0.0
    %2817 = vmatpush1.msra.mxu0 %v2800
    %2818 = vmatprep.subr.mxu0 0.0
    %2819 = vmatpush1.msra.mxu0 0.0
    %2820 = vmatprep.subr.mxu0 0.0
    %2821 = vmatpush1.msra.mxu0 0.0
    %2822 = vmatprep.subr.mxu0 0.0
    %2823 = vmatpush1.msra.mxu0 0.0
    %2824 = vmatprep.subr.mxu0 0.0
    %2825 = vmatpush1.msra.mxu0 0.0
    %2826 = vmatprep.subr.mxu0 0.0
    %2827 = vmatpush1.msra.mxu0 0.0
    %2828 = vmatprep.subr.mxu0 0.0
    %2829 = vmatpush1.msra.mxu0 0.0
    %2830 = vmatprep.subr.mxu0 0.0
    %2831 = vmatpush1.msra.mxu0 0.0
    %2832 = vmatprep.subr.mxu0 0.0
    %2833 = vmatpush1.msra.mxu0 0.0
    %2834 = vmatprep.subr.mxu0 0.0
    %2835 = vmatpush1.msra.mxu0 0.0
    %2836 = vmatprep.subr.mxu0 0.0
    %2837 = vmatpush1.msra.mxu0 0.0
    %2838 = vmatprep.subr.mxu0 0.0
    %2839 = vmatpush1.msra.mxu0 0.0
    %2840 = vmatprep.subr.mxu0 0.0
    %2841 = vmatpush1.msra.mxu0 0.0
    %2842 = vmatprep.subr.mxu0 0.0
    %2843 = vmatpush1.msra.mxu0 0.0
    %2844 = vmatprep.subr.mxu0 0.0
    %2845 = vmatpush1.msra.mxu0 0.0
    %2846 = vmatprep.subr.mxu0 0.0
    %2847 = vmatpush1.msra.mxu0 0.0
    %2848 = vmatprep.subr.mxu0 0.0
    %2849 = vmatpush1.msra.mxu0 0.0
    %2850 = vmatprep.subr.mxu0 0.0
    %2851 = vmatpush1.msra.mxu0 0.0
    %2852 = vmatprep.subr.mxu0 0.0
    %2853 = vmatpush1.msra.mxu0 0.0
    %2854 = vmatprep.subr.mxu0 0.0
    %2855 = vmatpush1.msra.mxu0 0.0
    %2856 = vmatprep.subr.mxu0 0.0
    %2857 = vmatpush1.msra.mxu0 0.0
    %2858 = vmatprep.subr.mxu0 0.0
    %2859 = vmatpush1.msra.mxu0 0.0
    %2860 = vmatprep.subr.mxu0 0.0
    %2861 = vmatpush1.msra.mxu0 0.0
    %2862 = vmatprep.subr.mxu0 0.0
    %2863 = vmatpush1.msra.mxu0 0.0
    %2864 = vmatprep.subr.mxu0 0.0
    %2865 = vmatpush1.msra.mxu0 0.0
    %2866 = vmatprep.subr.mxu0 0.0
    %2867 = vmatpush1.msra.mxu0 0.0
    %2868 = vmatprep.subr.mxu0 0.0
    %2869 = vmatpush1.msra.mxu0 0.0
    %2870 = vmatprep.subr.mxu0 0.0
    %2871 = vmatpush1.msra.mxu0 0.0
    %2872 = vmatprep.subr.mxu0 0.0
    %2873 = vmatpush1.msra.mxu0 0.0
    %2874 = vmatprep.mubr.f32.mxu0 0.0
    %2875 = vmatmul.mubr.f32.gmra.mrb[0].mxu0 %v2802
    %v2876 = vpop.f32.mrb[0].mxu0
    %v2877 = vadd.f32 0.0, %v2876
    %v2878 = vpop.f32.mrb[0].mxu0
    %2879 = vmatprep.mubr.f32.mxu0 0.0
    %2880 = vmatmul.mubr.f32.gmra.mrb[0].mxu0 %v2805
    %v2881 = vpop.f32.mrb[0].mxu0
    %v2882 = vadd.f32 0.0, %v2881
    %v2883 = vpop.f32.mrb[0].mxu0
    %2884 = vmatprep.mubr.f32.mxu0 0.0
    %2885 = vmatmul.mubr.f32.gmra.mrb[0].mxu0 %v2808
    %v2886 = vpop.f32.mrb[0].mxu0
    %v2887 = vadd.f32 0.0, %v2886
    %v2888 = vpop.f32.mrb[0].mxu0
    %2889 = vdwg.mxu0
    %v2891 = vsel %vm130, %v2786, 0
    %v2894 = vsel %vm130, %v2787, 0
    %v2897 = vsel %vm130, %v2788, 0
    %2899 = vmatprep.subr.mxu0 0.0
    %2900 = vmatpush1.msra.mxu0 %v2789
    %2901 = vmatprep.subr.mxu0 0.0
    %2902 = vmatpush1.msra.mxu0 %v2790
    %2903 = vmatprep.subr.mxu0 0.0
    %2904 = vmatpush1.msra.mxu0 %v2791
    %2905 = vmatprep.subr.mxu0 0.0
    %2906 = vmatpush1.msra.mxu0 %v2792
    %2907 = vmatprep.subr.mxu0 0.0
    %2908 = vmatpush1.msra.mxu0 0.0
    %2909 = vmatprep.subr.mxu0 0.0
    %2910 = vmatpush1.msra.mxu0 0.0
    %2911 = vmatprep.subr.mxu0 0.0
    %2912 = vmatpush1.msra.mxu0 0.0
    %2913 = vmatprep.subr.mxu0 0.0
    %2914 = vmatpush1.msra.mxu0 0.0
    %2915 = vmatprep.subr.mxu0 0.0
    %2916 = vmatpush1.msra.mxu0 0.0
    %2917 = vmatprep.subr.mxu0 0.0
    %2918 = vmatpush1.msra.mxu0 0.0
    %2919 = vmatprep.subr.mxu0 0.0
    %2920 = vmatpush1.msra.mxu0 0.0
    %2921 = vmatprep.subr.mxu0 0.0
    %2922 = vmatpush1.msra.mxu0 0.0
    %2923 = vmatprep.subr.mxu0 0.0
    %2924 = vmatpush1.msra.mxu0 0.0
    %2925 = vmatprep.subr.mxu0 0.0
    %2926 = vmatpush1.msra.mxu0 0.0
    %2927 = vmatprep.subr.mxu0 0.0
    %2928 = vmatpush1.msra.mxu0 0.0
    %2929 = vmatprep.subr.mxu0 0.0
    %2930 = vmatpush1.msra.mxu0 0.0
    %2931 = vmatprep.subr.mxu0 0.0
    %2932 = vmatpush1.msra.mxu0 0.0
    %2933 = vmatprep.subr.mxu0 0.0
    %2934 = vmatpush1.msra.mxu0 0.0
    %2935 = vmatprep.subr.mxu0 0.0
    %2936 = vmatpush1.msra.mxu0 0.0
    %2937 = vmatprep.subr.mxu0 0.0
    %2938 = vmatpush1.msra.mxu0 0.0
    %2939 = vmatprep.subr.mxu0 0.0
    %2940 = vmatpush1.msra.mxu0 0.0
    %2941 = vmatprep.subr.mxu0 0.0
    %2942 = vmatpush1.msra.mxu0 0.0
    %2943 = vmatprep.subr.mxu0 0.0
    %2944 = vmatpush1.msra.mxu0 0.0
    %2945 = vmatprep.subr.mxu0 0.0
    %2946 = vmatpush1.msra.mxu0 0.0
    %2947 = vmatprep.subr.mxu0 0.0
    %2948 = vmatpush1.msra.mxu0 0.0
    %2949 = vmatprep.subr.mxu0 0.0
    %2950 = vmatpush1.msra.mxu0 0.0
    %2951 = vmatprep.subr.mxu0 0.0
    %2952 = vmatpush1.msra.mxu0 0.0
    %2953 = vmatprep.subr.mxu0 0.0
    %2954 = vmatpush1.msra.mxu0 0.0
    %2955 = vmatprep.subr.mxu0 0.0
    %2956 = vmatpush1.msra.mxu0 0.0
    %2957 = vmatprep.subr.mxu0 0.0
    %2958 = vmatpush1.msra.mxu0 0.0
    %2959 = vmatprep.subr.mxu0 0.0
    %2960 = vmatpush1.msra.mxu0 0.0
    %2961 = vmatprep.subr.mxu0 0.0
    %2962 = vmatpush1.msra.mxu0 0.0
    %2963 = vmatprep.mubr.f32.mxu0 0.0
    %2964 = vmatmul.mubr.f32.gmra.mrb[0].mxu0 %v2891
    %v2965 = vpop.f32.mrb[0].mxu0
    %v2966 = vadd.f32 %v2877, %v2965
    %v2967 = vpop.f32.mrb[0].mxu0
    %2968 = vmatprep.mubr.f32.mxu0 0.0
    %2969 = vmatmul.mubr.f32.gmra.mrb[0].mxu0 %v2894
    %v2970 = vpop.f32.mrb[0].mxu0
    %v2971 = vadd.f32 %v2882, %v2970
    %v2972 = vpop.f32.mrb[0].mxu0
    %2973 = vmatprep.mubr.f32.mxu0 0.0
    %2974 = vmatmul.mubr.f32.gmra.mrb[0].mxu0 %v2897
    %v2975 = vpop.f32.mrb[0].mxu0
    %v2976 = vadd.f32 %v2887, %v2975
    %v2977 = vpop.f32.mrb[0].mxu0
    %2978 = vdwg.mxu0
    %v2979 = vld [vmem:[#allocation4 + $0x2] sm:$0xff]
    %v2980 = vld [vmem:[#allocation4 + $0xa] sm:$0xff]
    %v2981 = vld [vmem:[#allocation4 + $0x12] sm:$0x3f]
    %s2982 = scalar_lea.vmem [#allocation12], 64
    %v2983 = vld [vmem:[%s2982] sm:$0xff]
    %v2984 = vld [vmem:[%s2982 + $0x8] sm:$0xff]
    %v2985 = vld [vmem:[%s2982 + $0x10] sm:$0xff]
    %v2986 = vld [vmem:[%s2982 + $0x18] sm:$0xff]
    %v2988 = vsel %vm130, %v2979, 0
    %v2991 = vsel %vm130, %v2980, 0
    %v2994 = vsel %vm130, %v2981, 0
    %2996 = vmatprep.subr.mxu0 0.0
    %2997 = vmatpush1.msra.mxu0 %v2983
    %2998 = vmatprep.subr.mxu0 0.0
    %2999 = vmatpush1.msra.mxu0 %v2984
    %3000 = vmatprep.subr.mxu0 0.0
    %3001 = vmatpush1.msra.mxu0 %v2985
    %3002 = vmatprep.subr.mxu0 0.0
    %3003 = vmatpush1.msra.mxu0 %v2986
    %3004 = vmatprep.subr.mxu0 0.0
    %3005 = vmatpush1.msra.mxu0 0.0
    %3006 = vmatprep.subr.mxu0 0.0
    %3007 = vmatpush1.msra.mxu0 0.0
    %3008 = vmatprep.subr.mxu0 0.0
    %3009 = vmatpush1.msra.mxu0 0.0
    %3010 = vmatprep.subr.mxu0 0.0
    %3011 = vmatpush1.msra.mxu0 0.0
    %3012 = vmatprep.subr.mxu0 0.0
    %3013 = vmatpush1.msra.mxu0 0.0
    %3014 = vmatprep.subr.mxu0 0.0
    %3015 = vmatpush1.msra.mxu0 0.0
    %3016 = vmatprep.subr.mxu0 0.0
    %3017 = vmatpush1.msra.mxu0 0.0
    %3018 = vmatprep.subr.mxu0 0.0
    %3019 = vmatpush1.msra.mxu0 0.0
    %3020 = vmatprep.subr.mxu0 0.0
    %3021 = vmatpush1.msra.mxu0 0.0
    %3022 = vmatprep.subr.mxu0 0.0
    %3023 = vmatpush1.msra.mxu0 0.0
    %3024 = vmatprep.subr.mxu0 0.0
    %3025 = vmatpush1.msra.mxu0 0.0
    %3026 = vmatprep.subr.mxu0 0.0
    %3027 = vmatpush1.msra.mxu0 0.0
    %3028 = vmatprep.subr.mxu0 0.0
    %3029 = vmatpush1.msra.mxu0 0.0
    %3030 = vmatprep.subr.mxu0 0.0
    %3031 = vmatpush1.msra.mxu0 0.0
    %3032 = vmatprep.subr.mxu0 0.0
    %3033 = vmatpush1.msra.mxu0 0.0
    %3034 = vmatprep.subr.mxu0 0.0
    %3035 = vmatpush1.msra.mxu0 0.0
    %3036 = vmatprep.subr.mxu0 0.0
    %3037 = vmatpush1.msra.mxu0 0.0
    %3038 = vmatprep.subr.mxu0 0.0
    %3039 = vmatpush1.msra.mxu0 0.0
    %3040 = vmatprep.subr.mxu0 0.0
    %3041 = vmatpush1.msra.mxu0 0.0
    %3042 = vmatprep.subr.mxu0 0.0
    %3043 = vmatpush1.msra.mxu0 0.0
    %3044 = vmatprep.subr.mxu0 0.0
    %3045 = vmatpush1.msra.mxu0 0.0
    %3046 = vmatprep.subr.mxu0 0.0
    %3047 = vmatpush1.msra.mxu0 0.0
    %3048 = vmatprep.subr.mxu0 0.0
    %3049 = vmatpush1.msra.mxu0 0.0
    %3050 = vmatprep.subr.mxu0 0.0
    %3051 = vmatpush1.msra.mxu0 0.0
    %3052 = vmatprep.subr.mxu0 0.0
    %3053 = vmatpush1.msra.mxu0 0.0
    %3054 = vmatprep.subr.mxu0 0.0
    %3055 = vmatpush1.msra.mxu0 0.0
    %3056 = vmatprep.subr.mxu0 0.0
    %3057 = vmatpush1.msra.mxu0 0.0
    %3058 = vmatprep.subr.mxu0 0.0
    %3059 = vmatpush1.msra.mxu0 0.0
    %3060 = vmatprep.mubr.f32.mxu0 0.0
    %3061 = vmatmul.mubr.f32.gmra.mrb[0].mxu0 %v2988
    %v3062 = vpop.f32.mrb[0].mxu0
    %v3063 = vadd.f32 0.0, %v3062
    %v3064 = vpop.f32.mrb[0].mxu0
    %3065 = vmatprep.mubr.f32.mxu0 0.0
    %3066 = vmatmul.mubr.f32.gmra.mrb[0].mxu0 %v2991
    %v3067 = vpop.f32.mrb[0].mxu0
    %v3068 = vadd.f32 0.0, %v3067
    %v3069 = vpop.f32.mrb[0].mxu0
    %3070 = vmatprep.mubr.f32.mxu0 0.0
    %3071 = vmatmul.mubr.f32.gmra.mrb[0].mxu0 %v2994
    %v3072 = vpop.f32.mrb[0].mxu0
    %v3073 = vadd.f32 0.0, %v3072
    %v3074 = vpop.f32.mrb[0].mxu0
    %3075 = vdwg.mxu0
    %v3076 = vadd.f32 %v2966, %v3063
    %v3077 = vadd.f32 %v2971, %v3068
    %v3078 = vadd.f32 %v2976, %v3073
    %v3079 = vld [vmem:[#allocation4 + $0x6] sm:$0xff]
    %v3080 = vld [vmem:[#allocation4 + $0xe] sm:$0xff]
    %v3081 = vld [vmem:[#allocation4 + $0x16] sm:$0x3f]
    %s3082 = scalar_lea.vmem [#allocation12], 96
    %v3083 = vld [vmem:[%s3082] sm:$0xff]
    %v3084 = vld [vmem:[%s3082 + $0x8] sm:$0xff]
    %v3085 = vld [vmem:[%s3082 + $0x10] sm:$0xff]
    %v3086 = vld [vmem:[%s3082 + $0x18] sm:$0xff]
    %v3088 = vsel %vm130, %v3079, 0
    %v3091 = vsel %vm130, %v3080, 0
    %v3094 = vsel %vm130, %v3081, 0
    %3096 = vmatprep.subr.mxu0 0.0
    %3097 = vmatpush1.msra.mxu0 %v3083
    %3098 = vmatprep.subr.mxu0 0.0
    %3099 = vmatpush1.msra.mxu0 %v3084
    %3100 = vmatprep.subr.mxu0 0.0
    %3101 = vmatpush1.msra.mxu0 %v3085
    %3102 = vmatprep.subr.mxu0 0.0
    %3103 = vmatpush1.msra.mxu0 %v3086
    %3104 = vmatprep.subr.mxu0 0.0
    %3105 = vmatpush1.msra.mxu0 0.0
    %3106 = vmatprep.subr.mxu0 0.0
    %3107 = vmatpush1.msra.mxu0 0.0
    %3108 = vmatprep.subr.mxu0 0.0
    %3109 = vmatpush1.msra.mxu0 0.0
    %3110 = vmatprep.subr.mxu0 0.0
    %3111 = vmatpush1.msra.mxu0 0.0
    %3112 = vmatprep.subr.mxu0 0.0
    %3113 = vmatpush1.msra.mxu0 0.0
    %3114 = vmatprep.subr.mxu0 0.0
    %3115 = vmatpush1.msra.mxu0 0.0
    %3116 = vmatprep.subr.mxu0 0.0
    %3117 = vmatpush1.msra.mxu0 0.0
    %3118 = vmatprep.subr.mxu0 0.0
    %3119 = vmatpush1.msra.mxu0 0.0
    %3120 = vmatprep.subr.mxu0 0.0
    %3121 = vmatpush1.msra.mxu0 0.0
    %3122 = vmatprep.subr.mxu0 0.0
    %3123 = vmatpush1.msra.mxu0 0.0
    %3124 = vmatprep.subr.mxu0 0.0
    %3125 = vmatpush1.msra.mxu0 0.0
    %3126 = vmatprep.subr.mxu0 0.0
    %3127 = vmatpush1.msra.mxu0 0.0
    %3128 = vmatprep.subr.mxu0 0.0
    %3129 = vmatpush1.msra.mxu0 0.0
    %3130 = vmatprep.subr.mxu0 0.0
    %3131 = vmatpush1.msra.mxu0 0.0
    %3132 = vmatprep.subr.mxu0 0.0
    %3133 = vmatpush1.msra.mxu0 0.0
    %3134 = vmatprep.subr.mxu0 0.0
    %3135 = vmatpush1.msra.mxu0 0.0
    %3136 = vmatprep.subr.mxu0 0.0
    %3137 = vmatpush1.msra.mxu0 0.0
    %3138 = vmatprep.subr.mxu0 0.0
    %3139 = vmatpush1.msra.mxu0 0.0
    %3140 = vmatprep.subr.mxu0 0.0
    %3141 = vmatpush1.msra.mxu0 0.0
    %3142 = vmatprep.subr.mxu0 0.0
    %3143 = vmatpush1.msra.mxu0 0.0
    %3144 = vmatprep.subr.mxu0 0.0
    %3145 = vmatpush1.msra.mxu0 0.0
    %3146 = vmatprep.subr.mxu0 0.0
    %3147 = vmatpush1.msra.mxu0 0.0
    %3148 = vmatprep.subr.mxu0 0.0
    %3149 = vmatpush1.msra.mxu0 0.0
    %3150 = vmatprep.subr.mxu0 0.0
    %3151 = vmatpush1.msra.mxu0 0.0
    %3152 = vmatprep.subr.mxu0 0.0
    %3153 = vmatpush1.msra.mxu0 0.0
    %3154 = vmatprep.subr.mxu0 0.0
    %3155 = vmatpush1.msra.mxu0 0.0
    %3156 = vmatprep.subr.mxu0 0.0
    %3157 = vmatpush1.msra.mxu0 0.0
    %3158 = vmatprep.subr.mxu0 0.0
    %3159 = vmatpush1.msra.mxu0 0.0
    %3160 = vmatprep.mubr.f32.mxu0 0.0
    %3161 = vmatmul.mubr.f32.gmra.mrb[0].mxu0 %v3088
    %v3162 = vpop.f32.mrb[0].mxu0
    %v3163 = vadd.f32 0.0, %v3162
    %v3164 = vpop.f32.mrb[0].mxu0
    %3165 = vmatprep.mubr.f32.mxu0 0.0
    %3166 = vmatmul.mubr.f32.gmra.mrb[0].mxu0 %v3091
    %v3167 = vpop.f32.mrb[0].mxu0
    %v3168 = vadd.f32 0.0, %v3167
    %v3169 = vpop.f32.mrb[0].mxu0
    %3170 = vmatprep.mubr.f32.mxu0 0.0
    %3171 = vmatmul.mubr.f32.gmra.mrb[0].mxu0 %v3094
    %v3172 = vpop.f32.mrb[0].mxu0
    %v3173 = vadd.f32 0.0, %v3172
    %v3174 = vpop.f32.mrb[0].mxu0
    %3175 = vdwg.mxu0
    %v3176 = vadd.f32 %v3076, %v3163
    %v3177 = vadd.f32 %v3077, %v3168
    %v3178 = vadd.f32 %v3078, %v3173
    %v3179 = vld [vmem:[#allocation4 + $0x7] sm:$0xff]
    %v3180 = vld [vmem:[#allocation4 + $0xf] sm:$0xff]
    %v3181 = vld [vmem:[#allocation4 + $0x17] sm:$0x3f]
    %s3182 = scalar_lea.vmem [#allocation12], 128
    %v3183 = vld [vmem:[%s3182] sm:$0xff]
    %v3184 = vld [vmem:[%s3182 + $0x8] sm:$0xff]
    %v3185 = vld [vmem:[%s3182 + $0x10] sm:$0xff]
    %v3186 = vld [vmem:[%s3182 + $0x18] sm:$0xff]
    %v3188 = vsel %vm130, %v3179, 0
    %v3191 = vsel %vm130, %v3180, 0
    %v3194 = vsel %vm130, %v3181, 0
    %3196 = vmatprep.subr.mxu0 0.0
    %3197 = vmatpush1.msra.mxu0 %v3183
    %3198 = vmatprep.subr.mxu0 0.0
    %3199 = vmatpush1.msra.mxu0 %v3184
    %3200 = vmatprep.subr.mxu0 0.0
    %3201 = vmatpush1.msra.mxu0 %v3185
    %3202 = vmatprep.subr.mxu0 0.0
    %3203 = vmatpush1.msra.mxu0 %v3186
    %3204 = vmatprep.subr.mxu0 0.0
    %3205 = vmatpush1.msra.mxu0 0.0
    %3206 = vmatprep.subr.mxu0 0.0
    %3207 = vmatpush1.msra.mxu0 0.0
    %3208 = vmatprep.subr.mxu0 0.0
    %3209 = vmatpush1.msra.mxu0 0.0
    %3210 = vmatprep.subr.mxu0 0.0
    %3211 = vmatpush1.msra.mxu0 0.0
    %3212 = vmatprep.subr.mxu0 0.0
    %3213 = vmatpush1.msra.mxu0 0.0
    %3214 = vmatprep.subr.mxu0 0.0
    %3215 = vmatpush1.msra.mxu0 0.0
    %3216 = vmatprep.subr.mxu0 0.0
    %3217 = vmatpush1.msra.mxu0 0.0
    %3218 = vmatprep.subr.mxu0 0.0
    %3219 = vmatpush1.msra.mxu0 0.0
    %3220 = vmatprep.subr.mxu0 0.0
    %3221 = vmatpush1.msra.mxu0 0.0
    %3222 = vmatprep.subr.mxu0 0.0
    %3223 = vmatpush1.msra.mxu0 0.0
    %3224 = vmatprep.subr.mxu0 0.0
    %3225 = vmatpush1.msra.mxu0 0.0
    %3226 = vmatprep.subr.mxu0 0.0
    %3227 = vmatpush1.msra.mxu0 0.0
    %3228 = vmatprep.subr.mxu0 0.0
    %3229 = vmatpush1.msra.mxu0 0.0
    %3230 = vmatprep.subr.mxu0 0.0
    %3231 = vmatpush1.msra.mxu0 0.0
    %3232 = vmatprep.subr.mxu0 0.0
    %3233 = vmatpush1.msra.mxu0 0.0
    %3234 = vmatprep.subr.mxu0 0.0
    %3235 = vmatpush1.msra.mxu0 0.0
    %3236 = vmatprep.subr.mxu0 0.0
    %3237 = vmatpush1.msra.mxu0 0.0
    %3238 = vmatprep.subr.mxu0 0.0
    %3239 = vmatpush1.msra.mxu0 0.0
    %3240 = vmatprep.subr.mxu0 0.0
    %3241 = vmatpush1.msra.mxu0 0.0
    %3242 = vmatprep.subr.mxu0 0.0
    %3243 = vmatpush1.msra.mxu0 0.0
    %3244 = vmatprep.subr.mxu0 0.0
    %3245 = vmatpush1.msra.mxu0 0.0
    %3246 = vmatprep.subr.mxu0 0.0
    %3247 = vmatpush1.msra.mxu0 0.0
    %3248 = vmatprep.subr.mxu0 0.0
    %3249 = vmatpush1.msra.mxu0 0.0
    %3250 = vmatprep.subr.mxu0 0.0
    %3251 = vmatpush1.msra.mxu0 0.0
    %3252 = vmatprep.subr.mxu0 0.0
    %3253 = vmatpush1.msra.mxu0 0.0
    %3254 = vmatprep.subr.mxu0 0.0
    %3255 = vmatpush1.msra.mxu0 0.0
    %3256 = vmatprep.subr.mxu0 0.0
    %3257 = vmatpush1.msra.mxu0 0.0
    %3258 = vmatprep.subr.mxu0 0.0
    %3259 = vmatpush1.msra.mxu0 0.0
    %3260 = vmatprep.mubr.f32.mxu0 0.0
    %3261 = vmatmul.mubr.f32.gmra.mrb[0].mxu0 %v3188
    %v3262 = vpop.f32.mrb[0].mxu0
    %v3263 = vadd.f32 0.0, %v3262
    %v3264 = vpop.f32.mrb[0].mxu0
    %3265 = vmatprep.mubr.f32.mxu0 0.0
    %3266 = vmatmul.mubr.f32.gmra.mrb[0].mxu0 %v3191
    %v3267 = vpop.f32.mrb[0].mxu0
    %v3268 = vadd.f32 0.0, %v3267
    %v3269 = vpop.f32.mrb[0].mxu0
    %3270 = vmatprep.mubr.f32.mxu0 0.0
    %3271 = vmatmul.mubr.f32.gmra.mrb[0].mxu0 %v3194
    %v3272 = vpop.f32.mrb[0].mxu0
    %v3273 = vadd.f32 0.0, %v3272
    %v3274 = vpop.f32.mrb[0].mxu0
    %3275 = vdwg.mxu0
    %v3276 = vadd.f32 %v3176, %v3263
    %v3277 = vadd.f32 %v3177, %v3268
    %v3278 = vadd.f32 %v3178, %v3273
    %v3279 = vld [vmem:[#allocation4 + $0x8] sm:$0xff]
    %v3280 = vld [vmem:[#allocation4 + $0x10] sm:$0xff]
    %v3281 = vld [vmem:[#allocation4 + $0x18] sm:$0x3f]
    %s3282 = scalar_lea.vmem [#allocation12], 160
    %v3283 = vld [vmem:[%s3282] sm:$0xff]
    %v3284 = vld [vmem:[%s3282 + $0x8] sm:$0xff]
    %v3285 = vld [vmem:[%s3282 + $0x10] sm:$0xff]
    %v3286 = vld [vmem:[%s3282 + $0x18] sm:$0xff]
    %v3288 = vsel %vm130, %v3279, 0
    %v3291 = vsel %vm130, %v3280, 0
    %v3294 = vsel %vm130, %v3281, 0
    %3296 = vmatprep.subr.mxu0 0.0
    %3297 = vmatpush1.msra.mxu0 %v3283
    %3298 = vmatprep.subr.mxu0 0.0
    %3299 = vmatpush1.msra.mxu0 %v3284
    %3300 = vmatprep.subr.mxu0 0.0
    %3301 = vmatpush1.msra.mxu0 %v3285
    %3302 = vmatprep.subr.mxu0 0.0
    %3303 = vmatpush1.msra.mxu0 %v3286
    %3304 = vmatprep.subr.mxu0 0.0
    %3305 = vmatpush1.msra.mxu0 0.0
    %3306 = vmatprep.subr.mxu0 0.0
    %3307 = vmatpush1.msra.mxu0 0.0
    %3308 = vmatprep.subr.mxu0 0.0
    %3309 = vmatpush1.msra.mxu0 0.0
    %3310 = vmatprep.subr.mxu0 0.0
    %3311 = vmatpush1.msra.mxu0 0.0
    %3312 = vmatprep.subr.mxu0 0.0
    %3313 = vmatpush1.msra.mxu0 0.0
    %3314 = vmatprep.subr.mxu0 0.0
    %3315 = vmatpush1.msra.mxu0 0.0
    %3316 = vmatprep.subr.mxu0 0.0
    %3317 = vmatpush1.msra.mxu0 0.0
    %3318 = vmatprep.subr.mxu0 0.0
    %3319 = vmatpush1.msra.mxu0 0.0
    %3320 = vmatprep.subr.mxu0 0.0
    %3321 = vmatpush1.msra.mxu0 0.0
    %3322 = vmatprep.subr.mxu0 0.0
    %3323 = vmatpush1.msra.mxu0 0.0
    %3324 = vmatprep.subr.mxu0 0.0
    %3325 = vmatpush1.msra.mxu0 0.0
    %3326 = vmatprep.subr.mxu0 0.0
    %3327 = vmatpush1.msra.mxu0 0.0
    %3328 = vmatprep.subr.mxu0 0.0
    %3329 = vmatpush1.msra.mxu0 0.0
    %3330 = vmatprep.subr.mxu0 0.0
    %3331 = vmatpush1.msra.mxu0 0.0
    %3332 = vmatprep.subr.mxu0 0.0
    %3333 = vmatpush1.msra.mxu0 0.0
    %3334 = vmatprep.subr.mxu0 0.0
    %3335 = vmatpush1.msra.mxu0 0.0
    %3336 = vmatprep.subr.mxu0 0.0
    %3337 = vmatpush1.msra.mxu0 0.0
    %3338 = vmatprep.subr.mxu0 0.0
    %3339 = vmatpush1.msra.mxu0 0.0
    %3340 = vmatprep.subr.mxu0 0.0
    %3341 = vmatpush1.msra.mxu0 0.0
    %3342 = vmatprep.subr.mxu0 0.0
    %3343 = vmatpush1.msra.mxu0 0.0
    %3344 = vmatprep.subr.mxu0 0.0
    %3345 = vmatpush1.msra.mxu0 0.0
    %3346 = vmatprep.subr.mxu0 0.0
    %3347 = vmatpush1.msra.mxu0 0.0
    %3348 = vmatprep.subr.mxu0 0.0
    %3349 = vmatpush1.msra.mxu0 0.0
    %3350 = vmatprep.subr.mxu0 0.0
    %3351 = vmatpush1.msra.mxu0 0.0
    %3352 = vmatprep.subr.mxu0 0.0
    %3353 = vmatpush1.msra.mxu0 0.0
    %3354 = vmatprep.subr.mxu0 0.0
    %3355 = vmatpush1.msra.mxu0 0.0
    %3356 = vmatprep.subr.mxu0 0.0
    %3357 = vmatpush1.msra.mxu0 0.0
    %3358 = vmatprep.subr.mxu0 0.0
    %3359 = vmatpush1.msra.mxu0 0.0
    %3360 = vmatprep.mubr.f32.mxu0 0.0
    %3361 = vmatmul.mubr.f32.gmra.mrb[0].mxu0 %v3288
    %v3362 = vpop.f32.mrb[0].mxu0
    %v3363 = vadd.f32 0.0, %v3362
    %v3364 = vpop.f32.mrb[0].mxu0
    %3365 = vmatprep.mubr.f32.mxu0 0.0
    %3366 = vmatmul.mubr.f32.gmra.mrb[0].mxu0 %v3291
    %v3367 = vpop.f32.mrb[0].mxu0
    %v3368 = vadd.f32 0.0, %v3367
    %v3369 = vpop.f32.mrb[0].mxu0
    %3370 = vmatprep.mubr.f32.mxu0 0.0
    %3371 = vmatmul.mubr.f32.gmra.mrb[0].mxu0 %v3294
    %v3372 = vpop.f32.mrb[0].mxu0
    %v3373 = vadd.f32 0.0, %v3372
    %v3374 = vpop.f32.mrb[0].mxu0
    %3375 = vdwg.mxu0
    %v3376 = vadd.f32 %v3276, %v3363
    %v3377 = vadd.f32 %v3277, %v3368
    %v3378 = vadd.f32 %v3278, %v3373
    %v3379 = vld [vmem:[#allocation4 + $0xc] sm:$0xff]
    %v3380 = vld [vmem:[#allocation4 + $0x14] sm:$0xff]
    %v3381 = vld [vmem:[#allocation4 + $0x1c] sm:$0x3f]
    %s3382 = scalar_lea.vmem [#allocation12], 192
    %v3383 = vld [vmem:[%s3382] sm:$0xff]
    %v3384 = vld [vmem:[%s3382 + $0x8] sm:$0xff]
    %v3385 = vld [vmem:[%s3382 + $0x10] sm:$0xff]
    %v3386 = vld [vmem:[%s3382 + $0x18] sm:$0xff]
    %v3388 = vsel %vm130, %v3379, 0
    %v3391 = vsel %vm130, %v3380, 0
    %v3394 = vsel %vm130, %v3381, 0
    %3396 = vmatprep.subr.mxu0 0.0
    %3397 = vmatpush1.msra.mxu0 %v3383
    %3398 = vmatprep.subr.mxu0 0.0
    %3399 = vmatpush1.msra.mxu0 %v3384
    %3400 = vmatprep.subr.mxu0 0.0
    %3401 = vmatpush1.msra.mxu0 %v3385
    %3402 = vmatprep.subr.mxu0 0.0
    %3403 = vmatpush1.msra.mxu0 %v3386
    %3404 = vmatprep.subr.mxu0 0.0
    %3405 = vmatpush1.msra.mxu0 0.0
    %3406 = vmatprep.subr.mxu0 0.0
    %3407 = vmatpush1.msra.mxu0 0.0
    %3408 = vmatprep.subr.mxu0 0.0
    %3409 = vmatpush1.msra.mxu0 0.0
    %3410 = vmatprep.subr.mxu0 0.0
    %3411 = vmatpush1.msra.mxu0 0.0
    %3412 = vmatprep.subr.mxu0 0.0
    %3413 = vmatpush1.msra.mxu0 0.0
    %3414 = vmatprep.subr.mxu0 0.0
    %3415 = vmatpush1.msra.mxu0 0.0
    %3416 = vmatprep.subr.mxu0 0.0
    %3417 = vmatpush1.msra.mxu0 0.0
    %3418 = vmatprep.subr.mxu0 0.0
    %3419 = vmatpush1.msra.mxu0 0.0
    %3420 = vmatprep.subr.mxu0 0.0
    %3421 = vmatpush1.msra.mxu0 0.0
    %3422 = vmatprep.subr.mxu0 0.0
    %3423 = vmatpush1.msra.mxu0 0.0
    %3424 = vmatprep.subr.mxu0 0.0
    %3425 = vmatpush1.msra.mxu0 0.0
    %3426 = vmatprep.subr.mxu0 0.0
    %3427 = vmatpush1.msra.mxu0 0.0
    %3428 = vmatprep.subr.mxu0 0.0
    %3429 = vmatpush1.msra.mxu0 0.0
    %3430 = vmatprep.subr.mxu0 0.0
    %3431 = vmatpush1.msra.mxu0 0.0
    %3432 = vmatprep.subr.mxu0 0.0
    %3433 = vmatpush1.msra.mxu0 0.0
    %3434 = vmatprep.subr.mxu0 0.0
    %3435 = vmatpush1.msra.mxu0 0.0
    %3436 = vmatprep.subr.mxu0 0.0
    %3437 = vmatpush1.msra.mxu0 0.0
    %3438 = vmatprep.subr.mxu0 0.0
    %3439 = vmatpush1.msra.mxu0 0.0
    %3440 = vmatprep.subr.mxu0 0.0
    %3441 = vmatpush1.msra.mxu0 0.0
    %3442 = vmatprep.subr.mxu0 0.0
    %3443 = vmatpush1.msra.mxu0 0.0
    %3444 = vmatprep.subr.mxu0 0.0
    %3445 = vmatpush1.msra.mxu0 0.0
    %3446 = vmatprep.subr.mxu0 0.0
    %3447 = vmatpush1.msra.mxu0 0.0
    %3448 = vmatprep.subr.mxu0 0.0
    %3449 = vmatpush1.msra.mxu0 0.0
    %3450 = vmatprep.subr.mxu0 0.0
    %3451 = vmatpush1.msra.mxu0 0.0
    %3452 = vmatprep.subr.mxu0 0.0
    %3453 = vmatpush1.msra.mxu0 0.0
    %3454 = vmatprep.subr.mxu0 0.0
    %3455 = vmatpush1.msra.mxu0 0.0
    %3456 = vmatprep.subr.mxu0 0.0
    %3457 = vmatpush1.msra.mxu0 0.0
    %3458 = vmatprep.subr.mxu0 0.0
    %3459 = vmatpush1.msra.mxu0 0.0
    %3460 = vmatprep.mubr.f32.mxu0 0.0
    %3461 = vmatmul.mubr.f32.gmra.mrb[0].mxu0 %v3388
    %v3462 = vpop.f32.mrb[0].mxu0
    %v3463 = vadd.f32 0.0, %v3462
    %v3464 = vpop.f32.mrb[0].mxu0
    %3465 = vmatprep.mubr.f32.mxu0 0.0
    %3466 = vmatmul.mubr.f32.gmra.mrb[0].mxu0 %v3391
    %v3467 = vpop.f32.mrb[0].mxu0
    %v3468 = vadd.f32 0.0, %v3467
    %v3469 = vpop.f32.mrb[0].mxu0
    %3470 = vmatprep.mubr.f32.mxu0 0.0
    %3471 = vmatmul.mubr.f32.gmra.mrb[0].mxu0 %v3394
    %v3472 = vpop.f32.mrb[0].mxu0
    %v3473 = vadd.f32 0.0, %v3472
    %v3474 = vpop.f32.mrb[0].mxu0
    %3475 = vdwg.mxu0
    %v3476 = vadd.f32 %v3376, %v3463
    %v3477 = vadd.f32 %v3377, %v3468
    %v3478 = vadd.f32 %v3378, %v3473
    %v3479 = vld [vmem:[#allocation4 + $0xd] sm:$0xff]
    %v3480 = vld [vmem:[#allocation4 + $0x15] sm:$0xff]
    %v3481 = vld [vmem:[#allocation4 + $0x1d] sm:$0x3f]
    %s3482 = scalar_lea.vmem [#allocation12], 224
    %v3483 = vld [vmem:[%s3482] sm:$0xff]
    %v3484 = vld [vmem:[%s3482 + $0x8] sm:$0xff]
    %v3485 = vld [vmem:[%s3482 + $0x10] sm:$0xff]
    %v3486 = vld [vmem:[%s3482 + $0x18] sm:$0xff]
    %v3488 = vsel %vm130, %v3479, 0
    %v3491 = vsel %vm130, %v3480, 0
    %v3494 = vsel %vm130, %v3481, 0
    %3496 = vmatprep.subr.mxu0 0.0
    %3497 = vmatpush1.msra.mxu0 %v3483
    %3498 = vmatprep.subr.mxu0 0.0
    %3499 = vmatpush1.msra.mxu0 %v3484
    %3500 = vmatprep.subr.mxu0 0.0
    %3501 = vmatpush1.msra.mxu0 %v3485
    %3502 = vmatprep.subr.mxu0 0.0
    %3503 = vmatpush1.msra.mxu0 %v3486
    %3504 = vmatprep.subr.mxu0 0.0
    %3505 = vmatpush1.msra.mxu0 0.0
    %3506 = vmatprep.subr.mxu0 0.0
    %3507 = vmatpush1.msra.mxu0 0.0
    %3508 = vmatprep.subr.mxu0 0.0
    %3509 = vmatpush1.msra.mxu0 0.0
    %3510 = vmatprep.subr.mxu0 0.0
    %3511 = vmatpush1.msra.mxu0 0.0
    %3512 = vmatprep.subr.mxu0 0.0
    %3513 = vmatpush1.msra.mxu0 0.0
    %3514 = vmatprep.subr.mxu0 0.0
    %3515 = vmatpush1.msra.mxu0 0.0
    %3516 = vmatprep.subr.mxu0 0.0
    %3517 = vmatpush1.msra.mxu0 0.0
    %3518 = vmatprep.subr.mxu0 0.0
    %3519 = vmatpush1.msra.mxu0 0.0
    %3520 = vmatprep.subr.mxu0 0.0
    %3521 = vmatpush1.msra.mxu0 0.0
    %3522 = vmatprep.subr.mxu0 0.0
    %3523 = vmatpush1.msra.mxu0 0.0
    %3524 = vmatprep.subr.mxu0 0.0
    %3525 = vmatpush1.msra.mxu0 0.0
    %3526 = vmatprep.subr.mxu0 0.0
    %3527 = vmatpush1.msra.mxu0 0.0
    %3528 = vmatprep.subr.mxu0 0.0
    %3529 = vmatpush1.msra.mxu0 0.0
    %3530 = vmatprep.subr.mxu0 0.0
    %3531 = vmatpush1.msra.mxu0 0.0
    %3532 = vmatprep.subr.mxu0 0.0
    %3533 = vmatpush1.msra.mxu0 0.0
    %3534 = vmatprep.subr.mxu0 0.0
    %3535 = vmatpush1.msra.mxu0 0.0
    %3536 = vmatprep.subr.mxu0 0.0
    %3537 = vmatpush1.msra.mxu0 0.0
    %3538 = vmatprep.subr.mxu0 0.0
    %3539 = vmatpush1.msra.mxu0 0.0
    %3540 = vmatprep.subr.mxu0 0.0
    %3541 = vmatpush1.msra.mxu0 0.0
    %3542 = vmatprep.subr.mxu0 0.0
    %3543 = vmatpush1.msra.mxu0 0.0
    %3544 = vmatprep.subr.mxu0 0.0
    %3545 = vmatpush1.msra.mxu0 0.0
    %3546 = vmatprep.subr.mxu0 0.0
    %3547 = vmatpush1.msra.mxu0 0.0
    %3548 = vmatprep.subr.mxu0 0.0
    %3549 = vmatpush1.msra.mxu0 0.0
    %3550 = vmatprep.subr.mxu0 0.0
    %3551 = vmatpush1.msra.mxu0 0.0
    %3552 = vmatprep.subr.mxu0 0.0
    %3553 = vmatpush1.msra.mxu0 0.0
    %3554 = vmatprep.subr.mxu0 0.0
    %3555 = vmatpush1.msra.mxu0 0.0
    %3556 = vmatprep.subr.mxu0 0.0
    %3557 = vmatpush1.msra.mxu0 0.0
    %3558 = vmatprep.subr.mxu0 0.0
    %3559 = vmatpush1.msra.mxu0 0.0
    %3560 = vmatprep.mubr.f32.mxu0 0.0
    %3561 = vmatmul.mubr.f32.gmra.mrb[0].mxu0 %v3488
    %v3562 = vpop.f32.mrb[0].mxu0
    %v3563 = vadd.f32 0.0, %v3562
    %v3564 = vpop.f32.mrb[0].mxu0
    %3565 = vmatprep.mubr.f32.mxu0 0.0
    %3566 = vmatmul.mubr.f32.gmra.mrb[0].mxu0 %v3491
    %v3567 = vpop.f32.mrb[0].mxu0
    %v3568 = vadd.f32 0.0, %v3567
    %v3569 = vpop.f32.mrb[0].mxu0
    %3570 = vmatprep.mubr.f32.mxu0 0.0
    %3571 = vmatmul.mubr.f32.gmra.mrb[0].mxu0 %v3494
    %v3572 = vpop.f32.mrb[0].mxu0
    %v3573 = vadd.f32 0.0, %v3572
    %v3574 = vpop.f32.mrb[0].mxu0
    %3575 = vdwg.mxu0
    %v3576 = vadd.f32 %v3476, %v3563
    %v3577 = vadd.f32 %v3477, %v3568
    %v3578 = vadd.f32 %v3478, %v3573
    %v3579 = vld [vmem:[#allocation4 + $0xe] sm:$0xff]
    %v3580 = vld [vmem:[#allocation4 + $0x16] sm:$0xff]
    %v3581 = vld [vmem:[#allocation4 + $0x1e] sm:$0x3f]
    %s3582 = scalar_lea.vmem [#allocation12], 256
    %v3583 = vld [vmem:[%s3582] sm:$0xff]
    %v3584 = vld [vmem:[%s3582 + $0x8] sm:$0xff]
    %v3585 = vld [vmem:[%s3582 + $0x10] sm:$0xff]
    %v3586 = vld [vmem:[%s3582 + $0x18] sm:$0xff]
    %v3588 = vsel %vm130, %v3579, 0
    %v3591 = vsel %vm130, %v3580, 0
    %v3594 = vsel %vm130, %v3581, 0
    %3596 = vmatprep.subr.mxu0 0.0
    %3597 = vmatpush1.msra.mxu0 %v3583
    %3598 = vmatprep.subr.mxu0 0.0
    %3599 = vmatpush1.msra.mxu0 %v3584
    %3600 = vmatprep.subr.mxu0 0.0
    %3601 = vmatpush1.msra.mxu0 %v3585
    %3602 = vmatprep.subr.mxu0 0.0
    %3603 = vmatpush1.msra.mxu0 %v3586
    %3604 = vmatprep.subr.mxu0 0.0
    %3605 = vmatpush1.msra.mxu0 0.0
    %3606 = vmatprep.subr.mxu0 0.0
    %3607 = vmatpush1.msra.mxu0 0.0
    %3608 = vmatprep.subr.mxu0 0.0
    %3609 = vmatpush1.msra.mxu0 0.0
    %3610 = vmatprep.subr.mxu0 0.0
    %3611 = vmatpush1.msra.mxu0 0.0
    %3612 = vmatprep.subr.mxu0 0.0
    %3613 = vmatpush1.msra.mxu0 0.0
    %3614 = vmatprep.subr.mxu0 0.0
    %3615 = vmatpush1.msra.mxu0 0.0
    %3616 = vmatprep.subr.mxu0 0.0
    %3617 = vmatpush1.msra.mxu0 0.0
    %3618 = vmatprep.subr.mxu0 0.0
    %3619 = vmatpush1.msra.mxu0 0.0
    %3620 = vmatprep.subr.mxu0 0.0
    %3621 = vmatpush1.msra.mxu0 0.0
    %3622 = vmatprep.subr.mxu0 0.0
    %3623 = vmatpush1.msra.mxu0 0.0
    %3624 = vmatprep.subr.mxu0 0.0
    %3625 = vmatpush1.msra.mxu0 0.0
    %3626 = vmatprep.subr.mxu0 0.0
    %3627 = vmatpush1.msra.mxu0 0.0
    %3628 = vmatprep.subr.mxu0 0.0
    %3629 = vmatpush1.msra.mxu0 0.0
    %3630 = vmatprep.subr.mxu0 0.0
    %3631 = vmatpush1.msra.mxu0 0.0
    %3632 = vmatprep.subr.mxu0 0.0
    %3633 = vmatpush1.msra.mxu0 0.0
    %3634 = vmatprep.subr.mxu0 0.0
    %3635 = vmatpush1.msra.mxu0 0.0
    %3636 = vmatprep.subr.mxu0 0.0
    %3637 = vmatpush1.msra.mxu0 0.0
    %3638 = vmatprep.subr.mxu0 0.0
    %3639 = vmatpush1.msra.mxu0 0.0
    %3640 = vmatprep.subr.mxu0 0.0
    %3641 = vmatpush1.msra.mxu0 0.0
    %3642 = vmatprep.subr.mxu0 0.0
    %3643 = vmatpush1.msra.mxu0 0.0
    %3644 = vmatprep.subr.mxu0 0.0
    %3645 = vmatpush1.msra.mxu0 0.0
    %3646 = vmatprep.subr.mxu0 0.0
    %3647 = vmatpush1.msra.mxu0 0.0
    %3648 = vmatprep.subr.mxu0 0.0
    %3649 = vmatpush1.msra.mxu0 0.0
    %3650 = vmatprep.subr.mxu0 0.0
    %3651 = vmatpush1.msra.mxu0 0.0
    %3652 = vmatprep.subr.mxu0 0.0
    %3653 = vmatpush1.msra.mxu0 0.0
    %3654 = vmatprep.subr.mxu0 0.0
    %3655 = vmatpush1.msra.mxu0 0.0
    %3656 = vmatprep.subr.mxu0 0.0
    %3657 = vmatpush1.msra.mxu0 0.0
    %3658 = vmatprep.subr.mxu0 0.0
    %3659 = vmatpush1.msra.mxu0 0.0
    %3660 = vmatprep.mubr.f32.mxu0 0.0
    %3661 = vmatmul.mubr.f32.gmra.mrb[0].mxu0 %v3588
    %v3662 = vpop.f32.mrb[0].mxu0
    %v3663 = vadd.f32 0.0, %v3662
    %v3664 = vpop.f32.mrb[0].mxu0
    %3665 = vmatprep.mubr.f32.mxu0 0.0
    %3666 = vmatmul.mubr.f32.gmra.mrb[0].mxu0 %v3591
    %v3667 = vpop.f32.mrb[0].mxu0
    %v3668 = vadd.f32 0.0, %v3667
    %v3669 = vpop.f32.mrb[0].mxu0
    %3670 = vmatprep.mubr.f32.mxu0 0.0
    %3671 = vmatmul.mubr.f32.gmra.mrb[0].mxu0 %v3594
    %v3672 = vpop.f32.mrb[0].mxu0
    %v3673 = vadd.f32 0.0, %v3672
    %v3674 = vpop.f32.mrb[0].mxu0
    %3675 = vdwg.mxu0
    %v3676 = vadd.f32 %v3576, %v3663
    %v3677 = vadd.f32 %v3577, %v3668
    %v3678 = vadd.f32 %v3578, %v3673
    %v3679 = vld [vmem:[%s10] sm:$0x1]
    %v3681 = vlaneseq
    %v3682 = vshrl.u32 %v3681, 7
    %v3683 = vsub.s32 0, %v3682
    %v3684 = vrot.slane %v3679, %v3683
    %v3686 = vadd.f32 %v3676, %v3684
    %v3687 = vadd.f32 %v3677, %v3684
    %v3688 = vadd.f32 %v3678, %v3684
    %v3689 = vtanh.pop %v3686
    %v3690 = vtanh.pop %v3687
    %v3691 = vtanh.pop %v3688
    %3693 = vset.pattern.permute.xlu0 0
    %3694 = vperm.xlu0 %3693, %v2783
    %v3695 = vpop.permute.xlu0 %3694
    %3698 = vset.pattern.permute.xlu0 0
    %3699 = vperm.xlu0 %3698, %v2784
    %v3700 = vpop.permute.xlu0 %3699
    %3703 = vset.pattern.permute.xlu0 0
    %3704 = vperm.xlu0 %3703, %v2785
    %v3705 = vpop.permute.xlu0 %3704
    %v3707 = vmul.f32 %v3689, %v3695
    %v3708 = vmul.f32 %v3690, %v3700
    %v3709 = vmul.f32 %v3691, %v3705
    %3710 = vst.msk [vmem:[#allocation5 + $0x7] sm:$0xff] %vm163, %v3707
    %3711 = vst.msk [vmem:[#allocation5 + $0xf] sm:$0xff] %vm163, %v3708
    %vm3712 = vcmask 521216
    %3713 = vst.msk [vmem:[#allocation5 + $0x17] sm:$0x3f] %vm3712, %v3709
    %v3714 = vld [vmem:[#allocation5] sm:$0xff]
    %v3715 = vld [vmem:[#allocation5 + $0x8] sm:$0xff]
    %v3716 = vld [vmem:[#allocation5 + $0x10] sm:$0x3f]
    %v3717 = vld [vmem:[#allocation14] sm:$0xff]
    %v3718 = vld [vmem:[#allocation14 + $0x8] sm:$0xff]
    %v3719 = vld [vmem:[#allocation14 + $0x10] sm:$0xff]
    %v3720 = vld [vmem:[#allocation14 + $0x18] sm:$0xff]
    %v3721 = vld [vmem:[#allocation14 + $0x20] sm:$0xff]
    %v3722 = vld [vmem:[#allocation14 + $0x28] sm:$0xff]
    %v3723 = vld [vmem:[#allocation14 + $0x30] sm:$0xff]
    %v3724 = vld [vmem:[#allocation14 + $0x38] sm:$0xff]
    %v3725 = vld [vmem:[#allocation5 + $0x1] sm:$0xff]
    %v3726 = vld [vmem:[#allocation5 + $0x9] sm:$0xff]
    %v3727 = vld [vmem:[#allocation5 + $0x11] sm:$0x3f]
    %s3728 = scalar_lea.vmem [#allocation14], 64
    %v3729 = vld [vmem:[%s3728] sm:$0xff]
    %v3730 = vld [vmem:[%s3728 + $0x8] sm:$0xff]
    %v3731 = vld [vmem:[%s3728 + $0x10] sm:$0xff]
    %v3732 = vld [vmem:[%s3728 + $0x18] sm:$0xff]
    %v3733 = vld [vmem:[%s3728 + $0x20] sm:$0xff]
    %v3734 = vld [vmem:[%s3728 + $0x28] sm:$0xff]
    %v3735 = vld [vmem:[%s3728 + $0x30] sm:$0xff]
    %v3736 = vld [vmem:[%s3728 + $0x38] sm:$0xff]
    %v3738 = vsel %vm163, %v3725, 0
    %v3741 = vsel %vm163, %v3726, 0
    %v3744 = vsel %vm163, %v3727, 0
    %3746 = vmatprep.subr.mxu0 0.0
    %3747 = vmatpush1.msra.mxu0 %v3729
    %3748 = vmatprep.subr.mxu0 0.0
    %3749 = vmatpush1.msra.mxu0 %v3730
    %3750 = vmatprep.subr.mxu0 0.0
    %3751 = vmatpush1.msra.mxu0 %v3731
    %3752 = vmatprep.subr.mxu0 0.0
    %3753 = vmatpush1.msra.mxu0 %v3732
    %3754 = vmatprep.subr.mxu0 0.0
    %3755 = vmatpush1.msra.mxu0 %v3733
    %3756 = vmatprep.subr.mxu0 0.0
    %3757 = vmatpush1.msra.mxu0 %v3734
    %3758 = vmatprep.subr.mxu0 0.0
    %3759 = vmatpush1.msra.mxu0 %v3735
    %3760 = vmatprep.subr.mxu0 0.0
    %3761 = vmatpush1.msra.mxu0 %v3736
    %3762 = vmatprep.subr.mxu0 0.0
    %3763 = vmatpush1.msra.mxu0 0.0
    %3764 = vmatprep.subr.mxu0 0.0
    %3765 = vmatpush1.msra.mxu0 0.0
    %3766 = vmatprep.subr.mxu0 0.0
    %3767 = vmatpush1.msra.mxu0 0.0
    %3768 = vmatprep.subr.mxu0 0.0
    %3769 = vmatpush1.msra.mxu0 0.0
    %3770 = vmatprep.subr.mxu0 0.0
    %3771 = vmatpush1.msra.mxu0 0.0
    %3772 = vmatprep.subr.mxu0 0.0
    %3773 = vmatpush1.msra.mxu0 0.0
    %3774 = vmatprep.subr.mxu0 0.0
    %3775 = vmatpush1.msra.mxu0 0.0
    %3776 = vmatprep.subr.mxu0 0.0
    %3777 = vmatpush1.msra.mxu0 0.0
    %3778 = vmatprep.subr.mxu0 0.0
    %3779 = vmatpush1.msra.mxu0 0.0
    %3780 = vmatprep.subr.mxu0 0.0
    %3781 = vmatpush1.msra.mxu0 0.0
    %3782 = vmatprep.subr.mxu0 0.0
    %3783 = vmatpush1.msra.mxu0 0.0
    %3784 = vmatprep.subr.mxu0 0.0
    %3785 = vmatpush1.msra.mxu0 0.0
    %3786 = vmatprep.subr.mxu0 0.0
    %3787 = vmatpush1.msra.mxu0 0.0
    %3788 = vmatprep.subr.mxu0 0.0
    %3789 = vmatpush1.msra.mxu0 0.0
    %3790 = vmatprep.subr.mxu0 0.0
    %3791 = vmatpush1.msra.mxu0 0.0
    %3792 = vmatprep.subr.mxu0 0.0
    %3793 = vmatpush1.msra.mxu0 0.0
    %3794 = vmatprep.subr.mxu0 0.0
    %3795 = vmatpush1.msra.mxu0 0.0
    %3796 = vmatprep.subr.mxu0 0.0
    %3797 = vmatpush1.msra.mxu0 0.0
    %3798 = vmatprep.subr.mxu0 0.0
    %3799 = vmatpush1.msra.mxu0 0.0
    %3800 = vmatprep.subr.mxu0 0.0
    %3801 = vmatpush1.msra.mxu0 0.0
    %3802 = vmatprep.subr.mxu0 0.0
    %3803 = vmatpush1.msra.mxu0 0.0
    %3804 = vmatprep.subr.mxu0 0.0
    %3805 = vmatpush1.msra.mxu0 0.0
    %3806 = vmatprep.subr.mxu0 0.0
    %3807 = vmatpush1.msra.mxu0 0.0
    %3808 = vmatprep.subr.mxu0 0.0
    %3809 = vmatpush1.msra.mxu0 0.0
    %3810 = vmatprep.mubr.f32.mxu0 0.0
    %3811 = vmatmul.mubr.f32.gmra.mrb[0].mxu0 %v3738
    %v3812 = vpop.f32.mrb[0].mxu0
    %v3813 = vadd.f32 0.0, %v3812
    %v3814 = vpop.f32.mrb[0].mxu0
    %3815 = vmatprep.mubr.f32.mxu0 0.0
    %3816 = vmatmul.mubr.f32.gmra.mrb[0].mxu0 %v3741
    %v3817 = vpop.f32.mrb[0].mxu0
    %v3818 = vadd.f32 0.0, %v3817
    %v3819 = vpop.f32.mrb[0].mxu0
    %3820 = vmatprep.mubr.f32.mxu0 0.0
    %3821 = vmatmul.mubr.f32.gmra.mrb[0].mxu0 %v3744
    %v3822 = vpop.f32.mrb[0].mxu0
    %v3823 = vadd.f32 0.0, %v3822
    %v3824 = vpop.f32.mrb[0].mxu0
    %3825 = vdwg.mxu0
    %v3827 = vsel %vm163, %v3714, 0
    %v3830 = vsel %vm163, %v3715, 0
    %v3833 = vsel %vm163, %v3716, 0
    %3835 = vmatprep.subr.mxu0 0.0
    %3836 = vmatpush1.msra.mxu0 %v3717
    %3837 = vmatprep.subr.mxu0 0.0
    %3838 = vmatpush1.msra.mxu0 %v3718
    %3839 = vmatprep.subr.mxu0 0.0
    %3840 = vmatpush1.msra.mxu0 %v3719
    %3841 = vmatprep.subr.mxu0 0.0
    %3842 = vmatpush1.msra.mxu0 %v3720
    %3843 = vmatprep.subr.mxu0 0.0
    %3844 = vmatpush1.msra.mxu0 %v3721
    %3845 = vmatprep.subr.mxu0 0.0
    %3846 = vmatpush1.msra.mxu0 %v3722
    %3847 = vmatprep.subr.mxu0 0.0
    %3848 = vmatpush1.msra.mxu0 %v3723
    %3849 = vmatprep.subr.mxu0 0.0
    %3850 = vmatpush1.msra.mxu0 %v3724
    %3851 = vmatprep.subr.mxu0 0.0
    %3852 = vmatpush1.msra.mxu0 0.0
    %3853 = vmatprep.subr.mxu0 0.0
    %3854 = vmatpush1.msra.mxu0 0.0
    %3855 = vmatprep.subr.mxu0 0.0
    %3856 = vmatpush1.msra.mxu0 0.0
    %3857 = vmatprep.subr.mxu0 0.0
    %3858 = vmatpush1.msra.mxu0 0.0
    %3859 = vmatprep.subr.mxu0 0.0
    %3860 = vmatpush1.msra.mxu0 0.0
    %3861 = vmatprep.subr.mxu0 0.0
    %3862 = vmatpush1.msra.mxu0 0.0
    %3863 = vmatprep.subr.mxu0 0.0
    %3864 = vmatpush1.msra.mxu0 0.0
    %3865 = vmatprep.subr.mxu0 0.0
    %3866 = vmatpush1.msra.mxu0 0.0
    %3867 = vmatprep.subr.mxu0 0.0
    %3868 = vmatpush1.msra.mxu0 0.0
    %3869 = vmatprep.subr.mxu0 0.0
    %3870 = vmatpush1.msra.mxu0 0.0
    %3871 = vmatprep.subr.mxu0 0.0
    %3872 = vmatpush1.msra.mxu0 0.0
    %3873 = vmatprep.subr.mxu0 0.0
    %3874 = vmatpush1.msra.mxu0 0.0
    %3875 = vmatprep.subr.mxu0 0.0
    %3876 = vmatpush1.msra.mxu0 0.0
    %3877 = vmatprep.subr.mxu0 0.0
    %3878 = vmatpush1.msra.mxu0 0.0
    %3879 = vmatprep.subr.mxu0 0.0
    %3880 = vmatpush1.msra.mxu0 0.0
    %3881 = vmatprep.subr.mxu0 0.0
    %3882 = vmatpush1.msra.mxu0 0.0
    %3883 = vmatprep.subr.mxu0 0.0
    %3884 = vmatpush1.msra.mxu0 0.0
    %3885 = vmatprep.subr.mxu0 0.0
    %3886 = vmatpush1.msra.mxu0 0.0
    %3887 = vmatprep.subr.mxu0 0.0
    %3888 = vmatpush1.msra.mxu0 0.0
    %3889 = vmatprep.subr.mxu0 0.0
    %3890 = vmatpush1.msra.mxu0 0.0
    %3891 = vmatprep.subr.mxu0 0.0
    %3892 = vmatpush1.msra.mxu0 0.0
    %3893 = vmatprep.subr.mxu0 0.0
    %3894 = vmatpush1.msra.mxu0 0.0
    %3895 = vmatprep.subr.mxu0 0.0
    %3896 = vmatpush1.msra.mxu0 0.0
    %3897 = vmatprep.subr.mxu0 0.0
    %3898 = vmatpush1.msra.mxu0 0.0
    %3899 = vmatprep.mubr.f32.mxu0 0.0
    %3900 = vmatmul.mubr.f32.gmra.mrb[0].mxu0 %v3827
    %v3901 = vpop.f32.mrb[0].mxu0
    %v3902 = vadd.f32 %v3813, %v3901
    %v3903 = vpop.f32.mrb[0].mxu0
    %3904 = vmatprep.mubr.f32.mxu0 0.0
    %3905 = vmatmul.mubr.f32.gmra.mrb[0].mxu0 %v3830
    %v3906 = vpop.f32.mrb[0].mxu0
    %v3907 = vadd.f32 %v3818, %v3906
    %v3908 = vpop.f32.mrb[0].mxu0
    %3909 = vmatprep.mubr.f32.mxu0 0.0
    %3910 = vmatmul.mubr.f32.gmra.mrb[0].mxu0 %v3833
    %v3911 = vpop.f32.mrb[0].mxu0
    %v3912 = vadd.f32 %v3823, %v3911
    %v3913 = vpop.f32.mrb[0].mxu0
    %3914 = vdwg.mxu0
    %v3915 = vld [vmem:[#allocation5 + $0x2] sm:$0xff]
    %v3916 = vld [vmem:[#allocation5 + $0xa] sm:$0xff]
    %v3917 = vld [vmem:[#allocation5 + $0x12] sm:$0x3f]
    %s3918 = scalar_lea.vmem [#allocation14], 128
    %v3919 = vld [vmem:[%s3918] sm:$0xff]
    %v3920 = vld [vmem:[%s3918 + $0x8] sm:$0xff]
    %v3921 = vld [vmem:[%s3918 + $0x10] sm:$0xff]
    %v3922 = vld [vmem:[%s3918 + $0x18] sm:$0xff]
    %v3923 = vld [vmem:[%s3918 + $0x20] sm:$0xff]
    %v3924 = vld [vmem:[%s3918 + $0x28] sm:$0xff]
    %v3925 = vld [vmem:[%s3918 + $0x30] sm:$0xff]
    %v3926 = vld [vmem:[%s3918 + $0x38] sm:$0xff]
    %v3928 = vsel %vm163, %v3915, 0
    %v3931 = vsel %vm163, %v3916, 0
    %v3934 = vsel %vm163, %v3917, 0
    %3936 = vmatprep.subr.mxu0 0.0
    %3937 = vmatpush1.msra.mxu0 %v3919
    %3938 = vmatprep.subr.mxu0 0.0
    %3939 = vmatpush1.msra.mxu0 %v3920
    %3940 = vmatprep.subr.mxu0 0.0
    %3941 = vmatpush1.msra.mxu0 %v3921
    %3942 = vmatprep.subr.mxu0 0.0
    %3943 = vmatpush1.msra.mxu0 %v3922
    %3944 = vmatprep.subr.mxu0 0.0
    %3945 = vmatpush1.msra.mxu0 %v3923
    %3946 = vmatprep.subr.mxu0 0.0
    %3947 = vmatpush1.msra.mxu0 %v3924
    %3948 = vmatprep.subr.mxu0 0.0
    %3949 = vmatpush1.msra.mxu0 %v3925
    %3950 = vmatprep.subr.mxu0 0.0
    %3951 = vmatpush1.msra.mxu0 %v3926
    %3952 = vmatprep.subr.mxu0 0.0
    %3953 = vmatpush1.msra.mxu0 0.0
    %3954 = vmatprep.subr.mxu0 0.0
    %3955 = vmatpush1.msra.mxu0 0.0
    %3956 = vmatprep.subr.mxu0 0.0
    %3957 = vmatpush1.msra.mxu0 0.0
    %3958 = vmatprep.subr.mxu0 0.0
    %3959 = vmatpush1.msra.mxu0 0.0
    %3960 = vmatprep.subr.mxu0 0.0
    %3961 = vmatpush1.msra.mxu0 0.0
    %3962 = vmatprep.subr.mxu0 0.0
    %3963 = vmatpush1.msra.mxu0 0.0
    %3964 = vmatprep.subr.mxu0 0.0
    %3965 = vmatpush1.msra.mxu0 0.0
    %3966 = vmatprep.subr.mxu0 0.0
    %3967 = vmatpush1.msra.mxu0 0.0
    %3968 = vmatprep.subr.mxu0 0.0
    %3969 = vmatpush1.msra.mxu0 0.0
    %3970 = vmatprep.subr.mxu0 0.0
    %3971 = vmatpush1.msra.mxu0 0.0
    %3972 = vmatprep.subr.mxu0 0.0
    %3973 = vmatpush1.msra.mxu0 0.0
    %3974 = vmatprep.subr.mxu0 0.0
    %3975 = vmatpush1.msra.mxu0 0.0
    %3976 = vmatprep.subr.mxu0 0.0
    %3977 = vmatpush1.msra.mxu0 0.0
    %3978 = vmatprep.subr.mxu0 0.0
    %3979 = vmatpush1.msra.mxu0 0.0
    %3980 = vmatprep.subr.mxu0 0.0
    %3981 = vmatpush1.msra.mxu0 0.0
    %3982 = vmatprep.subr.mxu0 0.0
    %3983 = vmatpush1.msra.mxu0 0.0
    %3984 = vmatprep.subr.mxu0 0.0
    %3985 = vmatpush1.msra.mxu0 0.0
    %3986 = vmatprep.subr.mxu0 0.0
    %3987 = vmatpush1.msra.mxu0 0.0
    %3988 = vmatprep.subr.mxu0 0.0
    %3989 = vmatpush1.msra.mxu0 0.0
    %3990 = vmatprep.subr.mxu0 0.0
    %3991 = vmatpush1.msra.mxu0 0.0
    %3992 = vmatprep.subr.mxu0 0.0
    %3993 = vmatpush1.msra.mxu0 0.0
    %3994 = vmatprep.subr.mxu0 0.0
    %3995 = vmatpush1.msra.mxu0 0.0
    %3996 = vmatprep.subr.mxu0 0.0
    %3997 = vmatpush1.msra.mxu0 0.0
    %3998 = vmatprep.subr.mxu0 0.0
    %3999 = vmatpush1.msra.mxu0 0.0
    %4000 = vmatprep.mubr.f32.mxu0 0.0
    %4001 = vmatmul.mubr.f32.gmra.mrb[0].mxu0 %v3928
    %v4002 = vpop.f32.mrb[0].mxu0
    %v4003 = vadd.f32 0.0, %v4002
    %v4004 = vpop.f32.mrb[0].mxu0
    %4005 = vmatprep.mubr.f32.mxu0 0.0
    %4006 = vmatmul.mubr.f32.gmra.mrb[0].mxu0 %v3931
    %v4007 = vpop.f32.mrb[0].mxu0
    %v4008 = vadd.f32 0.0, %v4007
    %v4009 = vpop.f32.mrb[0].mxu0
    %4010 = vmatprep.mubr.f32.mxu0 0.0
    %4011 = vmatmul.mubr.f32.gmra.mrb[0].mxu0 %v3934
    %v4012 = vpop.f32.mrb[0].mxu0
    %v4013 = vadd.f32 0.0, %v4012
    %v4014 = vpop.f32.mrb[0].mxu0
    %4015 = vdwg.mxu0
    %v4016 = vadd.f32 %v3902, %v4003
    %v4017 = vadd.f32 %v3907, %v4008
    %v4018 = vadd.f32 %v3912, %v4013
    %v4019 = vld [vmem:[#allocation5 + $0x6] sm:$0xff]
    %v4020 = vld [vmem:[#allocation5 + $0xe] sm:$0xff]
    %v4021 = vld [vmem:[#allocation5 + $0x16] sm:$0x3f]
    %s4022 = scalar_lea.vmem [#allocation14], 192
    %v4023 = vld [vmem:[%s4022] sm:$0xff]
    %v4024 = vld [vmem:[%s4022 + $0x8] sm:$0xff]
    %v4025 = vld [vmem:[%s4022 + $0x10] sm:$0xff]
    %v4026 = vld [vmem:[%s4022 + $0x18] sm:$0xff]
    %v4027 = vld [vmem:[%s4022 + $0x20] sm:$0xff]
    %v4028 = vld [vmem:[%s4022 + $0x28] sm:$0xff]
    %v4029 = vld [vmem:[%s4022 + $0x30] sm:$0xff]
    %v4030 = vld [vmem:[%s4022 + $0x38] sm:$0xff]
    %v4032 = vsel %vm163, %v4019, 0
    %v4035 = vsel %vm163, %v4020, 0
    %v4038 = vsel %vm163, %v4021, 0
    %4040 = vmatprep.subr.mxu0 0.0
    %4041 = vmatpush1.msra.mxu0 %v4023
    %4042 = vmatprep.subr.mxu0 0.0
    %4043 = vmatpush1.msra.mxu0 %v4024
    %4044 = vmatprep.subr.mxu0 0.0
    %4045 = vmatpush1.msra.mxu0 %v4025
    %4046 = vmatprep.subr.mxu0 0.0
    %4047 = vmatpush1.msra.mxu0 %v4026
    %4048 = vmatprep.subr.mxu0 0.0
    %4049 = vmatpush1.msra.mxu0 %v4027
    %4050 = vmatprep.subr.mxu0 0.0
    %4051 = vmatpush1.msra.mxu0 %v4028
    %4052 = vmatprep.subr.mxu0 0.0
    %4053 = vmatpush1.msra.mxu0 %v4029
    %4054 = vmatprep.subr.mxu0 0.0
    %4055 = vmatpush1.msra.mxu0 %v4030
    %4056 = vmatprep.subr.mxu0 0.0
    %4057 = vmatpush1.msra.mxu0 0.0
    %4058 = vmatprep.subr.mxu0 0.0
    %4059 = vmatpush1.msra.mxu0 0.0
    %4060 = vmatprep.subr.mxu0 0.0
    %4061 = vmatpush1.msra.mxu0 0.0
    %4062 = vmatprep.subr.mxu0 0.0
    %4063 = vmatpush1.msra.mxu0 0.0
    %4064 = vmatprep.subr.mxu0 0.0
    %4065 = vmatpush1.msra.mxu0 0.0
    %4066 = vmatprep.subr.mxu0 0.0
    %4067 = vmatpush1.msra.mxu0 0.0
    %4068 = vmatprep.subr.mxu0 0.0
    %4069 = vmatpush1.msra.mxu0 0.0
    %4070 = vmatprep.subr.mxu0 0.0
    %4071 = vmatpush1.msra.mxu0 0.0
    %4072 = vmatprep.subr.mxu0 0.0
    %4073 = vmatpush1.msra.mxu0 0.0
    %4074 = vmatprep.subr.mxu0 0.0
    %4075 = vmatpush1.msra.mxu0 0.0
    %4076 = vmatprep.subr.mxu0 0.0
    %4077 = vmatpush1.msra.mxu0 0.0
    %4078 = vmatprep.subr.mxu0 0.0
    %4079 = vmatpush1.msra.mxu0 0.0
    %4080 = vmatprep.subr.mxu0 0.0
    %4081 = vmatpush1.msra.mxu0 0.0
    %4082 = vmatprep.subr.mxu0 0.0
    %4083 = vmatpush1.msra.mxu0 0.0
    %4084 = vmatprep.subr.mxu0 0.0
    %4085 = vmatpush1.msra.mxu0 0.0
    %4086 = vmatprep.subr.mxu0 0.0
    %4087 = vmatpush1.msra.mxu0 0.0
    %4088 = vmatprep.subr.mxu0 0.0
    %4089 = vmatpush1.msra.mxu0 0.0
    %4090 = vmatprep.subr.mxu0 0.0
    %4091 = vmatpush1.msra.mxu0 0.0
    %4092 = vmatprep.subr.mxu0 0.0
    %4093 = vmatpush1.msra.mxu0 0.0
    %4094 = vmatprep.subr.mxu0 0.0
    %4095 = vmatpush1.msra.mxu0 0.0
    %4096 = vmatprep.subr.mxu0 0.0
    %4097 = vmatpush1.msra.mxu0 0.0
    %4098 = vmatprep.subr.mxu0 0.0
    %4099 = vmatpush1.msra.mxu0 0.0
    %4100 = vmatprep.subr.mxu0 0.0
    %4101 = vmatpush1.msra.mxu0 0.0
    %4102 = vmatprep.subr.mxu0 0.0
    %4103 = vmatpush1.msra.mxu0 0.0
    %4104 = vmatprep.mubr.f32.mxu0 0.0
    %4105 = vmatmul.mubr.f32.gmra.mrb[0].mxu0 %v4032
    %v4106 = vpop.f32.mrb[0].mxu0
    %v4107 = vadd.f32 0.0, %v4106
    %v4108 = vpop.f32.mrb[0].mxu0
    %4109 = vmatprep.mubr.f32.mxu0 0.0
    %4110 = vmatmul.mubr.f32.gmra.mrb[0].mxu0 %v4035
    %v4111 = vpop.f32.mrb[0].mxu0
    %v4112 = vadd.f32 0.0, %v4111
    %v4113 = vpop.f32.mrb[0].mxu0
    %4114 = vmatprep.mubr.f32.mxu0 0.0
    %4115 = vmatmul.mubr.f32.gmra.mrb[0].mxu0 %v4038
    %v4116 = vpop.f32.mrb[0].mxu0
    %v4117 = vadd.f32 0.0, %v4116
    %v4118 = vpop.f32.mrb[0].mxu0
    %4119 = vdwg.mxu0
    %v4120 = vadd.f32 %v4016, %v4107
    %v4121 = vadd.f32 %v4017, %v4112
    %v4122 = vadd.f32 %v4018, %v4117
    %v4123 = vld [vmem:[#allocation5 + $0x7] sm:$0xff]
    %v4124 = vld [vmem:[#allocation5 + $0xf] sm:$0xff]
    %v4125 = vld [vmem:[#allocation5 + $0x17] sm:$0x3f]
    %s4126 = scalar_lea.vmem [#allocation14], 256
    %v4127 = vld [vmem:[%s4126] sm:$0xff]
    %v4128 = vld [vmem:[%s4126 + $0x8] sm:$0xff]
    %v4129 = vld [vmem:[%s4126 + $0x10] sm:$0xff]
    %v4130 = vld [vmem:[%s4126 + $0x18] sm:$0xff]
    %v4131 = vld [vmem:[%s4126 + $0x20] sm:$0xff]
    %v4132 = vld [vmem:[%s4126 + $0x28] sm:$0xff]
    %v4133 = vld [vmem:[%s4126 + $0x30] sm:$0xff]
    %v4134 = vld [vmem:[%s4126 + $0x38] sm:$0xff]
    %v4136 = vsel %vm163, %v4123, 0
    %v4139 = vsel %vm163, %v4124, 0
    %v4142 = vsel %vm163, %v4125, 0
    %4144 = vmatprep.subr.mxu0 0.0
    %4145 = vmatpush1.msra.mxu0 %v4127
    %4146 = vmatprep.subr.mxu0 0.0
    %4147 = vmatpush1.msra.mxu0 %v4128
    %4148 = vmatprep.subr.mxu0 0.0
    %4149 = vmatpush1.msra.mxu0 %v4129
    %4150 = vmatprep.subr.mxu0 0.0
    %4151 = vmatpush1.msra.mxu0 %v4130
    %4152 = vmatprep.subr.mxu0 0.0
    %4153 = vmatpush1.msra.mxu0 %v4131
    %4154 = vmatprep.subr.mxu0 0.0
    %4155 = vmatpush1.msra.mxu0 %v4132
    %4156 = vmatprep.subr.mxu0 0.0
    %4157 = vmatpush1.msra.mxu0 %v4133
    %4158 = vmatprep.subr.mxu0 0.0
    %4159 = vmatpush1.msra.mxu0 %v4134
    %4160 = vmatprep.subr.mxu0 0.0
    %4161 = vmatpush1.msra.mxu0 0.0
    %4162 = vmatprep.subr.mxu0 0.0
    %4163 = vmatpush1.msra.mxu0 0.0
    %4164 = vmatprep.subr.mxu0 0.0
    %4165 = vmatpush1.msra.mxu0 0.0
    %4166 = vmatprep.subr.mxu0 0.0
    %4167 = vmatpush1.msra.mxu0 0.0
    %4168 = vmatprep.subr.mxu0 0.0
    %4169 = vmatpush1.msra.mxu0 0.0
    %4170 = vmatprep.subr.mxu0 0.0
    %4171 = vmatpush1.msra.mxu0 0.0
    %4172 = vmatprep.subr.mxu0 0.0
    %4173 = vmatpush1.msra.mxu0 0.0
    %4174 = vmatprep.subr.mxu0 0.0
    %4175 = vmatpush1.msra.mxu0 0.0
    %4176 = vmatprep.subr.mxu0 0.0
    %4177 = vmatpush1.msra.mxu0 0.0
    %4178 = vmatprep.subr.mxu0 0.0
    %4179 = vmatpush1.msra.mxu0 0.0
    %4180 = vmatprep.subr.mxu0 0.0
    %4181 = vmatpush1.msra.mxu0 0.0
    %4182 = vmatprep.subr.mxu0 0.0
    %4183 = vmatpush1.msra.mxu0 0.0
    %4184 = vmatprep.subr.mxu0 0.0
    %4185 = vmatpush1.msra.mxu0 0.0
    %4186 = vmatprep.subr.mxu0 0.0
    %4187 = vmatpush1.msra.mxu0 0.0
    %4188 = vmatprep.subr.mxu0 0.0
    %4189 = vmatpush1.msra.mxu0 0.0
    %4190 = vmatprep.subr.mxu0 0.0
    %4191 = vmatpush1.msra.mxu0 0.0
    %4192 = vmatprep.subr.mxu0 0.0
    %4193 = vmatpush1.msra.mxu0 0.0
    %4194 = vmatprep.subr.mxu0 0.0
    %4195 = vmatpush1.msra.mxu0 0.0
    %4196 = vmatprep.subr.mxu0 0.0
    %4197 = vmatpush1.msra.mxu0 0.0
    %4198 = vmatprep.subr.mxu0 0.0
    %4199 = vmatpush1.msra.mxu0 0.0
    %4200 = vmatprep.subr.mxu0 0.0
    %4201 = vmatpush1.msra.mxu0 0.0
    %4202 = vmatprep.subr.mxu0 0.0
    %4203 = vmatpush1.msra.mxu0 0.0
    %4204 = vmatprep.subr.mxu0 0.0
    %4205 = vmatpush1.msra.mxu0 0.0
    %4206 = vmatprep.subr.mxu0 0.0
    %4207 = vmatpush1.msra.mxu0 0.0
    %4208 = vmatprep.mubr.f32.mxu0 0.0
    %4209 = vmatmul.mubr.f32.gmra.mrb[0].mxu0 %v4136
    %v4210 = vpop.f32.mrb[0].mxu0
    %v4211 = vadd.f32 0.0, %v4210
    %v4212 = vpop.f32.mrb[0].mxu0
    %4213 = vmatprep.mubr.f32.mxu0 0.0
    %4214 = vmatmul.mubr.f32.gmra.mrb[0].mxu0 %v4139
    %v4215 = vpop.f32.mrb[0].mxu0
    %v4216 = vadd.f32 0.0, %v4215
    %v4217 = vpop.f32.mrb[0].mxu0
    %4218 = vmatprep.mubr.f32.mxu0 0.0
    %4219 = vmatmul.mubr.f32.gmra.mrb[0].mxu0 %v4142
    %v4220 = vpop.f32.mrb[0].mxu0
    %v4221 = vadd.f32 0.0, %v4220
    %v4222 = vpop.f32.mrb[0].mxu0
    %4223 = vdwg.mxu0
    %v4224 = vadd.f32 %v4120, %v4211
    %v4225 = vadd.f32 %v4121, %v4216
    %v4226 = vadd.f32 %v4122, %v4221
    %v4227 = vld [vmem:[#allocation5 + $0x8] sm:$0xff]
    %v4228 = vld [vmem:[#allocation5 + $0x10] sm:$0xff]
    %v4229 = vld [vmem:[#allocation5 + $0x18] sm:$0x3f]
    %s4230 = scalar_lea.vmem [#allocation14], 320
    %v4231 = vld [vmem:[%s4230] sm:$0xff]
    %v4232 = vld [vmem:[%s4230 + $0x8] sm:$0xff]
    %v4233 = vld [vmem:[%s4230 + $0x10] sm:$0xff]
    %v4234 = vld [vmem:[%s4230 + $0x18] sm:$0xff]
    %v4235 = vld [vmem:[%s4230 + $0x20] sm:$0xff]
    %v4236 = vld [vmem:[%s4230 + $0x28] sm:$0xff]
    %v4237 = vld [vmem:[%s4230 + $0x30] sm:$0xff]
    %v4238 = vld [vmem:[%s4230 + $0x38] sm:$0xff]
    %v4240 = vsel %vm163, %v4227, 0
    %v4243 = vsel %vm163, %v4228, 0
    %v4246 = vsel %vm163, %v4229, 0
    %4248 = vmatprep.subr.mxu0 0.0
    %4249 = vmatpush1.msra.mxu0 %v4231
    %4250 = vmatprep.subr.mxu0 0.0
    %4251 = vmatpush1.msra.mxu0 %v4232
    %4252 = vmatprep.subr.mxu0 0.0
    %4253 = vmatpush1.msra.mxu0 %v4233
    %4254 = vmatprep.subr.mxu0 0.0
    %4255 = vmatpush1.msra.mxu0 %v4234
    %4256 = vmatprep.subr.mxu0 0.0
    %4257 = vmatpush1.msra.mxu0 %v4235
    %4258 = vmatprep.subr.mxu0 0.0
    %4259 = vmatpush1.msra.mxu0 %v4236
    %4260 = vmatprep.subr.mxu0 0.0
    %4261 = vmatpush1.msra.mxu0 %v4237
    %4262 = vmatprep.subr.mxu0 0.0
    %4263 = vmatpush1.msra.mxu0 %v4238
    %4264 = vmatprep.subr.mxu0 0.0
    %4265 = vmatpush1.msra.mxu0 0.0
    %4266 = vmatprep.subr.mxu0 0.0
    %4267 = vmatpush1.msra.mxu0 0.0
    %4268 = vmatprep.subr.mxu0 0.0
    %4269 = vmatpush1.msra.mxu0 0.0
    %4270 = vmatprep.subr.mxu0 0.0
    %4271 = vmatpush1.msra.mxu0 0.0
    %4272 = vmatprep.subr.mxu0 0.0
    %4273 = vmatpush1.msra.mxu0 0.0
    %4274 = vmatprep.subr.mxu0 0.0
    %4275 = vmatpush1.msra.mxu0 0.0
    %4276 = vmatprep.subr.mxu0 0.0
    %4277 = vmatpush1.msra.mxu0 0.0
    %4278 = vmatprep.subr.mxu0 0.0
    %4279 = vmatpush1.msra.mxu0 0.0
    %4280 = vmatprep.subr.mxu0 0.0
    %4281 = vmatpush1.msra.mxu0 0.0
    %4282 = vmatprep.subr.mxu0 0.0
    %4283 = vmatpush1.msra.mxu0 0.0
    %4284 = vmatprep.subr.mxu0 0.0
    %4285 = vmatpush1.msra.mxu0 0.0
    %4286 = vmatprep.subr.mxu0 0.0
    %4287 = vmatpush1.msra.mxu0 0.0
    %4288 = vmatprep.subr.mxu0 0.0
    %4289 = vmatpush1.msra.mxu0 0.0
    %4290 = vmatprep.subr.mxu0 0.0
    %4291 = vmatpush1.msra.mxu0 0.0
    %4292 = vmatprep.subr.mxu0 0.0
    %4293 = vmatpush1.msra.mxu0 0.0
    %4294 = vmatprep.subr.mxu0 0.0
    %4295 = vmatpush1.msra.mxu0 0.0
    %4296 = vmatprep.subr.mxu0 0.0
    %4297 = vmatpush1.msra.mxu0 0.0
    %4298 = vmatprep.subr.mxu0 0.0
    %4299 = vmatpush1.msra.mxu0 0.0
    %4300 = vmatprep.subr.mxu0 0.0
    %4301 = vmatpush1.msra.mxu0 0.0
    %4302 = vmatprep.subr.mxu0 0.0
    %4303 = vmatpush1.msra.mxu0 0.0
    %4304 = vmatprep.subr.mxu0 0.0
    %4305 = vmatpush1.msra.mxu0 0.0
    %4306 = vmatprep.subr.mxu0 0.0
    %4307 = vmatpush1.msra.mxu0 0.0
    %4308 = vmatprep.subr.mxu0 0.0
    %4309 = vmatpush1.msra.mxu0 0.0
    %4310 = vmatprep.subr.mxu0 0.0
    %4311 = vmatpush1.msra.mxu0 0.0
    %4312 = vmatprep.mubr.f32.mxu0 0.0
    %4313 = vmatmul.mubr.f32.gmra.mrb[0].mxu0 %v4240
    %v4314 = vpop.f32.mrb[0].mxu0
    %v4315 = vadd.f32 0.0, %v4314
    %v4316 = vpop.f32.mrb[0].mxu0
    %4317 = vmatprep.mubr.f32.mxu0 0.0
    %4318 = vmatmul.mubr.f32.gmra.mrb[0].mxu0 %v4243
    %v4319 = vpop.f32.mrb[0].mxu0
    %v4320 = vadd.f32 0.0, %v4319
    %v4321 = vpop.f32.mrb[0].mxu0
    %4322 = vmatprep.mubr.f32.mxu0 0.0
    %4323 = vmatmul.mubr.f32.gmra.mrb[0].mxu0 %v4246
    %v4324 = vpop.f32.mrb[0].mxu0
    %v4325 = vadd.f32 0.0, %v4324
    %v4326 = vpop.f32.mrb[0].mxu0
    %4327 = vdwg.mxu0
    %v4328 = vadd.f32 %v4224, %v4315
    %v4329 = vadd.f32 %v4225, %v4320
    %v4330 = vadd.f32 %v4226, %v4325
    %v4331 = vld [vmem:[#allocation5 + $0xc] sm:$0xff]
    %v4332 = vld [vmem:[#allocation5 + $0x14] sm:$0xff]
    %v4333 = vld [vmem:[#allocation5 + $0x1c] sm:$0x3f]
    %s4334 = scalar_lea.vmem [#allocation14], 384
    %v4335 = vld [vmem:[%s4334] sm:$0xff]
    %v4336 = vld [vmem:[%s4334 + $0x8] sm:$0xff]
    %v4337 = vld [vmem:[%s4334 + $0x10] sm:$0xff]
    %v4338 = vld [vmem:[%s4334 + $0x18] sm:$0xff]
    %v4339 = vld [vmem:[%s4334 + $0x20] sm:$0xff]
    %v4340 = vld [vmem:[%s4334 + $0x28] sm:$0xff]
    %v4341 = vld [vmem:[%s4334 + $0x30] sm:$0xff]
    %v4342 = vld [vmem:[%s4334 + $0x38] sm:$0xff]
    %v4344 = vsel %vm163, %v4331, 0
    %v4347 = vsel %vm163, %v4332, 0
    %v4350 = vsel %vm163, %v4333, 0
    %4352 = vmatprep.subr.mxu0 0.0
    %4353 = vmatpush1.msra.mxu0 %v4335
    %4354 = vmatprep.subr.mxu0 0.0
    %4355 = vmatpush1.msra.mxu0 %v4336
    %4356 = vmatprep.subr.mxu0 0.0
    %4357 = vmatpush1.msra.mxu0 %v4337
    %4358 = vmatprep.subr.mxu0 0.0
    %4359 = vmatpush1.msra.mxu0 %v4338
    %4360 = vmatprep.subr.mxu0 0.0
    %4361 = vmatpush1.msra.mxu0 %v4339
    %4362 = vmatprep.subr.mxu0 0.0
    %4363 = vmatpush1.msra.mxu0 %v4340
    %4364 = vmatprep.subr.mxu0 0.0
    %4365 = vmatpush1.msra.mxu0 %v4341
    %4366 = vmatprep.subr.mxu0 0.0
    %4367 = vmatpush1.msra.mxu0 %v4342
    %4368 = vmatprep.subr.mxu0 0.0
    %4369 = vmatpush1.msra.mxu0 0.0
    %4370 = vmatprep.subr.mxu0 0.0
    %4371 = vmatpush1.msra.mxu0 0.0
    %4372 = vmatprep.subr.mxu0 0.0
    %4373 = vmatpush1.msra.mxu0 0.0
    %4374 = vmatprep.subr.mxu0 0.0
    %4375 = vmatpush1.msra.mxu0 0.0
    %4376 = vmatprep.subr.mxu0 0.0
    %4377 = vmatpush1.msra.mxu0 0.0
    %4378 = vmatprep.subr.mxu0 0.0
    %4379 = vmatpush1.msra.mxu0 0.0
    %4380 = vmatprep.subr.mxu0 0.0
    %4381 = vmatpush1.msra.mxu0 0.0
    %4382 = vmatprep.subr.mxu0 0.0
    %4383 = vmatpush1.msra.mxu0 0.0
    %4384 = vmatprep.subr.mxu0 0.0
    %4385 = vmatpush1.msra.mxu0 0.0
    %4386 = vmatprep.subr.mxu0 0.0
    %4387 = vmatpush1.msra.mxu0 0.0
    %4388 = vmatprep.subr.mxu0 0.0
    %4389 = vmatpush1.msra.mxu0 0.0
    %4390 = vmatprep.subr.mxu0 0.0
    %4391 = vmatpush1.msra.mxu0 0.0
    %4392 = vmatprep.subr.mxu0 0.0
    %4393 = vmatpush1.msra.mxu0 0.0
    %4394 = vmatprep.subr.mxu0 0.0
    %4395 = vmatpush1.msra.mxu0 0.0
    %4396 = vmatprep.subr.mxu0 0.0
    %4397 = vmatpush1.msra.mxu0 0.0
    %4398 = vmatprep.subr.mxu0 0.0
    %4399 = vmatpush1.msra.mxu0 0.0
    %4400 = vmatprep.subr.mxu0 0.0
    %4401 = vmatpush1.msra.mxu0 0.0
    %4402 = vmatprep.subr.mxu0 0.0
    %4403 = vmatpush1.msra.mxu0 0.0
    %4404 = vmatprep.subr.mxu0 0.0
    %4405 = vmatpush1.msra.mxu0 0.0
    %4406 = vmatprep.subr.mxu0 0.0
    %4407 = vmatpush1.msra.mxu0 0.0
    %4408 = vmatprep.subr.mxu0 0.0
    %4409 = vmatpush1.msra.mxu0 0.0
    %4410 = vmatprep.subr.mxu0 0.0
    %4411 = vmatpush1.msra.mxu0 0.0
    %4412 = vmatprep.subr.mxu0 0.0
    %4413 = vmatpush1.msra.mxu0 0.0
    %4414 = vmatprep.subr.mxu0 0.0
    %4415 = vmatpush1.msra.mxu0 0.0
    %4416 = vmatprep.mubr.f32.mxu0 0.0
    %4417 = vmatmul.mubr.f32.gmra.mrb[0].mxu0 %v4344
    %v4418 = vpop.f32.mrb[0].mxu0
    %v4419 = vadd.f32 0.0, %v4418
    %v4420 = vpop.f32.mrb[0].mxu0
    %4421 = vmatprep.mubr.f32.mxu0 0.0
    %4422 = vmatmul.mubr.f32.gmra.mrb[0].mxu0 %v4347
    %v4423 = vpop.f32.mrb[0].mxu0
    %v4424 = vadd.f32 0.0, %v4423
    %v4425 = vpop.f32.mrb[0].mxu0
    %4426 = vmatprep.mubr.f32.mxu0 0.0
    %4427 = vmatmul.mubr.f32.gmra.mrb[0].mxu0 %v4350
    %v4428 = vpop.f32.mrb[0].mxu0
    %v4429 = vadd.f32 0.0, %v4428
    %v4430 = vpop.f32.mrb[0].mxu0
    %4431 = vdwg.mxu0
    %v4432 = vadd.f32 %v4328, %v4419
    %v4433 = vadd.f32 %v4329, %v4424
    %v4434 = vadd.f32 %v4330, %v4429
    %v4435 = vld [vmem:[#allocation5 + $0xd] sm:$0xff]
    %v4436 = vld [vmem:[#allocation5 + $0x15] sm:$0xff]
    %v4437 = vld [vmem:[#allocation5 + $0x1d] sm:$0x3f]
    %s4438 = scalar_lea.vmem [#allocation14], 448
    %v4439 = vld [vmem:[%s4438] sm:$0xff]
    %v4440 = vld [vmem:[%s4438 + $0x8] sm:$0xff]
    %v4441 = vld [vmem:[%s4438 + $0x10] sm:$0xff]
    %v4442 = vld [vmem:[%s4438 + $0x18] sm:$0xff]
    %v4443 = vld [vmem:[%s4438 + $0x20] sm:$0xff]
    %v4444 = vld [vmem:[%s4438 + $0x28] sm:$0xff]
    %v4445 = vld [vmem:[%s4438 + $0x30] sm:$0xff]
    %v4446 = vld [vmem:[%s4438 + $0x38] sm:$0xff]
    %v4448 = vsel %vm163, %v4435, 0
    %v4451 = vsel %vm163, %v4436, 0
    %v4454 = vsel %vm163, %v4437, 0
    %4456 = vmatprep.subr.mxu0 0.0
    %4457 = vmatpush1.msra.mxu0 %v4439
    %4458 = vmatprep.subr.mxu0 0.0
    %4459 = vmatpush1.msra.mxu0 %v4440
    %4460 = vmatprep.subr.mxu0 0.0
    %4461 = vmatpush1.msra.mxu0 %v4441
    %4462 = vmatprep.subr.mxu0 0.0
    %4463 = vmatpush1.msra.mxu0 %v4442
    %4464 = vmatprep.subr.mxu0 0.0
    %4465 = vmatpush1.msra.mxu0 %v4443
    %4466 = vmatprep.subr.mxu0 0.0
    %4467 = vmatpush1.msra.mxu0 %v4444
    %4468 = vmatprep.subr.mxu0 0.0
    %4469 = vmatpush1.msra.mxu0 %v4445
    %4470 = vmatprep.subr.mxu0 0.0
    %4471 = vmatpush1.msra.mxu0 %v4446
    %4472 = vmatprep.subr.mxu0 0.0
    %4473 = vmatpush1.msra.mxu0 0.0
    %4474 = vmatprep.subr.mxu0 0.0
    %4475 = vmatpush1.msra.mxu0 0.0
    %4476 = vmatprep.subr.mxu0 0.0
    %4477 = vmatpush1.msra.mxu0 0.0
    %4478 = vmatprep.subr.mxu0 0.0
    %4479 = vmatpush1.msra.mxu0 0.0
    %4480 = vmatprep.subr.mxu0 0.0
    %4481 = vmatpush1.msra.mxu0 0.0
    %4482 = vmatprep.subr.mxu0 0.0
    %4483 = vmatpush1.msra.mxu0 0.0
    %4484 = vmatprep.subr.mxu0 0.0
    %4485 = vmatpush1.msra.mxu0 0.0
    %4486 = vmatprep.subr.mxu0 0.0
    %4487 = vmatpush1.msra.mxu0 0.0
    %4488 = vmatprep.subr.mxu0 0.0
    %4489 = vmatpush1.msra.mxu0 0.0
    %4490 = vmatprep.subr.mxu0 0.0
    %4491 = vmatpush1.msra.mxu0 0.0
    %4492 = vmatprep.subr.mxu0 0.0
    %4493 = vmatpush1.msra.mxu0 0.0
    %4494 = vmatprep.subr.mxu0 0.0
    %4495 = vmatpush1.msra.mxu0 0.0
    %4496 = vmatprep.subr.mxu0 0.0
    %4497 = vmatpush1.msra.mxu0 0.0
    %4498 = vmatprep.subr.mxu0 0.0
    %4499 = vmatpush1.msra.mxu0 0.0
    %4500 = vmatprep.subr.mxu0 0.0
    %4501 = vmatpush1.msra.mxu0 0.0
    %4502 = vmatprep.subr.mxu0 0.0
    %4503 = vmatpush1.msra.mxu0 0.0
    %4504 = vmatprep.subr.mxu0 0.0
    %4505 = vmatpush1.msra.mxu0 0.0
    %4506 = vmatprep.subr.mxu0 0.0
    %4507 = vmatpush1.msra.mxu0 0.0
    %4508 = vmatprep.subr.mxu0 0.0
    %4509 = vmatpush1.msra.mxu0 0.0
    %4510 = vmatprep.subr.mxu0 0.0
    %4511 = vmatpush1.msra.mxu0 0.0
    %4512 = vmatprep.subr.mxu0 0.0
    %4513 = vmatpush1.msra.mxu0 0.0
    %4514 = vmatprep.subr.mxu0 0.0
    %4515 = vmatpush1.msra.mxu0 0.0
    %4516 = vmatprep.subr.mxu0 0.0
    %4517 = vmatpush1.msra.mxu0 0.0
    %4518 = vmatprep.subr.mxu0 0.0
    %4519 = vmatpush1.msra.mxu0 0.0
    %4520 = vmatprep.mubr.f32.mxu0 0.0
    %4521 = vmatmul.mubr.f32.gmra.mrb[0].mxu0 %v4448
    %v4522 = vpop.f32.mrb[0].mxu0
    %v4523 = vadd.f32 0.0, %v4522
    %v4524 = vpop.f32.mrb[0].mxu0
    %4525 = vmatprep.mubr.f32.mxu0 0.0
    %4526 = vmatmul.mubr.f32.gmra.mrb[0].mxu0 %v4451
    %v4527 = vpop.f32.mrb[0].mxu0
    %v4528 = vadd.f32 0.0, %v4527
    %v4529 = vpop.f32.mrb[0].mxu0
    %4530 = vmatprep.mubr.f32.mxu0 0.0
    %4531 = vmatmul.mubr.f32.gmra.mrb[0].mxu0 %v4454
    %v4532 = vpop.f32.mrb[0].mxu0
    %v4533 = vadd.f32 0.0, %v4532
    %v4534 = vpop.f32.mrb[0].mxu0
    %4535 = vdwg.mxu0
    %v4536 = vadd.f32 %v4432, %v4523
    %v4537 = vadd.f32 %v4433, %v4528
    %v4538 = vadd.f32 %v4434, %v4533
    %v4539 = vld [vmem:[#allocation5 + $0xe] sm:$0xff]
    %v4540 = vld [vmem:[#allocation5 + $0x16] sm:$0xff]
    %v4541 = vld [vmem:[#allocation5 + $0x1e] sm:$0x3f]
    %s4542 = scalar_lea.vmem [#allocation14], 512
    %v4543 = vld [vmem:[%s4542] sm:$0xff]
    %v4544 = vld [vmem:[%s4542 + $0x8] sm:$0xff]
    %v4545 = vld [vmem:[%s4542 + $0x10] sm:$0xff]
    %v4546 = vld [vmem:[%s4542 + $0x18] sm:$0xff]
    %v4547 = vld [vmem:[%s4542 + $0x20] sm:$0xff]
    %v4548 = vld [vmem:[%s4542 + $0x28] sm:$0xff]
    %v4549 = vld [vmem:[%s4542 + $0x30] sm:$0xff]
    %v4550 = vld [vmem:[%s4542 + $0x38] sm:$0xff]
    %v4552 = vsel %vm163, %v4539, 0
    %v4555 = vsel %vm163, %v4540, 0
    %v4558 = vsel %vm163, %v4541, 0
    %4560 = vmatprep.subr.mxu0 0.0
    %4561 = vmatpush1.msra.mxu0 %v4543
    %4562 = vmatprep.subr.mxu0 0.0
    %4563 = vmatpush1.msra.mxu0 %v4544
    %4564 = vmatprep.subr.mxu0 0.0
    %4565 = vmatpush1.msra.mxu0 %v4545
    %4566 = vmatprep.subr.mxu0 0.0
    %4567 = vmatpush1.msra.mxu0 %v4546
    %4568 = vmatprep.subr.mxu0 0.0
    %4569 = vmatpush1.msra.mxu0 %v4547
    %4570 = vmatprep.subr.mxu0 0.0
    %4571 = vmatpush1.msra.mxu0 %v4548
    %4572 = vmatprep.subr.mxu0 0.0
    %4573 = vmatpush1.msra.mxu0 %v4549
    %4574 = vmatprep.subr.mxu0 0.0
    %4575 = vmatpush1.msra.mxu0 %v4550
    %4576 = vmatprep.subr.mxu0 0.0
    %4577 = vmatpush1.msra.mxu0 0.0
    %4578 = vmatprep.subr.mxu0 0.0
    %4579 = vmatpush1.msra.mxu0 0.0
    %4580 = vmatprep.subr.mxu0 0.0
    %4581 = vmatpush1.msra.mxu0 0.0
    %4582 = vmatprep.subr.mxu0 0.0
    %4583 = vmatpush1.msra.mxu0 0.0
    %4584 = vmatprep.subr.mxu0 0.0
    %4585 = vmatpush1.msra.mxu0 0.0
    %4586 = vmatprep.subr.mxu0 0.0
    %4587 = vmatpush1.msra.mxu0 0.0
    %4588 = vmatprep.subr.mxu0 0.0
    %4589 = vmatpush1.msra.mxu0 0.0
    %4590 = vmatprep.subr.mxu0 0.0
    %4591 = vmatpush1.msra.mxu0 0.0
    %4592 = vmatprep.subr.mxu0 0.0
    %4593 = vmatpush1.msra.mxu0 0.0
    %4594 = vmatprep.subr.mxu0 0.0
    %4595 = vmatpush1.msra.mxu0 0.0
    %4596 = vmatprep.subr.mxu0 0.0
    %4597 = vmatpush1.msra.mxu0 0.0
    %4598 = vmatprep.subr.mxu0 0.0
    %4599 = vmatpush1.msra.mxu0 0.0
    %4600 = vmatprep.subr.mxu0 0.0
    %4601 = vmatpush1.msra.mxu0 0.0
    %4602 = vmatprep.subr.mxu0 0.0
    %4603 = vmatpush1.msra.mxu0 0.0
    %4604 = vmatprep.subr.mxu0 0.0
    %4605 = vmatpush1.msra.mxu0 0.0
    %4606 = vmatprep.subr.mxu0 0.0
    %4607 = vmatpush1.msra.mxu0 0.0
    %4608 = vmatprep.subr.mxu0 0.0
    %4609 = vmatpush1.msra.mxu0 0.0
    %4610 = vmatprep.subr.mxu0 0.0
    %4611 = vmatpush1.msra.mxu0 0.0
    %4612 = vmatprep.subr.mxu0 0.0
    %4613 = vmatpush1.msra.mxu0 0.0
    %4614 = vmatprep.subr.mxu0 0.0
    %4615 = vmatpush1.msra.mxu0 0.0
    %4616 = vmatprep.subr.mxu0 0.0
    %4617 = vmatpush1.msra.mxu0 0.0
    %4618 = vmatprep.subr.mxu0 0.0
    %4619 = vmatpush1.msra.mxu0 0.0
    %4620 = vmatprep.subr.mxu0 0.0
    %4621 = vmatpush1.msra.mxu0 0.0
    %4622 = vmatprep.subr.mxu0 0.0
    %4623 = vmatpush1.msra.mxu0 0.0
    %4624 = vmatprep.mubr.f32.mxu0 0.0
    %4625 = vmatmul.mubr.f32.gmra.mrb[0].mxu0 %v4552
    %v4626 = vpop.f32.mrb[0].mxu0
    %v4627 = vadd.f32 0.0, %v4626
    %v4628 = vpop.f32.mrb[0].mxu0
    %4629 = vmatprep.mubr.f32.mxu0 0.0
    %4630 = vmatmul.mubr.f32.gmra.mrb[0].mxu0 %v4555
    %v4631 = vpop.f32.mrb[0].mxu0
    %v4632 = vadd.f32 0.0, %v4631
    %v4633 = vpop.f32.mrb[0].mxu0
    %4634 = vmatprep.mubr.f32.mxu0 0.0
    %4635 = vmatmul.mubr.f32.gmra.mrb[0].mxu0 %v4558
    %v4636 = vpop.f32.mrb[0].mxu0
    %v4637 = vadd.f32 0.0, %v4636
    %v4638 = vpop.f32.mrb[0].mxu0
    %4639 = vdwg.mxu0
    %v4640 = vadd.f32 %v4536, %v4627
    %v4641 = vadd.f32 %v4537, %v4632
    %v4642 = vadd.f32 %v4538, %v4637
    %v4643 = vld [vmem:[#allocation15] sm:$0x1]
    %v4645 = vlaneseq
    %v4646 = vshrl.u32 %v4645, 7
    %v4647 = vsub.s32 0, %v4646
    %v4648 = vrot.slane %v4643, %v4647
    %v4650 = vadd.f32 %v4640, %v4648
    %v4651 = vadd.f32 %v4641, %v4648
    %v4652 = vadd.f32 %v4642, %v4648
    %v4653 = vtanh.pop %v4650
    %v4654 = vtanh.pop %v4651
    %v4655 = vtanh.pop %v4652
    %4656 = vst.msk [vmem:[#allocation6 + $0x7] sm:$0xff] %vm163, %v4653
    %4657 = vst.msk [vmem:[#allocation6 + $0xf] sm:$0xff] %vm163, %v4654
    %4658 = vst.msk [vmem:[#allocation6 + $0x17] sm:$0x3f] %vm3712, %v4655
    %v4659 = vld [vmem:[#allocation6 + $0x7] sm:$0xff]
    %v4660 = vld [vmem:[#allocation6 + $0xf] sm:$0x7f]
    %v4661 = vld [vmem:[#allocation6 + $0x8] sm:$0xff]
    %v4662 = vld [vmem:[#allocation6 + $0x10] sm:$0x7f]
    %v4663 = vld [vmem:[#allocation6 + $0xd] sm:$0xff]
    %v4664 = vld [vmem:[#allocation6 + $0x15] sm:$0x7f]
    %v4665 = vld [vmem:[#allocation6 + $0xe] sm:$0xff]
    %v4666 = vld [vmem:[#allocation6 + $0x16] sm:$0x7f]
    %v4667 = vmax.f32 %v4659, %v4661
    %v4668 = vmax.f32 %v4660, %v4662
    %v4669 = vmax.f32 %v4663, %v4665
    %v4670 = vmax.f32 %v4664, %v4666
    %v4671 = vmax.f32 %v4667, %v4669
    %v4672 = vmax.f32 %v4668, %v4670
    %v4673 = vld [vmem:[%s4] sm:$0xff]
    %vm4674 = vcmask 121856
    %v4676 = vsel %vm4674, %v4673, 0
    %vm4678 = vcmask 1046528
    %v4680 = vsel %vm4678, %v4672, 0
    %4682 = vmatprep.subr.mxu0 0.0
    %4683 = vmatpush1.msra.mxu0 %v4671
    %4684 = vmatprep.subr.mxu0 0.0
    %4685 = vmatpush1.msra.mxu0 %v4680
    %4686 = vmatprep.subr.mxu0 0.0
    %4687 = vmatpush1.msra.mxu0 0.0
    %4688 = vmatprep.subr.mxu0 0.0
    %4689 = vmatpush1.msra.mxu0 0.0
    %4690 = vmatprep.subr.mxu0 0.0
    %4691 = vmatpush1.msra.mxu0 0.0
    %4692 = vmatprep.subr.mxu0 0.0
    %4693 = vmatpush1.msra.mxu0 0.0
    %4694 = vmatprep.subr.mxu0 0.0
    %4695 = vmatpush1.msra.mxu0 0.0
    %4696 = vmatprep.subr.mxu0 0.0
    %4697 = vmatpush1.msra.mxu0 0.0
    %4698 = vmatprep.subr.mxu0 0.0
    %4699 = vmatpush1.msra.mxu0 0.0
    %4700 = vmatprep.subr.mxu0 0.0
    %4701 = vmatpush1.msra.mxu0 0.0
    %4702 = vmatprep.subr.mxu0 0.0
    %4703 = vmatpush1.msra.mxu0 0.0
    %4704 = vmatprep.subr.mxu0 0.0
    %4705 = vmatpush1.msra.mxu0 0.0
    %4706 = vmatprep.subr.mxu0 0.0
    %4707 = vmatpush1.msra.mxu0 0.0
    %4708 = vmatprep.subr.mxu0 0.0
    %4709 = vmatpush1.msra.mxu0 0.0
    %4710 = vmatprep.subr.mxu0 0.0
    %4711 = vmatpush1.msra.mxu0 0.0
    %4712 = vmatprep.subr.mxu0 0.0
    %4713 = vmatpush1.msra.mxu0 0.0
    %4714 = vmatprep.subr.mxu0 0.0
    %4715 = vmatpush1.msra.mxu0 0.0
    %4716 = vmatprep.subr.mxu0 0.0
    %4717 = vmatpush1.msra.mxu0 0.0
    %4718 = vmatprep.subr.mxu0 0.0
    %4719 = vmatpush1.msra.mxu0 0.0
    %4720 = vmatprep.subr.mxu0 0.0
    %4721 = vmatpush1.msra.mxu0 0.0
    %4722 = vmatprep.subr.mxu0 0.0
    %4723 = vmatpush1.msra.mxu0 0.0
    %4724 = vmatprep.subr.mxu0 0.0
    %4725 = vmatpush1.msra.mxu0 0.0
    %4726 = vmatprep.subr.mxu0 0.0
    %4727 = vmatpush1.msra.mxu0 0.0
    %4728 = vmatprep.subr.mxu0 0.0
    %4729 = vmatpush1.msra.mxu0 0.0
    %4730 = vmatprep.subr.mxu0 0.0
    %4731 = vmatpush1.msra.mxu0 0.0
    %4732 = vmatprep.subr.mxu0 0.0
    %4733 = vmatpush1.msra.mxu0 0.0
    %4734 = vmatprep.subr.mxu0 0.0
    %4735 = vmatpush1.msra.mxu0 0.0
    %4736 = vmatprep.subr.mxu0 0.0
    %4737 = vmatpush1.msra.mxu0 0.0
    %4738 = vmatprep.subr.mxu0 0.0
    %4739 = vmatpush1.msra.mxu0 0.0
    %4740 = vmatprep.subr.mxu0 0.0
    %4741 = vmatpush1.msra.mxu0 0.0
    %4742 = vmatprep.subr.mxu0 0.0
    %4743 = vmatpush1.msra.mxu0 0.0
    %4744 = vmatprep.subr.mxu0 0.0
    %4745 = vmatpush1.msra.mxu0 0.0
    %4746 = vmatprep.mubr.f32.mxu0 0.0
    %4747 = vmatmul.mubr.f32.gmra.mrb[0].mxu0 %v4676
    %v4748 = vpop.f32.mrb[0].mxu0
    %v4749 = vadd.f32 0.0, %v4748
    %v4750 = vpop.f32.mrb[0].mxu0
    %4751 = vdwg.mxu0
    %v4752 = vld [vmem:[%s13] sm:$0xff]
    %v4753 = vld [vmem:[%s13 + $0x8] sm:$0xff]
    %v4754 = vld [vmem:[%s13 + $0x10] sm:$0xff]
    %v4755 = vld [vmem:[%s13 + $0x18] sm:$0xff]
    %v4756 = vld [vmem:[%s13 + $0x20] sm:$0xff]
    %v4757 = vld [vmem:[%s13 + $0x28] sm:$0xff]
    %v4758 = vld [vmem:[%s13 + $0x30] sm:$0xff]
    %v4759 = vld [vmem:[%s13 + $0x38] sm:$0xff]
    %v4760 = vld [vmem:[%s14] sm:$0x1]
    %v4762 = vlaneseq
    %v4763 = vshrl.u32 %v4762, 7
    %v4764 = vsub.s32 0, %v4763
    %v4765 = vrot.slane %v4760, %v4764
    %v4768 = vsel %vm163, %v4749, 0
    %4770 = vmatprep.subr.mxu0 0.0
    %4771 = vmatpush1.msra.mxu0 %v4752
    %4772 = vmatprep.subr.mxu0 0.0
    %4773 = vmatpush1.msra.mxu0 %v4753
    %4774 = vmatprep.subr.mxu0 0.0
    %4775 = vmatpush1.msra.mxu0 %v4754
    %4776 = vmatprep.subr.mxu0 0.0
    %4777 = vmatpush1.msra.mxu0 %v4755
    %4778 = vmatprep.subr.mxu0 0.0
    %4779 = vmatpush1.msra.mxu0 %v4756
    %4780 = vmatprep.subr.mxu0 0.0
    %4781 = vmatpush1.msra.mxu0 %v4757
    %4782 = vmatprep.subr.mxu0 0.0
    %4783 = vmatpush1.msra.mxu0 %v4758
    %4784 = vmatprep.subr.mxu0 0.0
    %4785 = vmatpush1.msra.mxu0 %v4759
    %4786 = vmatprep.subr.mxu0 0.0
    %4787 = vmatpush1.msra.mxu0 0.0
    %4788 = vmatprep.subr.mxu0 0.0
    %4789 = vmatpush1.msra.mxu0 0.0
    %4790 = vmatprep.subr.mxu0 0.0
    %4791 = vmatpush1.msra.mxu0 0.0
    %4792 = vmatprep.subr.mxu0 0.0
    %4793 = vmatpush1.msra.mxu0 0.0
    %4794 = vmatprep.subr.mxu0 0.0
    %4795 = vmatpush1.msra.mxu0 0.0
    %4796 = vmatprep.subr.mxu0 0.0
    %4797 = vmatpush1.msra.mxu0 0.0
    %4798 = vmatprep.subr.mxu0 0.0
    %4799 = vmatpush1.msra.mxu0 0.0
    %4800 = vmatprep.subr.mxu0 0.0
    %4801 = vmatpush1.msra.mxu0 0.0
    %4802 = vmatprep.subr.mxu0 0.0
    %4803 = vmatpush1.msra.mxu0 0.0
    %4804 = vmatprep.subr.mxu0 0.0
    %4805 = vmatpush1.msra.mxu0 0.0
    %4806 = vmatprep.subr.mxu0 0.0
    %4807 = vmatpush1.msra.mxu0 0.0
    %4808 = vmatprep.subr.mxu0 0.0
    %4809 = vmatpush1.msra.mxu0 0.0
    %4810 = vmatprep.subr.mxu0 0.0
    %4811 = vmatpush1.msra.mxu0 0.0
    %4812 = vmatprep.subr.mxu0 0.0
    %4813 = vmatpush1.msra.mxu0 0.0
    %4814 = vmatprep.subr.mxu0 0.0
    %4815 = vmatpush1.msra.mxu0 0.0
    %4816 = vmatprep.subr.mxu0 0.0
    %4817 = vmatpush1.msra.mxu0 0.0
    %4818 = vmatprep.subr.mxu0 0.0
    %4819 = vmatpush1.msra.mxu0 0.0
    %4820 = vmatprep.subr.mxu0 0.0
    %4821 = vmatpush1.msra.mxu0 0.0
    %4822 = vmatprep.subr.mxu0 0.0
    %4823 = vmatpush1.msra.mxu0 0.0
    %4824 = vmatprep.subr.mxu0 0.0
    %4825 = vmatpush1.msra.mxu0 0.0
    %4826 = vmatprep.subr.mxu0 0.0
    %4827 = vmatpush1.msra.mxu0 0.0
    %4828 = vmatprep.subr.mxu0 0.0
    %4829 = vmatpush1.msra.mxu0 0.0
    %4830 = vmatprep.subr.mxu0 0.0
    %4831 = vmatpush1.msra.mxu0 0.0
    %4832 = vmatprep.subr.mxu0 0.0
    %4833 = vmatpush1.msra.mxu0 0.0
    %4834 = vmatprep.mubr.f32.mxu0 0.0
    %4835 = vmatmul.mubr.f32.gmra.mrb[0].mxu0 %v4768
    %v4836 = vpop.f32.mrb[0].mxu0
    %v4837 = vadd.f32 %v4765, %v4836
    %v4838 = vpop.f32.mrb[0].mxu0
    %4839 = vdwg.mxu0
    %4840 = vmax.xlane.f32.xlu0 %v4837
    %v4841 = vpop.xlane.xlu0 %4840
    %v4842 = vsub.f32 %v4837, %v4841
    %v4843 = vmul.f32 %v4842, 1.442695
    %v4844 = vpow.pop %v4843
    %4845 = vadd.xlane.f32.xlu0 %v4844
    %v4846 = vpop.xlane.xlu0 %4845
    %v4847 = vrcp.pop %v4846
    %v4848 = vmul.f32 %v4844, %v4847
    %4849 = vst [vmem:[%s15] sm:$0xff] %v4848
    // Predicated region
    $region86: #{actor_forward.1} parent=1 // pred_check
      _
    $region87: #{actor_forward.1} parent=1 // pred_check_branch
      %4851 = sbr.rel (0) target = $region89
    $region88: #{actor_forward.1} parent=1 // pred_region
      _
    $region89: #{actor_forward.1} parent=1 // pred_fallthru
      _
    // Predicated region
    $region90: #{actor_forward.1} parent=1 // pred_check
      _
    $region91: #{actor_forward.1} parent=1 // pred_check_branch
      %4853 = sbr.rel (0) target = $region93
    $region92: #{actor_forward.1} parent=1 // pred_region
      _
    $region93: #{actor_forward.1} parent=1 // pred_fallthru
      _
    %4854 = vsyncpa [#allocation8], 1
    %4855 = vsyncpa [#allocation10], 1
    %4856 = vsyncpa [#allocation13], 1
    %4857 = vsyncpa [#allocation16], 1

</llo_original>
